<compile_context>
chip_gen: v7x
topology: tpu7x:2x2x1
jax: 0.10.0
libtpu: 0.0.40
codegen_flags: <defaults>
</compile_context>

<pallas_src>
import functools

import jax
import jax.numpy as jnp
from jax import lax
from jax.experimental import pallas as pl
from jax.experimental.pallas import tpu as pltpu


# ---------------------------------------------------------------------------
# Fused attention kernel: one grid step == (one batch element, one query tile).
# ---------------------------------------------------------------------------
def attention_kernel(x_ref, xq_ref, wqkv_ref, wout_ref, bout_ref, o_ref, *,
                     heads, dim_head):
    # x_ref:    (1, C, N)          full sequence (channels on sublanes)   f32
    # xq_ref:   (1, C, tq)         this step's query tile of the sequence f32
    # wqkv_ref: (3*hidden, C)      qkv 1x1-conv weight, q rows pre-scaled bf16
    # wout_ref: (hidden, dim_out)  out 1x1-conv weight (transposed)       bf16
    # bout_ref: (dim_out, 1)       out conv bias                          f32
    # o_ref:    (1, dim_out, tq)   lane-dense output tile                 f32
    hidden = heads * dim_head
    dim_out = o_ref.shape[1]
    tq = o_ref.shape[2]

    x_full = x_ref[0].astype(jnp.bfloat16)      # (C, N)
    x_tile = xq_ref[0].astype(jnp.bfloat16)     # (C, tq)

    w_q = wqkv_ref[:hidden, :]                  # (hidden, C)   bf16 (scale folded)
    w_kv = wqkv_ref[hidden:, :]                 # (2*hidden, C) bf16

    # 1x1-conv projections as MXU matmuls; sequence stays on lanes (lane-dense).
    q_all = jnp.dot(w_q, x_tile,
                    preferred_element_type=jnp.float32)          # (hidden, tq) f32
    kv_all = jnp.dot(w_kv, x_full,
                     preferred_element_type=jnp.float32
                     ).astype(jnp.bfloat16)                       # (2*hidden, N)

    acc = jnp.zeros((tq, dim_out), jnp.float32)
    for h in range(heads):                       # static unroll (heads is small)
        lo = h * dim_head
        # Sublane slices (free).  Scale already folded into w_q.
        q_rows = jnp.transpose(q_all[lo:lo + dim_head, :]
                               ).astype(jnp.bfloat16)             # (tq, dh)
        k_h = kv_all[lo:lo + dim_head, :]                         # (dh, N)
        v_h = kv_all[hidden + lo:hidden + lo + dim_head, :]       # (dh, N)

        # sim[i, j] = sum_d q[i, d] * k[d, j]   (natural NN matmul on the MXU)
        sim = jnp.dot(q_rows, k_h,
                      preferred_element_type=jnp.float32)         # (tq, N) f32

        # Numerically-stable softmax with DEFERRED normalization (stats in f32).
        m = jnp.max(sim, axis=-1, keepdims=True)                  # (tq, 1)
        p = jnp.exp(sim - m)                                      # (tq, N)
        s = jnp.sum(p, axis=-1, keepdims=True)                    # (tq, 1)

        # out_h[i, d] = sum_j p[i, j] * v[d, j]   (NT matmul, like flash q@k^T)
        out_h = lax.dot_general(p.astype(jnp.bfloat16), v_h,
                                (((1,), (1,)), ((), ())),
                                preferred_element_type=jnp.float32)  # (tq, dh)
        # Normalize the small (tq, dh) tensor instead of the (tq, N) probs.
        out_h = out_h * pl.reciprocal(s, approx=True)

        # Fused output projection: this head's slice of the 1x1 out-conv.
        acc = acc + jnp.dot(out_h.astype(jnp.bfloat16),
                            wout_ref[lo:lo + dim_head, :],
                            preferred_element_type=jnp.float32)      # (tq, dim_out)

    # Single small transpose -> lane-dense (dim_out, tq) store + bias.
    o_ref[0] = jnp.transpose(acc) + bout_ref[...]


# ---------------------------------------------------------------------------
# Wrapper: free NCHW <-> (B, C, N) reshapes + pallas_call.
# ---------------------------------------------------------------------------
def attention_forward(params, x_nchw, *, heads=4, dim_head=32, tq=128):
    B, C, H, W = x_nchw.shape
    N = H * W
    hidden = heads * dim_head
    dim_out = params["w_out"].shape[0]
    scale = float(dim_head) ** -0.5

    tq = min(tq, N)
    assert N % tq == 0, (N, tq)
    n_qt = N // tq

    # Fold the attention scale into the q rows of the qkv weight; bf16 MXU operands.
    w_qkv = params["w_qkv"].at[:hidden].multiply(scale).astype(jnp.bfloat16)   # (3*hidden, C)
    w_out_t = jnp.transpose(params["w_out"]).astype(jnp.bfloat16)              # (hidden, dim_out)
    b_out = params["b_out"].reshape(dim_out, 1).astype(jnp.float32)            # (dim_out, 1)

    # NCHW -> (B, C, N): free reshape, no transpose / extra HBM pass.
    x_seq = x_nchw.reshape(B, C, N)

    cost = pl.CostEstimate(
        flops=2 * B * (3 * hidden * C * N
                       + heads * 2 * N * N * dim_head
                       + N * hidden * dim_out),
        transcendentals=B * heads * N * N,
        bytes_accessed=(4 * x_seq.size + 4 * B * dim_out * N
                        + 2 * w_qkv.size + 2 * w_out_t.size + 4 * dim_out),
    )

    out_seq = pl.pallas_call(
        functools.partial(attention_kernel, heads=heads, dim_head=dim_head),
        out_shape=jax.ShapeDtypeStruct((B, dim_out, N), jnp.float32),
        grid=(B, n_qt),
        in_specs=[
            pl.BlockSpec((1, C, N), lambda b, qt: (b, 0, 0)),       # full seq (K/V)
            pl.BlockSpec((1, C, tq), lambda b, qt: (b, 0, qt)),     # query tile
            pl.BlockSpec((3 * hidden, C), lambda b, qt: (0, 0)),
            pl.BlockSpec((hidden, dim_out), lambda b, qt: (0, 0)),
            pl.BlockSpec((dim_out, 1), lambda b, qt: (0, 0)),
        ],
        out_specs=pl.BlockSpec((1, dim_out, tq), lambda b, qt: (b, 0, qt)),
        compiler_params=pltpu.CompilerParams(
            dimension_semantics=("parallel", "parallel")),
        cost_estimate=cost,
    )(x_seq, x_seq, w_qkv, w_out_t, b_out)

    # (B, dim, N) -> NCHW: free reshape.
    return out_seq.reshape(B, dim_out, H, W)


# ---------------------------------------------------------------------------
# Pure-JAX f32 reference (mirrors the PyTorch forward exactly).
# ---------------------------------------------------------------------------
def ref_forward(params, x_nchw, *, heads=4, dim_head=32):
    B, C, H, W = x_nchw.shape
    N = H * W
    hidden = heads * dim_head
    scale = float(dim_head) ** -0.5

    x = x_nchw.reshape(B, C, N)
    qkv = jnp.einsum("fc,bcn->bfn", params["w_qkv"], x)              # (B, 3*hidden, N)
    q, k, v = jnp.split(qkv, 3, axis=1)
    q = q.reshape(B, heads, dim_head, N) * scale
    k = k.reshape(B, heads, dim_head, N)
    v = v.reshape(B, heads, dim_head, N)

    sim = jnp.einsum("bhdi,bhdj->bhij", q, k)
    sim = sim - jnp.max(sim, axis=-1, keepdims=True)
    attn = jax.nn.softmax(sim, axis=-1)
    out = jnp.einsum("bhij,bhdj->bhid", attn, v)                     # (B, h, N, d)
    out = jnp.transpose(out, (0, 1, 3, 2)).reshape(B, hidden, H, W)  # b (h d) x y
    out = (jnp.einsum("of,bfxy->boxy", params["w_out"], out)
           + params["b_out"][None, :, None, None])
    return out


if __name__ == "__main__":
    # Small shapes consistent with the module defaults (heads=4, dim_head=32).
    B, dim, heads, dim_head, H, W = 2, 32, 4, 32, 16, 16
    hidden = heads * dim_head

    key = jax.random.PRNGKey(0)
    k0, k1, k2, k3 = jax.random.split(key, 4)
    rnd = lambda k, shape, s=0.1: jax.random.normal(k, shape, jnp.float32) * s

    params = {
        # Conv2d(dim, 3*hidden, 1, bias=False).weight squeezed -> (3*hidden, dim)
        "w_qkv": rnd(k0, (3 * hidden, dim)),
        # Conv2d(hidden, dim, 1).weight squeezed -> (dim, hidden), bias (dim,)
        "w_out": rnd(k1, (dim, hidden)),
        "b_out": rnd(k2, (dim,)),
    }
    x = jax.random.normal(k3, (B, dim, H, W), jnp.float32)   # NCHW, like PyTorch

    out = jax.block_until_ready(
        attention_forward(params, x, heads=heads, dim_head=dim_head))
    ref = jax.block_until_ready(
        ref_forward(params, x, heads=heads, dim_head=dim_head))

    assert out.shape == (B, dim, H, W), out.shape
    err = float(jnp.max(jnp.abs(out - ref)))
    # bf16 MXU operands + approx reciprocal -> loosened tolerance (stats are f32).
    assert bool(jnp.allclose(out, ref, atol=2e-2, rtol=2e-2)), err
    print("KERNEL_OK")
</pallas_src>

<mosaic_0001>
module attributes {stable_mosaic.version = 11 : i64} {
  func.func @attention_kernel(%arg0: i32, %arg1: i32, %arg2: memref<1x32x256xf32, #tpu.memory_space<vmem>>, %arg3: memref<1x32x128xf32, #tpu.memory_space<vmem>>, %arg4: memref<384x32xbf16, #tpu.memory_space<vmem>>, %arg5: memref<128x32xbf16, #tpu.memory_space<vmem>>, %arg6: memref<32x1xf32, #tpu.memory_space<vmem>>, %arg7: memref<1x32x128xf32, #tpu.memory_space<vmem>>) attributes {dimension_semantics = [#tpu.dimension_semantics<parallel>, #tpu.dimension_semantics<parallel>], iteration_bounds = array<i64: 2, 2>, scalar_prefetch = 0 : i64, scratch_operands = 0 : i64, tpu.core_type = #tpu.core_type<tc>, window_params = [{transform_indices = @transform_0, window_bounds = array<i64: 1, 32, 256>}, {transform_indices = @transform_1, window_bounds = array<i64: 1, 32, 128>}, {pipeline_mode = #tpu.pipeline_mode<synchronous>, transform_indices = @transform_2, window_bounds = array<i64: 384, 32>}, {pipeline_mode = #tpu.pipeline_mode<synchronous>, transform_indices = @transform_3, window_bounds = array<i64: 128, 32>}, {pipeline_mode = #tpu.pipeline_mode<synchronous>, transform_indices = @transform_4, window_bounds = array<i64: 32, 1>}, {transform_indices = @transform_5, window_bounds = array<i64: 1, 32, 128>}]} {
    %c0 = arith.constant 0 : index
    %c0_0 = arith.constant 0 : index
    %c0_1 = arith.constant 0 : index
    %0 = vector.load %arg2[%c0, %c0_0, %c0_1] : memref<1x32x256xf32, #tpu.memory_space<vmem>>, vector<1x32x256xf32>
    %1 = vector.shape_cast %0 : vector<1x32x256xf32> to vector<32x256xf32>
    %2 = arith.truncf %1 : vector<32x256xf32> to vector<32x256xbf16>
    %c0_2 = arith.constant 0 : index
    %c0_3 = arith.constant 0 : index
    %c0_4 = arith.constant 0 : index
    %3 = vector.load %arg3[%c0_2, %c0_3, %c0_4] : memref<1x32x128xf32, #tpu.memory_space<vmem>>, vector<1x32x128xf32>
    %4 = vector.shape_cast %3 : vector<1x32x128xf32> to vector<32x128xf32>
    %5 = arith.truncf %4 : vector<32x128xf32> to vector<32x128xbf16>
    %c0_5 = arith.constant 0 : index
    %c0_6 = arith.constant 0 : index
    %6 = vector.load %arg4[%c0_5, %c0_6] : memref<384x32xbf16, #tpu.memory_space<vmem>>, vector<128x32xbf16>
    %c128 = arith.constant 128 : index
    %c0_7 = arith.constant 0 : index
    %7 = vector.load %arg4[%c128, %c0_7] : memref<384x32xbf16, #tpu.memory_space<vmem>>, vector<256x32xbf16>
    %cst = arith.constant dense<0.000000e+00> : vector<128x128xf32>
    %8 = tpu.matmul %6, %5, %cst {dimension_numbers = #tpu.dot_dimension_numbers<[1], [0], [0], [1], [0, 0, 1, 1], [], []>} : vector<128x32xbf16>, vector<32x128xbf16>, vector<128x128xf32> -> vector<128x128xf32>
    %cst_8 = arith.constant dense<0.000000e+00> : vector<256x256xf32>
    %9 = tpu.matmul %7, %2, %cst_8 {dimension_numbers = #tpu.dot_dimension_numbers<[1], [0], [0], [1], [0, 0, 1, 1], [], []>} : vector<256x32xbf16>, vector<32x256xbf16>, vector<256x256xf32> -> vector<256x256xf32>
    %10 = arith.truncf %9 : vector<256x256xf32> to vector<256x256xbf16>
    %cst_9 = arith.constant 0.000000e+00 : f32
    %11 = vector.broadcast %cst_9 : f32 to vector<128x32xf32>
    %12 = vector.extract_strided_slice %8 {offsets = [0, 0], sizes = [32, 128], strides = [1, 1]} : vector<128x128xf32> to vector<32x128xf32>
    %13 = tpu.transpose %12, [1, 0] : vector<32x128xf32> -> vector<128x32xf32>
    %14 = arith.truncf %13 : vector<128x32xf32> to vector<128x32xbf16>
    %15 = vector.extract_strided_slice %10 {offsets = [0, 0], sizes = [32, 256], strides = [1, 1]} : vector<256x256xbf16> to vector<32x256xbf16>
    %16 = vector.extract_strided_slice %10 {offsets = [128, 0], sizes = [32, 256], strides = [1, 1]} : vector<256x256xbf16> to vector<32x256xbf16>
    %cst_10 = arith.constant dense<0.000000e+00> : vector<128x256xf32>
    %17 = tpu.matmul %14, %15, %cst_10 {dimension_numbers = #tpu.dot_dimension_numbers<[1], [0], [0], [1], [0, 0, 1, 1], [], []>} : vector<128x32xbf16>, vector<32x256xbf16>, vector<128x256xf32> -> vector<128x256xf32>
    %cst_11 = arith.constant dense<0xFF800000> : vector<128xf32>
    %18 = vector.multi_reduction <maximumf>, %17, %cst_11 [1] : vector<128x256xf32> to vector<128xf32>
    %19 = vector.shape_cast %18 : vector<128xf32> to vector<128x1xf32>
    %20 = vector.broadcast %19 : vector<128x1xf32> to vector<128x256xf32>
    %21 = arith.subf %17, %20 : vector<128x256xf32>
    %22 = math.exp %21 : vector<128x256xf32>
    %cst_12 = arith.constant dense<0.000000e+00> : vector<128xf32>
    %23 = vector.multi_reduction <add>, %22, %cst_12 [1] : vector<128x256xf32> to vector<128xf32>
    %24 = vector.shape_cast %23 : vector<128xf32> to vector<128x1xf32>
    %25 = arith.truncf %22 : vector<128x256xf32> to vector<128x256xbf16>
    %cst_13 = arith.constant dense<0.000000e+00> : vector<128x32xf32>
    %26 = tpu.matmul %25, %16, %cst_13 {dimension_numbers = #tpu.dot_dimension_numbers<[1], [1], [0], [0], [0, 0, 1, 0], [], []>} : vector<128x256xbf16>, vector<32x256xbf16>, vector<128x32xf32> -> vector<128x32xf32>
    %27 = tpu.reciprocal %24 {approx = true} : vector<128x1xf32> -> vector<128x1xf32>
    %28 = vector.broadcast %27 : vector<128x1xf32> to vector<128x32xf32>
    %29 = arith.mulf %26, %28 : vector<128x32xf32>
    %30 = arith.truncf %29 : vector<128x32xf32> to vector<128x32xbf16>
    %c0_14 = arith.constant 0 : index
    %c0_15 = arith.constant 0 : index
    %31 = vector.load %arg5[%c0_14, %c0_15] : memref<128x32xbf16, #tpu.memory_space<vmem>>, vector<32x32xbf16>
    %cst_16 = arith.constant dense<0.000000e+00> : vector<128x32xf32>
    %32 = tpu.matmul %30, %31, %cst_16 {dimension_numbers = #tpu.dot_dimension_numbers<[1], [0], [0], [1], [0, 0, 1, 1], [], []>} : vector<128x32xbf16>, vector<32x32xbf16>, vector<128x32xf32> -> vector<128x32xf32>
    %33 = arith.addf %11, %32 : vector<128x32xf32>
    %34 = vector.extract_strided_slice %8 {offsets = [32, 0], sizes = [32, 128], strides = [1, 1]} : vector<128x128xf32> to vector<32x128xf32>
    %35 = tpu.transpose %34, [1, 0] : vector<32x128xf32> -> vector<128x32xf32>
    %36 = arith.truncf %35 : vector<128x32xf32> to vector<128x32xbf16>
    %37 = vector.extract_strided_slice %10 {offsets = [32, 0], sizes = [32, 256], strides = [1, 1]} : vector<256x256xbf16> to vector<32x256xbf16>
    %38 = vector.extract_strided_slice %10 {offsets = [160, 0], sizes = [32, 256], strides = [1, 1]} : vector<256x256xbf16> to vector<32x256xbf16>
    %cst_17 = arith.constant dense<0.000000e+00> : vector<128x256xf32>
    %39 = tpu.matmul %36, %37, %cst_17 {dimension_numbers = #tpu.dot_dimension_numbers<[1], [0], [0], [1], [0, 0, 1, 1], [], []>} : vector<128x32xbf16>, vector<32x256xbf16>, vector<128x256xf32> -> vector<128x256xf32>
    %cst_18 = arith.constant dense<0xFF800000> : vector<128xf32>
    %40 = vector.multi_reduction <maximumf>, %39, %cst_18 [1] : vector<128x256xf32> to vector<128xf32>
    %41 = vector.shape_cast %40 : vector<128xf32> to vector<128x1xf32>
    %42 = vector.broadcast %41 : vector<128x1xf32> to vector<128x256xf32>
    %43 = arith.subf %39, %42 : vector<128x256xf32>
    %44 = math.exp %43 : vector<128x256xf32>
    %cst_19 = arith.constant dense<0.000000e+00> : vector<128xf32>
    %45 = vector.multi_reduction <add>, %44, %cst_19 [1] : vector<128x256xf32> to vector<128xf32>
    %46 = vector.shape_cast %45 : vector<128xf32> to vector<128x1xf32>
    %47 = arith.truncf %44 : vector<128x256xf32> to vector<128x256xbf16>
    %cst_20 = arith.constant dense<0.000000e+00> : vector<128x32xf32>
    %48 = tpu.matmul %47, %38, %cst_20 {dimension_numbers = #tpu.dot_dimension_numbers<[1], [1], [0], [0], [0, 0, 1, 0], [], []>} : vector<128x256xbf16>, vector<32x256xbf16>, vector<128x32xf32> -> vector<128x32xf32>
    %49 = tpu.reciprocal %46 {approx = true} : vector<128x1xf32> -> vector<128x1xf32>
    %50 = vector.broadcast %49 : vector<128x1xf32> to vector<128x32xf32>
    %51 = arith.mulf %48, %50 : vector<128x32xf32>
    %52 = arith.truncf %51 : vector<128x32xf32> to vector<128x32xbf16>
    %c32 = arith.constant 32 : index
    %c0_21 = arith.constant 0 : index
    %53 = vector.load %arg5[%c32, %c0_21] : memref<128x32xbf16, #tpu.memory_space<vmem>>, vector<32x32xbf16>
    %cst_22 = arith.constant dense<0.000000e+00> : vector<128x32xf32>
    %54 = tpu.matmul %52, %53, %cst_22 {dimension_numbers = #tpu.dot_dimension_numbers<[1], [0], [0], [1], [0, 0, 1, 1], [], []>} : vector<128x32xbf16>, vector<32x32xbf16>, vector<128x32xf32> -> vector<128x32xf32>
    %55 = arith.addf %33, %54 : vector<128x32xf32>
    %56 = vector.extract_strided_slice %8 {offsets = [64, 0], sizes = [32, 128], strides = [1, 1]} : vector<128x128xf32> to vector<32x128xf32>
    %57 = tpu.transpose %56, [1, 0] : vector<32x128xf32> -> vector<128x32xf32>
    %58 = arith.truncf %57 : vector<128x32xf32> to vector<128x32xbf16>
    %59 = vector.extract_strided_slice %10 {offsets = [64, 0], sizes = [32, 256], strides = [1, 1]} : vector<256x256xbf16> to vector<32x256xbf16>
    %60 = vector.extract_strided_slice %10 {offsets = [192, 0], sizes = [32, 256], strides = [1, 1]} : vector<256x256xbf16> to vector<32x256xbf16>
    %cst_23 = arith.constant dense<0.000000e+00> : vector<128x256xf32>
    %61 = tpu.matmul %58, %59, %cst_23 {dimension_numbers = #tpu.dot_dimension_numbers<[1], [0], [0], [1], [0, 0, 1, 1], [], []>} : vector<128x32xbf16>, vector<32x256xbf16>, vector<128x256xf32> -> vector<128x256xf32>
    %cst_24 = arith.constant dense<0xFF800000> : vector<128xf32>
    %62 = vector.multi_reduction <maximumf>, %61, %cst_24 [1] : vector<128x256xf32> to vector<128xf32>
    %63 = vector.shape_cast %62 : vector<128xf32> to vector<128x1xf32>
    %64 = vector.broadcast %63 : vector<128x1xf32> to vector<128x256xf32>
    %65 = arith.subf %61, %64 : vector<128x256xf32>
    %66 = math.exp %65 : vector<128x256xf32>
    %cst_25 = arith.constant dense<0.000000e+00> : vector<128xf32>
    %67 = vector.multi_reduction <add>, %66, %cst_25 [1] : vector<128x256xf32> to vector<128xf32>
    %68 = vector.shape_cast %67 : vector<128xf32> to vector<128x1xf32>
    %69 = arith.truncf %66 : vector<128x256xf32> to vector<128x256xbf16>
    %cst_26 = arith.constant dense<0.000000e+00> : vector<128x32xf32>
    %70 = tpu.matmul %69, %60, %cst_26 {dimension_numbers = #tpu.dot_dimension_numbers<[1], [1], [0], [0], [0, 0, 1, 0], [], []>} : vector<128x256xbf16>, vector<32x256xbf16>, vector<128x32xf32> -> vector<128x32xf32>
    %71 = tpu.reciprocal %68 {approx = true} : vector<128x1xf32> -> vector<128x1xf32>
    %72 = vector.broadcast %71 : vector<128x1xf32> to vector<128x32xf32>
    %73 = arith.mulf %70, %72 : vector<128x32xf32>
    %74 = arith.truncf %73 : vector<128x32xf32> to vector<128x32xbf16>
    %c64 = arith.constant 64 : index
    %c0_27 = arith.constant 0 : index
    %75 = vector.load %arg5[%c64, %c0_27] : memref<128x32xbf16, #tpu.memory_space<vmem>>, vector<32x32xbf16>
    %cst_28 = arith.constant dense<0.000000e+00> : vector<128x32xf32>
    %76 = tpu.matmul %74, %75, %cst_28 {dimension_numbers = #tpu.dot_dimension_numbers<[1], [0], [0], [1], [0, 0, 1, 1], [], []>} : vector<128x32xbf16>, vector<32x32xbf16>, vector<128x32xf32> -> vector<128x32xf32>
    %77 = arith.addf %55, %76 : vector<128x32xf32>
    %78 = vector.extract_strided_slice %8 {offsets = [96, 0], sizes = [32, 128], strides = [1, 1]} : vector<128x128xf32> to vector<32x128xf32>
    %79 = tpu.transpose %78, [1, 0] : vector<32x128xf32> -> vector<128x32xf32>
    %80 = arith.truncf %79 : vector<128x32xf32> to vector<128x32xbf16>
    %81 = vector.extract_strided_slice %10 {offsets = [96, 0], sizes = [32, 256], strides = [1, 1]} : vector<256x256xbf16> to vector<32x256xbf16>
    %82 = vector.extract_strided_slice %10 {offsets = [224, 0], sizes = [32, 256], strides = [1, 1]} : vector<256x256xbf16> to vector<32x256xbf16>
    %cst_29 = arith.constant dense<0.000000e+00> : vector<128x256xf32>
    %83 = tpu.matmul %80, %81, %cst_29 {dimension_numbers = #tpu.dot_dimension_numbers<[1], [0], [0], [1], [0, 0, 1, 1], [], []>} : vector<128x32xbf16>, vector<32x256xbf16>, vector<128x256xf32> -> vector<128x256xf32>
    %cst_30 = arith.constant dense<0xFF800000> : vector<128xf32>
    %84 = vector.multi_reduction <maximumf>, %83, %cst_30 [1] : vector<128x256xf32> to vector<128xf32>
    %85 = vector.shape_cast %84 : vector<128xf32> to vector<128x1xf32>
    %86 = vector.broadcast %85 : vector<128x1xf32> to vector<128x256xf32>
    %87 = arith.subf %83, %86 : vector<128x256xf32>
    %88 = math.exp %87 : vector<128x256xf32>
    %cst_31 = arith.constant dense<0.000000e+00> : vector<128xf32>
    %89 = vector.multi_reduction <add>, %88, %cst_31 [1] : vector<128x256xf32> to vector<128xf32>
    %90 = vector.shape_cast %89 : vector<128xf32> to vector<128x1xf32>
    %91 = arith.truncf %88 : vector<128x256xf32> to vector<128x256xbf16>
    %cst_32 = arith.constant dense<0.000000e+00> : vector<128x32xf32>
    %92 = tpu.matmul %91, %82, %cst_32 {dimension_numbers = #tpu.dot_dimension_numbers<[1], [1], [0], [0], [0, 0, 1, 0], [], []>} : vector<128x256xbf16>, vector<32x256xbf16>, vector<128x32xf32> -> vector<128x32xf32>
    %93 = tpu.reciprocal %90 {approx = true} : vector<128x1xf32> -> vector<128x1xf32>
    %94 = vector.broadcast %93 : vector<128x1xf32> to vector<128x32xf32>
    %95 = arith.mulf %92, %94 : vector<128x32xf32>
    %96 = arith.truncf %95 : vector<128x32xf32> to vector<128x32xbf16>
    %c96 = arith.constant 96 : index
    %c0_33 = arith.constant 0 : index
    %97 = vector.load %arg5[%c96, %c0_33] : memref<128x32xbf16, #tpu.memory_space<vmem>>, vector<32x32xbf16>
    %cst_34 = arith.constant dense<0.000000e+00> : vector<128x32xf32>
    %98 = tpu.matmul %96, %97, %cst_34 {dimension_numbers = #tpu.dot_dimension_numbers<[1], [0], [0], [1], [0, 0, 1, 1], [], []>} : vector<128x32xbf16>, vector<32x32xbf16>, vector<128x32xf32> -> vector<128x32xf32>
    %99 = arith.addf %77, %98 : vector<128x32xf32>
    %100 = tpu.transpose %99, [1, 0] : vector<128x32xf32> -> vector<32x128xf32>
    %c0_35 = arith.constant 0 : index
    %c0_36 = arith.constant 0 : index
    %101 = vector.load %arg6[%c0_35, %c0_36] : memref<32x1xf32, #tpu.memory_space<vmem>>, vector<32x1xf32>
    %102 = vector.broadcast %101 : vector<32x1xf32> to vector<32x128xf32>
    %103 = arith.addf %100, %102 : vector<32x128xf32>
    %c0_37 = arith.constant 0 : index
    %c0_38 = arith.constant 0 : index
    %c0_39 = arith.constant 0 : index
    %104 = vector.load %arg7[%c0_37, %c0_38, %c0_39] : memref<1x32x128xf32, #tpu.memory_space<vmem>>, vector<1x32x128xf32>
    %105 = vector.shape_cast %104 : vector<1x32x128xf32> to vector<32x128xf32>
    %106 = vector.shape_cast %103 : vector<32x128xf32> to vector<1x32x128xf32>
    tpu.vector_store %arg7[%c0_37, %c0_38, %c0_39], %106 {strides = array<i32>} : memref<1x32x128xf32, #tpu.memory_space<vmem>>, vector<1x32x128xf32>,
    return
  }
  func.func @transform_0(%arg0: i32, %arg1: i32) -> (i32, i32, i32) {
    %c0_i32 = arith.constant 0 : i32
    %c0_i32_0 = arith.constant 0 : i32
    %c0_i32_1 = arith.constant 0 : i32
    return %arg0, %c0_i32, %c0_i32_0 : i32, i32, i32
  }
  func.func @transform_1(%arg0: i32, %arg1: i32) -> (i32, i32, i32) {
    %c0_i32 = arith.constant 0 : i32
    %c0_i32_0 = arith.constant 0 : i32
    return %arg0, %c0_i32, %arg1 : i32, i32, i32
  }
  func.func @transform_2(%arg0: i32, %arg1: i32) -> (i32, i32) {
    %c0_i32 = arith.constant 0 : i32
    %c0_i32_0 = arith.constant 0 : i32
    %c0_i32_1 = arith.constant 0 : i32
    return %c0_i32, %c0_i32_0 : i32, i32
  }
  func.func @transform_3(%arg0: i32, %arg1: i32) -> (i32, i32) {
    %c0_i32 = arith.constant 0 : i32
    %c0_i32_0 = arith.constant 0 : i32
    %c0_i32_1 = arith.constant 0 : i32
    return %c0_i32, %c0_i32_0 : i32, i32
  }
  func.func @transform_4(%arg0: i32, %arg1: i32) -> (i32, i32) {
    %c0_i32 = arith.constant 0 : i32
    %c0_i32_0 = arith.constant 0 : i32
    %c0_i32_1 = arith.constant 0 : i32
    return %c0_i32, %c0_i32_0 : i32, i32
  }
  func.func @transform_5(%arg0: i32, %arg1: i32) -> (i32, i32, i32) {
    %c0_i32 = arith.constant 0 : i32
    %c0_i32_0 = arith.constant 0 : i32
    return %arg0, %c0_i32, %arg1 : i32, i32, i32
  }
}

</mosaic_0001>

<llo_original>
// kernel: tpu_custom_call.1
$region0: #{tpu_custom_call.1}
  #allocation0 [shape = 'u32[]', space=smem, size = 0x4, offset = 0x4, fixed_abs, tag = 'smem constant byte address 0x4 - core index']
  #allocation1 [shape = 'u32[144,128]{1,0:T(1,128)}', space=vmem, size = 0x12000, scoped, tag = 'internal scratch']
  %s0 = inlined_call_operand.vmem [shape: f32[2,32,256], index: 0, kind: input, shape index: {}]
  %s1 = inlined_call_operand.vmem [shape: f32[2,32,256], index: 1, kind: input, shape index: {}]
  %s2 = inlined_call_operand.vmem [shape: bf16[384,32], index: 2, kind: input, shape index: {}]
  %s3 = inlined_call_operand.vmem [shape: bf16[128,32], index: 3, kind: input, shape index: {}]
  %s4 = inlined_call_operand.vmem [shape: f32[32,1], index: 4, kind: input, shape index: {}]
  %s5 = inlined_call_operand.hbm [shape: f32[2,32,256], index: 5, kind: output, shape index: {}]
  %s6 = sld [smem:[#allocation0]]
  $region91: #{tpu_custom_call.1} parent=0
    _
  %s8 = ssub.s32 1, %s6
  %s9 = scalar_select 0, %s8, %s6
  $region1: #{tpu_custom_call.1} parent=0
    #allocation2 [shape = 'u8[32768]{0}', space=vmem, size = 0x8000, scoped, tag = 'input window, operand 1']
    #allocation3 [shape = 'u8[32768]{0}', space=vmem, size = 0x8000, scoped, tag = 'output window, operand 0']
    #allocation4 [shape = 's32[2]{0}', space=sflag, size = 0x8, scoped, tag = 'scoped memory for tpu_custom_call.1']
    %10 = vsyncpa [#allocation4], 0
    %s11 = scalar_lea.sflag [#allocation4], 1
    %12 = vsyncpa %s11, 0
    loop: start=0, step=1, limit=6
    $region2: #{tpu_custom_call.1} parent=1 // loop_pre_header
      _
    $region3: #{tpu_custom_call.1} parent=1 // loop_header
      %s14 = sphi 0, %s18
      %p15 = scmp.ge.s32.totalorder %s14, 6
      %s21 = sphi 0, %s33
      %s22 = sphi 0, %s29
      %s23 = sphi 0, %s21
      %s24 = sphi 0, %s22
      %s25 = sphi 0, %s23
      %s26 = sphi 0, %s24
      %s36 = sphi 0, %s38
      %s39 = sphi 0, %s36
      %s40 = sphi 0, %s39
      %s56 = sphi 0, %s40
      %s64 = sphi 0, %s66
      %s67 = sphi 0, %s64
      %s68 = sphi 0, %s67
      %s84 = sphi 0, %s68
      %s88 = sphi 0, %s88
      %s90 = sphi 0, %s88
      %s91 = sphi 0, %s90
      %s105 = sphi 0, %s91
      %s109 = sphi 0, %s109
      %s111 = sphi 0, %s109
      %s112 = sphi 0, %s111
      %s126 = sphi 0, %s112
      %s130 = sphi 0, %s130
      %s132 = sphi 0, %s130
      %s133 = sphi 0, %s132
      %s147 = sphi 0, %s133
      %s155 = sphi 0, %s157
      %s158 = sphi 0, %s155
      %s159 = sphi 0, %s158
      %s175 = sphi 0, %s159
    $region4: #{tpu_custom_call.1} parent=1 // loop_header_branch
      %17 = sbr.rel (%p15) target = $region8
    $region5: #{tpu_custom_call.1} parent=1 // loop_body
      %s19 = ssub.s32 %s14, 1
      %s20 = ssub.s32 %s14, 2
      %s27 = sadd.s32 1, %s22
      %p28 = scmp.ge.s32.totalorder %s27, 2
      %s29 = scalar_select %p28, 0, %s27
      %s30 = sadd.s32 1, %s21
      %s31 = scalar_select %p28, %s30, %s21
      %p32 = scmp.ge.s32.totalorder %s31, 2
      %s33 = scalar_select %p32, 0, %s31
      %s34 = ssub.s32 %s21, %s33
      %p35 = scmp.eq.s32.totalorder %s34, 0
      %s37 = sadd.s32 %s36, 1
      %s38 = scalar_select %p35, %s36, %s37
      %p41 = pneg %p35
      %p42 = scmp.eq.s32.totalorder %s14, 3
      %p43 = por %p41, %p42
      %p44 = scmp.ne.s32.totalorder %s36, %s39
      %p45 = scmp.eq.s32.totalorder %s14, 0
      %p46 = por %p44, %p45
      %p47 = scmp.ne.s32.totalorder %s36, %s39
      %p48 = scmp.eq.s32.totalorder %s19, 3
      %p49 = por %p47, %p48
      %p50 = scmp.ne.s32.totalorder %s39, %s40
      %p51 = scmp.eq.s32.totalorder %s19, 0
      %p52 = por %p50, %p51
      %p53 = scmp.ne.s32.totalorder %s39, %s40
      %p54 = scmp.eq.s32.totalorder %s20, 3
      %p55 = por %p53, %p54
      %p57 = scmp.ne.s32.totalorder %s40, %s56
      %p58 = scmp.eq.s32.totalorder %s20, 0
      %p59 = por %p57, %p58
      %s60 = ssub.s32 %s21, %s33
      %s61 = ssub.s32 %s22, %s29
      %s62 = sor.u32 %s60, %s61
      %p63 = scmp.eq.s32.totalorder %s62, 0
      %s65 = sadd.s32 %s64, 1
      %s66 = scalar_select %p63, %s64, %s65
      %p69 = pneg %p63
      %p70 = scmp.eq.s32.totalorder %s14, 3
      %p71 = por %p69, %p70
      %p72 = scmp.ne.s32.totalorder %s64, %s67
      %p73 = scmp.eq.s32.totalorder %s14, 0
      %p74 = por %p72, %p73
      %p75 = scmp.ne.s32.totalorder %s64, %s67
      %p76 = scmp.eq.s32.totalorder %s19, 3
      %p77 = por %p75, %p76
      %p78 = scmp.ne.s32.totalorder %s67, %s68
      %p79 = scmp.eq.s32.totalorder %s19, 0
      %p80 = por %p78, %p79
      %p81 = scmp.ne.s32.totalorder %s67, %s68
      %p82 = scmp.eq.s32.totalorder %s20, 3
      %p83 = por %p81, %p82
      %p85 = scmp.ne.s32.totalorder %s68, %s84
      %p86 = scmp.eq.s32.totalorder %s20, 0
      %p87 = por %p85, %p86
      %s89 = sadd.s32 %s88, 1
      %p92 = scmp.eq.s32.totalorder %s14, 3
      %p93 = scmp.ne.s32.totalorder %s88, %s90
      %p94 = scmp.eq.s32.totalorder %s14, 0
      %p95 = por %p93, %p94
      %p96 = scmp.ne.s32.totalorder %s88, %s90
      %p97 = scmp.eq.s32.totalorder %s19, 3
      %p98 = por %p96, %p97
      %p99 = scmp.ne.s32.totalorder %s90, %s91
      %p100 = scmp.eq.s32.totalorder %s19, 0
      %p101 = por %p99, %p100
      %p102 = scmp.ne.s32.totalorder %s90, %s91
      %p103 = scmp.eq.s32.totalorder %s20, 3
      %p104 = por %p102, %p103
      %p106 = scmp.ne.s32.totalorder %s91, %s105
      %p107 = scmp.eq.s32.totalorder %s20, 0
      %p108 = por %p106, %p107
      %s110 = sadd.s32 %s109, 1
      %p113 = scmp.eq.s32.totalorder %s14, 3
      %p114 = scmp.ne.s32.totalorder %s109, %s111
      %p115 = scmp.eq.s32.totalorder %s14, 0
      %p116 = por %p114, %p115
      %p117 = scmp.ne.s32.totalorder %s109, %s111
      %p118 = scmp.eq.s32.totalorder %s19, 3
      %p119 = por %p117, %p118
      %p120 = scmp.ne.s32.totalorder %s111, %s112
      %p121 = scmp.eq.s32.totalorder %s19, 0
      %p122 = por %p120, %p121
      %p123 = scmp.ne.s32.totalorder %s111, %s112
      %p124 = scmp.eq.s32.totalorder %s20, 3
      %p125 = por %p123, %p124
      %p127 = scmp.ne.s32.totalorder %s112, %s126
      %p128 = scmp.eq.s32.totalorder %s20, 0
      %p129 = por %p127, %p128
      %s131 = sadd.s32 %s130, 1
      %p134 = scmp.eq.s32.totalorder %s14, 3
      %p135 = scmp.ne.s32.totalorder %s130, %s132
      %p136 = scmp.eq.s32.totalorder %s14, 0
      %p137 = por %p135, %p136
      %p138 = scmp.ne.s32.totalorder %s130, %s132
      %p139 = scmp.eq.s32.totalorder %s19, 3
      %p140 = por %p138, %p139
      %p141 = scmp.ne.s32.totalorder %s132, %s133
      %p142 = scmp.eq.s32.totalorder %s19, 0
      %p143 = por %p141, %p142
      %p144 = scmp.ne.s32.totalorder %s132, %s133
      %p145 = scmp.eq.s32.totalorder %s20, 3
      %p146 = por %p144, %p145
      %p148 = scmp.ne.s32.totalorder %s133, %s147
      %p149 = scmp.eq.s32.totalorder %s20, 0
      %p150 = por %p148, %p149
      %s151 = ssub.s32 %s21, %s33
      %s152 = ssub.s32 %s22, %s29
      %s153 = sor.u32 %s151, %s152
      %p154 = scmp.eq.s32.totalorder %s153, 0
      %s156 = sadd.s32 %s155, 1
      %s157 = scalar_select %p154, %s155, %s156
      %p160 = pneg %p154
      %p161 = scmp.eq.s32.totalorder %s14, 3
      %p162 = por %p160, %p161
      %p163 = scmp.ne.s32.totalorder %s155, %s158
      %p164 = scmp.eq.s32.totalorder %s14, 0
      %p165 = por %p163, %p164
      %p166 = scmp.ne.s32.totalorder %s155, %s158
      %p167 = scmp.eq.s32.totalorder %s19, 3
      %p168 = por %p166, %p167
      %p169 = scmp.ne.s32.totalorder %s158, %s159
      %p170 = scmp.eq.s32.totalorder %s19, 0
      %p171 = por %p169, %p170
      %p172 = scmp.ne.s32.totalorder %s158, %s159
      %p173 = scmp.eq.s32.totalorder %s20, 3
      %p174 = por %p172, %p173
      %p176 = scmp.ne.s32.totalorder %s159, %s175
      %p177 = scmp.eq.s32.totalorder %s20, 0
      %p178 = por %p176, %p177
      %p179 = scmp.le.s32.totalorder 1, %s14
      %p180 = scmp.lt.s32.totalorder %s14, 5
      %p181 = pnand %p179, %p180
      %p182 = pneg %p181
      // Predicated region
      $region9: #{tpu_custom_call.1} parent=5 // pred_check
        _
      $region10: #{tpu_custom_call.1} parent=5 // pred_check_branch
        %184 = sbr.rel (%p181) target = $region12
      $region11: #{tpu_custom_call.1} parent=5 // pred_region
        %s185 = ssub.s32 %s14, 1
        // Predicated region
        $region13: #{tpu_custom_call.1} parent=11 // pred_check
          %p186 = pneg %p101
        $region14: #{tpu_custom_call.1} parent=11 // pred_check_branch
          %188 = sbr.rel (%p186) target = $region16
        $region15: #{tpu_custom_call.1} parent=11 // pred_region
          _
        $region16: #{tpu_custom_call.1} parent=11 // pred_fallthru
          _
        // Predicated region
        $region17: #{tpu_custom_call.1} parent=11 // pred_check
          %p189 = pneg %p122
        $region18: #{tpu_custom_call.1} parent=11 // pred_check_branch
          %191 = sbr.rel (%p189) target = $region20
        $region19: #{tpu_custom_call.1} parent=11 // pred_region
          _
        $region20: #{tpu_custom_call.1} parent=11 // pred_fallthru
          _
        // Predicated region
        $region21: #{tpu_custom_call.1} parent=11 // pred_check
          %p192 = pneg %p143
        $region22: #{tpu_custom_call.1} parent=11 // pred_check_branch
          %194 = sbr.rel (%p192) target = $region24
        $region23: #{tpu_custom_call.1} parent=11 // pred_region
          _
        $region24: #{tpu_custom_call.1} parent=11 // pred_fallthru
          _
      $region12: #{tpu_custom_call.1} parent=5 // pred_fallthru
        _
      %p195 = scmp.lt.s32.totalorder %s14, 4
      // Predicated region
      $region25: #{tpu_custom_call.1} parent=5 // pred_check
        %p196 = pneg %p195
      $region26: #{tpu_custom_call.1} parent=5 // pred_check_branch
        %198 = sbr.rel (%p196) target = $region28
      $region27: #{tpu_custom_call.1} parent=5 // pred_region
        // Predicated region
        $region29: #{tpu_custom_call.1} parent=27 // pred_check
          %p199 = pneg %p46
        $region30: #{tpu_custom_call.1} parent=27 // pred_check_branch
          %201 = sbr.rel (%p199) target = $region32
        $region31: #{tpu_custom_call.1} parent=27 // pred_region
          %p202 = scmp.lt.s32.totalorder %s21, 1
          %s203 = scalar_select %p202, %s21, 1
          %s204 = smul.addr %s203, 8
          %s205 = smul.addr %s204, 8
          %s206 = scalar_lea.vmem %s0, %s205
        $region32: #{tpu_custom_call.1} parent=27 // pred_fallthru
          _
        // Predicated region
        $region33: #{tpu_custom_call.1} parent=27 // pred_check
          %p207 = pneg %p74
        $region34: #{tpu_custom_call.1} parent=27 // pred_check_branch
          %209 = sbr.rel (%p207) target = $region36
        $region35: #{tpu_custom_call.1} parent=27 // pred_region
          %s210 = sand.u32 %s64, 1
          %s211 = sand.u32 %s64, 1
          %s212 = smul.addr %s211, 32
          %s213 = scalar_lea.vmem [#allocation2], %s212
          %s214 = smul.addr %s21, 8
          %s215 = sadd.s32 %s22, %s214
          %s216 = smul.addr %s215, 8
          %s217 = scalar_lea.vmem %s1, %s216
          // Predicated region
          $region37: #{tpu_custom_call.1} parent=35 // pred_check
            _
          $region38: #{tpu_custom_call.1} parent=35 // pred_check_branch
            %219 = sbr.rel (0) target = $region40
          $region39: #{tpu_custom_call.1} parent=35 // pred_region
            // Predicated region
            $region41: #{tpu_custom_call.1} parent=39 // pred_check
              _
            $region42: #{tpu_custom_call.1} parent=39 // pred_check_branch
              %221 = sbr.rel (0) target = $region44
            $region43: #{tpu_custom_call.1} parent=39 // pred_region
              // Predicated region
              $region56: #{tpu_custom_call.1} parent=43 // pred_check
                _
              $region57: #{tpu_custom_call.1} parent=43 // pred_check_branch
                %242 = sbr.rel (0) target = $region59
              $region58: #{tpu_custom_call.1} parent=43 // pred_region
                loop: start=0, step=1, limit=1
                $region60: #{tpu_custom_call.1} parent=58 // loop_pre_header
                  _
                $region61: #{tpu_custom_call.1} parent=58 // loop_header
                  %s244 = sphi 0, %s248
                  %p245 = scmp.ge.s32.totalorder %s244, 1
                  %s249 = sphi %s217, %s217
                  %s250 = sphi %s213, %s213
                $region62: #{tpu_custom_call.1} parent=58 // loop_header_branch
                  %247 = sbr.rel (%p245) target = $region66
                $region63: #{tpu_custom_call.1} parent=58 // loop_body
                  %v251 = vld [vmem:[%s249] sm:$0xff]
                  %252 = vst [vmem:[%s250] sm:$0xff] %v251
                  %v253 = vld [vmem:[%s249 + $0x10] sm:$0xff]
                  %254 = vst [vmem:[%s250 + $0x8] sm:$0xff] %v253
                  %v255 = vld [vmem:[%s249 + $0x20] sm:$0xff]
                  %256 = vst [vmem:[%s250 + $0x10] sm:$0xff] %v255
                  %v257 = vld [vmem:[%s249 + $0x30] sm:$0xff]
                  %258 = vst [vmem:[%s250 + $0x18] sm:$0xff] %v257
                $region64: #{tpu_custom_call.1} parent=58 // loop_footer
                  %s248 = sadd.s32 1, %s244
                $region65: #{tpu_custom_call.1} parent=58 // loop_footer_branch
                  %243 = sbr.rel target = $region61
                $region66: #{tpu_custom_call.1} parent=58 // loop_exit
                  _
              $region59: #{tpu_custom_call.1} parent=43 // pred_fallthru
                _
              // Predicated region
              $region67: #{tpu_custom_call.1} parent=43 // pred_check
                _
              $region68: #{tpu_custom_call.1} parent=43 // pred_check_branch
                %260 = sbr.rel target = $region70
              $region69: #{tpu_custom_call.1} parent=43 // pred_region
                _
              $region70: #{tpu_custom_call.1} parent=43 // pred_fallthru
                _
            $region44: #{tpu_custom_call.1} parent=39 // pred_fallthru
              _
            // Predicated region
            $region45: #{tpu_custom_call.1} parent=39 // pred_check
              _
            $region46: #{tpu_custom_call.1} parent=39 // pred_check_branch
              %223 = sbr.rel target = $region48
            $region47: #{tpu_custom_call.1} parent=39 // pred_region
              loop: start=0, step=1, limit=1
              $region49: #{tpu_custom_call.1} parent=47 // loop_pre_header
                _
              $region50: #{tpu_custom_call.1} parent=47 // loop_header
                %s226 = sphi 0, %s230
                %p227 = scmp.ge.s32.totalorder %s226, 1
                %s231 = sphi %s217, %s217
                %s232 = sphi %s213, %s213
              $region51: #{tpu_custom_call.1} parent=47 // loop_header_branch
                %229 = sbr.rel (%p227) target = $region55
              $region52: #{tpu_custom_call.1} parent=47 // loop_body
                %v233 = vld [vmem:[%s231] sm:$0xff]
                %234 = vst [vmem:[%s232] sm:$0xff] %v233
                %v235 = vld [vmem:[%s231 + $0x10] sm:$0xff]
                %236 = vst [vmem:[%s232 + $0x8] sm:$0xff] %v235
                %v237 = vld [vmem:[%s231 + $0x20] sm:$0xff]
                %238 = vst [vmem:[%s232 + $0x10] sm:$0xff] %v237
                %v239 = vld [vmem:[%s231 + $0x30] sm:$0xff]
                %240 = vst [vmem:[%s232 + $0x18] sm:$0xff] %v239
              $region53: #{tpu_custom_call.1} parent=47 // loop_footer
                %s230 = sadd.s32 1, %s226
              $region54: #{tpu_custom_call.1} parent=47 // loop_footer_branch
                %225 = sbr.rel target = $region50
              $region55: #{tpu_custom_call.1} parent=47 // loop_exit
                _
            $region48: #{tpu_custom_call.1} parent=39 // pred_fallthru
              _
          $region40: #{tpu_custom_call.1} parent=35 // pred_fallthru
            _
          %261 = vnop
        $region36: #{tpu_custom_call.1} parent=27 // pred_fallthru
          _
      $region28: #{tpu_custom_call.1} parent=5 // pred_fallthru
        _
      %p262 = scmp.le.s32.totalorder 1, %s14
      %p263 = scmp.lt.s32.totalorder %s14, 5
      %p264 = pnand %p262, %p263
      %p265 = pneg %p264
      // Predicated region
      $region71: #{tpu_custom_call.1} parent=5 // pred_check
        _
      $region72: #{tpu_custom_call.1} parent=5 // pred_check_branch
        %267 = sbr.rel (%p264) target = $region74
      $region73: #{tpu_custom_call.1} parent=5 // pred_region
        %s268 = ssub.s32 %s14, 1
        %s269 = sand.u32 %s67, 1
        %s270 = sand.u32 %s67, 1
        %s271 = smul.addr %s270, 32
        %s272 = scalar_lea.vmem [#allocation2], %s271
        // Predicated region
        $region75: #{tpu_custom_call.1} parent=73 // pred_check
          %p273 = pneg %p80
        $region76: #{tpu_custom_call.1} parent=73 // pred_check_branch
          %275 = sbr.rel (%p273) target = $region78
        $region77: #{tpu_custom_call.1} parent=73 // pred_region
          _
        $region78: #{tpu_custom_call.1} parent=73 // pred_fallthru
          _
        %p276 = scmp.lt.s32.totalorder %s23, 1
        %s277 = scalar_select %p276, %s23, 1
        %s278 = smul.addr %s277, 8
        %s279 = smul.addr %s278, 8
        %s280 = scalar_lea.vmem %s0, %s279
        %p281 = pneg %p52
        %p282 = pneg %p49
        %s283 = sand.u32 %s67, 1
        %s284 = sand.u32 %s67, 1
        %s285 = smul.addr %s284, 32
        %s286 = scalar_lea.vmem [#allocation2], %s285
        %p287 = pneg %p80
        %p288 = pneg %p77
        %p289 = pneg %p101
        %p290 = pneg %p98
        %p291 = pneg %p122
        %p292 = pneg %p119
        %p293 = pneg %p143
        %p294 = pneg %p140
        %p295 = pneg %p171
        %p296 = pneg %p168
        %s297 = sand.u32 %s158, 1
        %s298 = scalar_lea.sflag [#allocation4], %s297
        %s299 = sand.u32 %s158, 1
        %s300 = smul.addr %s299, 32
        %s301 = scalar_lea.vmem [#allocation3], %s300
        %p302 = scmp.lt.s32.totalorder %s23, 1
        %s303 = scalar_select %p302, %s23, 1
        %s304 = smul.addr %s303, 8
        %s305 = smul.addr %s304, 8
        %s306 = scalar_lea.vmem %s0, %s305
        %v308 = vld [vmem:[%s306] sm:$0xff]
        %v309 = vld [vmem:[%s306 + $0x8] sm:$0xff]
        %v310 = vld [vmem:[%s306 + $0x10] sm:$0xff]
        %v311 = vld [vmem:[%s306 + $0x18] sm:$0xff]
        %v312 = vld [vmem:[%s306 + $0x20] sm:$0xff]
        %v313 = vld [vmem:[%s306 + $0x28] sm:$0xff]
        %v314 = vld [vmem:[%s306 + $0x30] sm:$0xff]
        %v315 = vld [vmem:[%s306 + $0x38] sm:$0xff]
        %v316 = vpack.c.bf16 %v310, %v308
        %v317 = vpack.c.bf16 %v311, %v309
        %v318 = vpack.c.bf16 %v314, %v312
        %v319 = vpack.c.bf16 %v315, %v313
        %v320 = vld [vmem:[%s272] sm:$0xff]
        %v321 = vld [vmem:[%s272 + $0x8] sm:$0xff]
        %v322 = vld [vmem:[%s272 + $0x10] sm:$0xff]
        %v323 = vld [vmem:[%s272 + $0x18] sm:$0xff]
        %v324 = vpack.c.bf16 %v321, %v320
        %v325 = vpack.c.bf16 %v323, %v322
        %v326 = vld [vmem:[%s2] sm:$0xf]
        %v327 = vld [vmem:[%s2 + $0x4] sm:$0xf]
        %v328 = vld [vmem:[%s2 + $0x8] sm:$0xf]
        %v329 = vld [vmem:[%s2 + $0xc] sm:$0xf]
        %v330 = vld [vmem:[%s2 + $0x10] sm:$0xf]
        %v331 = vld [vmem:[%s2 + $0x14] sm:$0xf]
        %v332 = vld [vmem:[%s2 + $0x18] sm:$0xf]
        %v333 = vld [vmem:[%s2 + $0x1c] sm:$0xf]
        %v334 = vld [vmem:[%s2 + $0x20] sm:$0xf]
        %v335 = vld [vmem:[%s2 + $0x24] sm:$0xf]
        %v336 = vld [vmem:[%s2 + $0x28] sm:$0xf]
        %v337 = vld [vmem:[%s2 + $0x2c] sm:$0xf]
        %v338 = vld [vmem:[%s2 + $0x30] sm:$0xf]
        %v339 = vld [vmem:[%s2 + $0x34] sm:$0xf]
        %v340 = vld [vmem:[%s2 + $0x38] sm:$0xf]
        %v341 = vld [vmem:[%s2 + $0x3c] sm:$0xf]
        %v342 = vld [vmem:[%s2 + $0x40] sm:$0xf]
        %v343 = vld [vmem:[%s2 + $0x44] sm:$0xf]
        %v344 = vld [vmem:[%s2 + $0x48] sm:$0xf]
        %v345 = vld [vmem:[%s2 + $0x4c] sm:$0xf]
        %v346 = vld [vmem:[%s2 + $0x50] sm:$0xf]
        %v347 = vld [vmem:[%s2 + $0x54] sm:$0xf]
        %v348 = vld [vmem:[%s2 + $0x58] sm:$0xf]
        %v349 = vld [vmem:[%s2 + $0x5c] sm:$0xf]
        %v350 = vld [vmem:[%s2 + $0x60] sm:$0xf]
        %v351 = vld [vmem:[%s2 + $0x64] sm:$0xf]
        %v352 = vld [vmem:[%s2 + $0x68] sm:$0xf]
        %v353 = vld [vmem:[%s2 + $0x6c] sm:$0xf]
        %v354 = vld [vmem:[%s2 + $0x70] sm:$0xf]
        %v355 = vld [vmem:[%s2 + $0x74] sm:$0xf]
        %v356 = vld [vmem:[%s2 + $0x78] sm:$0xf]
        %v357 = vld [vmem:[%s2 + $0x7c] sm:$0xf]
        %v358 = vld [vmem:[%s2 + $0x80] sm:$0xf]
        %v359 = vld [vmem:[%s2 + $0x84] sm:$0xf]
        %v360 = vld [vmem:[%s2 + $0x88] sm:$0xf]
        %v361 = vld [vmem:[%s2 + $0x8c] sm:$0xf]
        %v362 = vld [vmem:[%s2 + $0x90] sm:$0xf]
        %v363 = vld [vmem:[%s2 + $0x94] sm:$0xf]
        %v364 = vld [vmem:[%s2 + $0x98] sm:$0xf]
        %v365 = vld [vmem:[%s2 + $0x9c] sm:$0xf]
        %v366 = vld [vmem:[%s2 + $0xa0] sm:$0xf]
        %v367 = vld [vmem:[%s2 + $0xa4] sm:$0xf]
        %v368 = vld [vmem:[%s2 + $0xa8] sm:$0xf]
        %v369 = vld [vmem:[%s2 + $0xac] sm:$0xf]
        %v370 = vld [vmem:[%s2 + $0xb0] sm:$0xf]
        %v371 = vld [vmem:[%s2 + $0xb4] sm:$0xf]
        %v372 = vld [vmem:[%s2 + $0xb8] sm:$0xf]
        %v373 = vld [vmem:[%s2 + $0xbc] sm:$0xf]
        %v390 = vunpack.c.l.b16 %v326
        %v391 = vunpack.c.l.b16 %v327
        %v392 = vunpack.c.l.b16 %v328
        %v393 = vunpack.c.l.b16 %v329
        %v394 = vunpack.c.l.b16 %v330
        %v395 = vunpack.c.l.b16 %v331
        %v396 = vunpack.c.l.b16 %v332
        %v397 = vunpack.c.l.b16 %v333
        %v398 = vunpack.c.l.b16 %v334
        %v399 = vunpack.c.l.b16 %v335
        %v400 = vunpack.c.l.b16 %v336
        %v401 = vunpack.c.l.b16 %v337
        %v402 = vunpack.c.l.b16 %v338
        %v403 = vunpack.c.l.b16 %v339
        %v404 = vunpack.c.l.b16 %v340
        %v405 = vunpack.c.l.b16 %v341
        %v406 = vpack.c.b16 %v391, %v390
        %v407 = vpack.c.b16 %v393, %v392
        %v408 = vpack.c.b16 %v395, %v394
        %v409 = vpack.c.b16 %v397, %v396
        %v410 = vpack.c.b16 %v399, %v398
        %v411 = vpack.c.b16 %v401, %v400
        %v412 = vpack.c.b16 %v403, %v402
        %v413 = vpack.c.b16 %v405, %v404
        %vm414 = vcmask 261120
        %v416 = vsel %vm414, %v406, 0
        %v419 = vsel %vm414, %v407, 0
        %v422 = vsel %vm414, %v408, 0
        %v425 = vsel %vm414, %v409, 0
        %v428 = vsel %vm414, %v410, 0
        %v431 = vsel %vm414, %v411, 0
        %v434 = vsel %vm414, %v412, 0
        %v437 = vsel %vm414, %v413, 0
        %439 = vmatprep.subr.bf16.mxu0 0
        %440 = vmatpush1.bf16.msra.mxu0 %v324
        %441 = vmatprep.subr.bf16.mxu0 0
        %442 = vmatpush1.bf16.msra.mxu0 %v325
        %443 = vmatprep.subr.bf16.mxu0 0
        %444 = vmatpush1.bf16.msra.mxu0 0
        %445 = vmatprep.subr.bf16.mxu0 0
        %446 = vmatpush1.bf16.msra.mxu0 0
        %447 = vmatprep.subr.bf16.mxu0 0
        %448 = vmatpush1.bf16.msra.mxu0 0
        %449 = vmatprep.subr.bf16.mxu0 0
        %450 = vmatpush1.bf16.msra.mxu0 0
        %451 = vmatprep.subr.bf16.mxu0 0
        %452 = vmatpush1.bf16.msra.mxu0 0
        %453 = vmatprep.subr.bf16.mxu0 0
        %454 = vmatpush1.bf16.msra.mxu0 0
        %455 = vmatprep.subr.bf16.mxu0 0
        %456 = vmatpush1.bf16.msra.mxu0 0
        %457 = vmatprep.subr.bf16.mxu0 0
        %458 = vmatpush1.bf16.msra.mxu0 0
        %459 = vmatprep.subr.bf16.mxu0 0
        %460 = vmatpush1.bf16.msra.mxu0 0
        %461 = vmatprep.subr.bf16.mxu0 0
        %462 = vmatpush1.bf16.msra.mxu0 0
        %463 = vmatprep.subr.bf16.mxu0 0
        %464 = vmatpush1.bf16.msra.mxu0 0
        %465 = vmatprep.subr.bf16.mxu0 0
        %466 = vmatpush1.bf16.msra.mxu0 0
        %467 = vmatprep.subr.bf16.mxu0 0
        %468 = vmatpush1.bf16.msra.mxu0 0
        %469 = vmatprep.subr.bf16.mxu0 0
        %470 = vmatpush1.bf16.msra.mxu0 0
        %471 = vmatprep.mubr.bf16.mxu0 0
        %472 = vmatmul.mubr.bf16.gmra.mrb[0].mxu0 %v416
        %v473 = vpop.f32.mrb[0].mxu0
        %v474 = vadd.f32 0.0, %v473
        %v475 = vpop.f32.mrb[0].mxu0
        %v476 = vpop.f32.mrb[0].mxu0
        %v477 = vadd.f32 0.0, %v476
        %v478 = vpop.f32.mrb[0].mxu0
        %479 = vmatprep.mubr.bf16.mxu0 0
        %480 = vmatmul.mubr.bf16.gmra.mrb[0].mxu0 %v419
        %v481 = vpop.f32.mrb[0].mxu0
        %v482 = vadd.f32 0.0, %v481
        %v483 = vpop.f32.mrb[0].mxu0
        %v484 = vpop.f32.mrb[0].mxu0
        %v485 = vadd.f32 0.0, %v484
        %v486 = vpop.f32.mrb[0].mxu0
        %487 = vmatprep.mubr.bf16.mxu0 0
        %488 = vmatmul.mubr.bf16.gmra.mrb[0].mxu0 %v422
        %v489 = vpop.f32.mrb[0].mxu0
        %v490 = vadd.f32 0.0, %v489
        %v491 = vpop.f32.mrb[0].mxu0
        %v492 = vpop.f32.mrb[0].mxu0
        %v493 = vadd.f32 0.0, %v492
        %v494 = vpop.f32.mrb[0].mxu0
        %495 = vmatprep.mubr.bf16.mxu0 0
        %496 = vmatmul.mubr.bf16.gmra.mrb[0].mxu0 %v425
        %v497 = vpop.f32.mrb[0].mxu0
        %v498 = vadd.f32 0.0, %v497
        %v499 = vpop.f32.mrb[0].mxu0
        %v500 = vpop.f32.mrb[0].mxu0
        %v501 = vadd.f32 0.0, %v500
        %v502 = vpop.f32.mrb[0].mxu0
        %503 = vmatprep.mubr.bf16.mxu0 0
        %504 = vmatmul.mubr.bf16.gmra.mrb[0].mxu0 %v428
        %v505 = vpop.f32.mrb[0].mxu0
        %v506 = vadd.f32 0.0, %v505
        %v507 = vpop.f32.mrb[0].mxu0
        %v508 = vpop.f32.mrb[0].mxu0
        %v509 = vadd.f32 0.0, %v508
        %v510 = vpop.f32.mrb[0].mxu0
        %511 = vmatprep.mubr.bf16.mxu0 0
        %512 = vmatmul.mubr.bf16.gmra.mrb[0].mxu0 %v431
        %v513 = vpop.f32.mrb[0].mxu0
        %v514 = vadd.f32 0.0, %v513
        %v515 = vpop.f32.mrb[0].mxu0
        %v516 = vpop.f32.mrb[0].mxu0
        %v517 = vadd.f32 0.0, %v516
        %v518 = vpop.f32.mrb[0].mxu0
        %519 = vmatprep.mubr.bf16.mxu0 0
        %520 = vmatmul.mubr.bf16.gmra.mrb[0].mxu0 %v434
        %v521 = vpop.f32.mrb[0].mxu0
        %v522 = vadd.f32 0.0, %v521
        %v523 = vpop.f32.mrb[0].mxu0
        %v524 = vpop.f32.mrb[0].mxu0
        %v525 = vadd.f32 0.0, %v524
        %v526 = vpop.f32.mrb[0].mxu0
        %527 = vmatprep.mubr.bf16.mxu0 0
        %528 = vmatmul.mubr.bf16.gmra.mrb[0].mxu0 %v437
        %v529 = vpop.f32.mrb[0].mxu0
        %v530 = vadd.f32 0.0, %v529
        %v531 = vpop.f32.mrb[0].mxu0
        %v532 = vpop.f32.mrb[0].mxu0
        %v533 = vadd.f32 0.0, %v532
        %v534 = vpop.f32.mrb[0].mxu0
        %535 = vdwg.mxu0
        %v568 = vunpack.c.l.b16 %v342
        %v569 = vunpack.c.l.b16 %v343
        %v570 = vunpack.c.l.b16 %v344
        %v571 = vunpack.c.l.b16 %v345
        %v572 = vunpack.c.l.b16 %v346
        %v573 = vunpack.c.l.b16 %v347
        %v574 = vunpack.c.l.b16 %v348
        %v575 = vunpack.c.l.b16 %v349
        %v576 = vunpack.c.l.b16 %v350
        %v577 = vunpack.c.l.b16 %v351
        %v578 = vunpack.c.l.b16 %v352
        %v579 = vunpack.c.l.b16 %v353
        %v580 = vunpack.c.l.b16 %v354
        %v581 = vunpack.c.l.b16 %v355
        %v582 = vunpack.c.l.b16 %v356
        %v583 = vunpack.c.l.b16 %v357
        %v584 = vunpack.c.l.b16 %v358
        %v585 = vunpack.c.l.b16 %v359
        %v586 = vunpack.c.l.b16 %v360
        %v587 = vunpack.c.l.b16 %v361
        %v588 = vunpack.c.l.b16 %v362
        %v589 = vunpack.c.l.b16 %v363
        %v590 = vunpack.c.l.b16 %v364
        %v591 = vunpack.c.l.b16 %v365
        %v592 = vunpack.c.l.b16 %v366
        %v593 = vunpack.c.l.b16 %v367
        %v594 = vunpack.c.l.b16 %v368
        %v595 = vunpack.c.l.b16 %v369
        %v596 = vunpack.c.l.b16 %v370
        %v597 = vunpack.c.l.b16 %v371
        %v598 = vunpack.c.l.b16 %v372
        %v599 = vunpack.c.l.b16 %v373
        %v600 = vpack.c.b16 %v569, %v568
        %v601 = vpack.c.b16 %v571, %v570
        %v602 = vpack.c.b16 %v573, %v572
        %v603 = vpack.c.b16 %v575, %v574
        %v604 = vpack.c.b16 %v577, %v576
        %v605 = vpack.c.b16 %v579, %v578
        %v606 = vpack.c.b16 %v581, %v580
        %v607 = vpack.c.b16 %v583, %v582
        %v608 = vpack.c.b16 %v585, %v584
        %v609 = vpack.c.b16 %v587, %v586
        %v610 = vpack.c.b16 %v589, %v588
        %v611 = vpack.c.b16 %v591, %v590
        %v612 = vpack.c.b16 %v593, %v592
        %v613 = vpack.c.b16 %v595, %v594
        %v614 = vpack.c.b16 %v597, %v596
        %v615 = vpack.c.b16 %v599, %v598
        %v617 = vsel %vm414, %v600, 0
        %v620 = vsel %vm414, %v601, 0
        %v623 = vsel %vm414, %v602, 0
        %v626 = vsel %vm414, %v603, 0
        %v629 = vsel %vm414, %v604, 0
        %v632 = vsel %vm414, %v605, 0
        %v635 = vsel %vm414, %v606, 0
        %v638 = vsel %vm414, %v607, 0
        %v641 = vsel %vm414, %v608, 0
        %v644 = vsel %vm414, %v609, 0
        %v647 = vsel %vm414, %v610, 0
        %v650 = vsel %vm414, %v611, 0
        %v653 = vsel %vm414, %v612, 0
        %v656 = vsel %vm414, %v613, 0
        %v659 = vsel %vm414, %v614, 0
        %v662 = vsel %vm414, %v615, 0
        %664 = vmatprep.subr.bf16.mxu0 %v317
        %665 = vmatpush1.bf16.msra.mxu0 %v316
        %666 = vmatprep.subr.bf16.mxu0 %v319
        %667 = vmatpush1.bf16.msra.mxu0 %v318
        %668 = vmatprep.subr.bf16.mxu0 0
        %669 = vmatpush1.bf16.msra.mxu0 0
        %670 = vmatprep.subr.bf16.mxu0 0
        %671 = vmatpush1.bf16.msra.mxu0 0
        %672 = vmatprep.subr.bf16.mxu0 0
        %673 = vmatpush1.bf16.msra.mxu0 0
        %674 = vmatprep.subr.bf16.mxu0 0
        %675 = vmatpush1.bf16.msra.mxu0 0
        %676 = vmatprep.subr.bf16.mxu0 0
        %677 = vmatpush1.bf16.msra.mxu0 0
        %678 = vmatprep.subr.bf16.mxu0 0
        %679 = vmatpush1.bf16.msra.mxu0 0
        %680 = vmatprep.subr.bf16.mxu0 0
        %681 = vmatpush1.bf16.msra.mxu0 0
        %682 = vmatprep.subr.bf16.mxu0 0
        %683 = vmatpush1.bf16.msra.mxu0 0
        %684 = vmatprep.subr.bf16.mxu0 0
        %685 = vmatpush1.bf16.msra.mxu0 0
        %686 = vmatprep.subr.bf16.mxu0 0
        %687 = vmatpush1.bf16.msra.mxu0 0
        %688 = vmatprep.subr.bf16.mxu0 0
        %689 = vmatpush1.bf16.msra.mxu0 0
        %690 = vmatprep.subr.bf16.mxu0 0
        %691 = vmatpush1.bf16.msra.mxu0 0
        %692 = vmatprep.subr.bf16.mxu0 0
        %693 = vmatpush1.bf16.msra.mxu0 0
        %694 = vmatprep.subr.bf16.mxu0 0
        %695 = vmatpush1.bf16.msra.mxu0 0
        %696 = vmatprep.mubr.bf16.mxu0 0
        %697 = vmatmul.mubr.bf16.gmra.mrb[0].mxu0 %v617
        %v698 = vpop.f32.mrb[0].mxu0
        %v699 = vadd.f32 0.0, %v698
        %v700 = vpop.f32.mrb[0].mxu0
        %v701 = vadd.f32 0.0, %v700
        %v702 = vpop.f32.mrb[0].mxu0
        %v703 = vadd.f32 0.0, %v702
        %v704 = vpop.f32.mrb[0].mxu0
        %v705 = vadd.f32 0.0, %v704
        %706 = vmatprep.mubr.bf16.mxu0 0
        %707 = vmatmul.mubr.bf16.gmra.mrb[0].mxu0 %v620
        %v708 = vpop.f32.mrb[0].mxu0
        %v709 = vadd.f32 0.0, %v708
        %v710 = vpop.f32.mrb[0].mxu0
        %v711 = vadd.f32 0.0, %v710
        %v712 = vpop.f32.mrb[0].mxu0
        %v713 = vadd.f32 0.0, %v712
        %v714 = vpop.f32.mrb[0].mxu0
        %v715 = vadd.f32 0.0, %v714
        %716 = vmatprep.mubr.bf16.mxu0 0
        %717 = vmatmul.mubr.bf16.gmra.mrb[0].mxu0 %v623
        %v718 = vpop.f32.mrb[0].mxu0
        %v719 = vadd.f32 0.0, %v718
        %v720 = vpop.f32.mrb[0].mxu0
        %v721 = vadd.f32 0.0, %v720
        %v722 = vpop.f32.mrb[0].mxu0
        %v723 = vadd.f32 0.0, %v722
        %v724 = vpop.f32.mrb[0].mxu0
        %v725 = vadd.f32 0.0, %v724
        %726 = vmatprep.mubr.bf16.mxu0 0
        %727 = vmatmul.mubr.bf16.gmra.mrb[0].mxu0 %v626
        %v728 = vpop.f32.mrb[0].mxu0
        %v729 = vadd.f32 0.0, %v728
        %v730 = vpop.f32.mrb[0].mxu0
        %v731 = vadd.f32 0.0, %v730
        %v732 = vpop.f32.mrb[0].mxu0
        %v733 = vadd.f32 0.0, %v732
        %v734 = vpop.f32.mrb[0].mxu0
        %v735 = vadd.f32 0.0, %v734
        %736 = vmatprep.mubr.bf16.mxu0 0
        %737 = vmatmul.mubr.bf16.gmra.mrb[0].mxu0 %v629
        %v738 = vpop.f32.mrb[0].mxu0
        %v739 = vadd.f32 0.0, %v738
        %v740 = vpop.f32.mrb[0].mxu0
        %v741 = vadd.f32 0.0, %v740
        %v742 = vpop.f32.mrb[0].mxu0
        %v743 = vadd.f32 0.0, %v742
        %v744 = vpop.f32.mrb[0].mxu0
        %v745 = vadd.f32 0.0, %v744
        %746 = vmatprep.mubr.bf16.mxu0 0
        %747 = vmatmul.mubr.bf16.gmra.mrb[0].mxu0 %v632
        %v748 = vpop.f32.mrb[0].mxu0
        %v749 = vadd.f32 0.0, %v748
        %v750 = vpop.f32.mrb[0].mxu0
        %v751 = vadd.f32 0.0, %v750
        %v752 = vpop.f32.mrb[0].mxu0
        %v753 = vadd.f32 0.0, %v752
        %v754 = vpop.f32.mrb[0].mxu0
        %v755 = vadd.f32 0.0, %v754
        %756 = vmatprep.mubr.bf16.mxu0 0
        %757 = vmatmul.mubr.bf16.gmra.mrb[0].mxu0 %v635
        %v758 = vpop.f32.mrb[0].mxu0
        %v759 = vadd.f32 0.0, %v758
        %v760 = vpop.f32.mrb[0].mxu0
        %v761 = vadd.f32 0.0, %v760
        %v762 = vpop.f32.mrb[0].mxu0
        %v763 = vadd.f32 0.0, %v762
        %v764 = vpop.f32.mrb[0].mxu0
        %v765 = vadd.f32 0.0, %v764
        %766 = vmatprep.mubr.bf16.mxu0 0
        %767 = vmatmul.mubr.bf16.gmra.mrb[0].mxu0 %v638
        %v768 = vpop.f32.mrb[0].mxu0
        %v769 = vadd.f32 0.0, %v768
        %v770 = vpop.f32.mrb[0].mxu0
        %v771 = vadd.f32 0.0, %v770
        %v772 = vpop.f32.mrb[0].mxu0
        %v773 = vadd.f32 0.0, %v772
        %v774 = vpop.f32.mrb[0].mxu0
        %v775 = vadd.f32 0.0, %v774
        %776 = vmatprep.mubr.bf16.mxu0 0
        %777 = vmatmul.mubr.bf16.gmra.mrb[0].mxu0 %v641
        %v778 = vpop.f32.mrb[0].mxu0
        %v779 = vadd.f32 0.0, %v778
        %v780 = vpop.f32.mrb[0].mxu0
        %v781 = vadd.f32 0.0, %v780
        %v782 = vpop.f32.mrb[0].mxu0
        %v783 = vadd.f32 0.0, %v782
        %v784 = vpop.f32.mrb[0].mxu0
        %v785 = vadd.f32 0.0, %v784
        %786 = vmatprep.mubr.bf16.mxu0 0
        %787 = vmatmul.mubr.bf16.gmra.mrb[0].mxu0 %v644
        %v788 = vpop.f32.mrb[0].mxu0
        %v789 = vadd.f32 0.0, %v788
        %v790 = vpop.f32.mrb[0].mxu0
        %v791 = vadd.f32 0.0, %v790
        %v792 = vpop.f32.mrb[0].mxu0
        %v793 = vadd.f32 0.0, %v792
        %v794 = vpop.f32.mrb[0].mxu0
        %v795 = vadd.f32 0.0, %v794
        %796 = vmatprep.mubr.bf16.mxu0 0
        %797 = vmatmul.mubr.bf16.gmra.mrb[0].mxu0 %v647
        %v798 = vpop.f32.mrb[0].mxu0
        %v799 = vadd.f32 0.0, %v798
        %v800 = vpop.f32.mrb[0].mxu0
        %v801 = vadd.f32 0.0, %v800
        %v802 = vpop.f32.mrb[0].mxu0
        %v803 = vadd.f32 0.0, %v802
        %v804 = vpop.f32.mrb[0].mxu0
        %v805 = vadd.f32 0.0, %v804
        %806 = vmatprep.mubr.bf16.mxu0 0
        %807 = vmatmul.mubr.bf16.gmra.mrb[0].mxu0 %v650
        %v808 = vpop.f32.mrb[0].mxu0
        %v809 = vadd.f32 0.0, %v808
        %v810 = vpop.f32.mrb[0].mxu0
        %v811 = vadd.f32 0.0, %v810
        %v812 = vpop.f32.mrb[0].mxu0
        %v813 = vadd.f32 0.0, %v812
        %v814 = vpop.f32.mrb[0].mxu0
        %v815 = vadd.f32 0.0, %v814
        %816 = vmatprep.mubr.bf16.mxu0 0
        %817 = vmatmul.mubr.bf16.gmra.mrb[0].mxu0 %v653
        %v818 = vpop.f32.mrb[0].mxu0
        %v819 = vadd.f32 0.0, %v818
        %v820 = vpop.f32.mrb[0].mxu0
        %v821 = vadd.f32 0.0, %v820
        %v822 = vpop.f32.mrb[0].mxu0
        %v823 = vadd.f32 0.0, %v822
        %v824 = vpop.f32.mrb[0].mxu0
        %v825 = vadd.f32 0.0, %v824
        %826 = vmatprep.mubr.bf16.mxu0 0
        %827 = vmatmul.mubr.bf16.gmra.mrb[0].mxu0 %v656
        %v828 = vpop.f32.mrb[0].mxu0
        %v829 = vadd.f32 0.0, %v828
        %v830 = vpop.f32.mrb[0].mxu0
        %v831 = vadd.f32 0.0, %v830
        %v832 = vpop.f32.mrb[0].mxu0
        %v833 = vadd.f32 0.0, %v832
        %v834 = vpop.f32.mrb[0].mxu0
        %v835 = vadd.f32 0.0, %v834
        %836 = vmatprep.mubr.bf16.mxu0 0
        %837 = vmatmul.mubr.bf16.gmra.mrb[0].mxu0 %v659
        %v838 = vpop.f32.mrb[0].mxu0
        %v839 = vadd.f32 0.0, %v838
        %v840 = vpop.f32.mrb[0].mxu0
        %v841 = vadd.f32 0.0, %v840
        %v842 = vpop.f32.mrb[0].mxu0
        %v843 = vadd.f32 0.0, %v842
        %v844 = vpop.f32.mrb[0].mxu0
        %v845 = vadd.f32 0.0, %v844
        %846 = vmatprep.mubr.bf16.mxu0 0
        %847 = vmatmul.mubr.bf16.gmra.mrb[0].mxu0 %v662
        %v848 = vpop.f32.mrb[0].mxu0
        %v849 = vadd.f32 0.0, %v848
        %v850 = vpop.f32.mrb[0].mxu0
        %v851 = vadd.f32 0.0, %v850
        %v852 = vpop.f32.mrb[0].mxu0
        %v853 = vadd.f32 0.0, %v852
        %v854 = vpop.f32.mrb[0].mxu0
        %v855 = vadd.f32 0.0, %v854
        %856 = vdwg.mxu0
        %v857 = vpack.c.bf16 %v703, %v699
        %v858 = vpack.c.bf16 %v705, %v701
        %v859 = vpack.c.bf16 %v713, %v709
        %v860 = vpack.c.bf16 %v715, %v711
        %v861 = vpack.c.bf16 %v723, %v719
        %v862 = vpack.c.bf16 %v725, %v721
        %v863 = vpack.c.bf16 %v733, %v729
        %v864 = vpack.c.bf16 %v735, %v731
        %v865 = vpack.c.bf16 %v743, %v739
        %v866 = vpack.c.bf16 %v745, %v741
        %v867 = vpack.c.bf16 %v753, %v749
        %v868 = vpack.c.bf16 %v755, %v751
        %v869 = vpack.c.bf16 %v763, %v759
        %v870 = vpack.c.bf16 %v765, %v761
        %v871 = vpack.c.bf16 %v773, %v769
        %v872 = vpack.c.bf16 %v775, %v771
        %v873 = vpack.c.bf16 %v783, %v779
        %v874 = vpack.c.bf16 %v785, %v781
        %v875 = vpack.c.bf16 %v793, %v789
        %v876 = vpack.c.bf16 %v795, %v791
        %v877 = vpack.c.bf16 %v803, %v799
        %v878 = vpack.c.bf16 %v805, %v801
        %v879 = vpack.c.bf16 %v813, %v809
        %v880 = vpack.c.bf16 %v815, %v811
        %v881 = vpack.c.bf16 %v823, %v819
        %v882 = vpack.c.bf16 %v825, %v821
        %v883 = vpack.c.bf16 %v833, %v829
        %v884 = vpack.c.bf16 %v835, %v831
        %v885 = vpack.c.bf16 %v843, %v839
        %v886 = vpack.c.bf16 %v845, %v841
        %v887 = vpack.c.bf16 %v853, %v849
        %v888 = vpack.c.bf16 %v855, %v851
        %889 = vxpose.xlu0.b32.start [1/16] %v474, 128
        %890 = vxpose.xlu0.b32.cont [2/16] %v477, 128
        %891 = vxpose.xlu0.b32.cont [3/16] %v482, 128
        %892 = vxpose.xlu0.b32.cont [4/16] %v485, 128
        %893 = vxpose.xlu0.b32.cont [5/16] 0.0, 128
        %894 = vxpose.xlu0.b32.cont [6/16] 0.0, 128
        %895 = vxpose.xlu0.b32.cont [7/16] 0.0, 128
        %896 = vxpose.xlu0.b32.cont [8/16] 0.0, 128
        %897 = vxpose.xlu0.b32.cont [9/16] 0.0, 128
        %898 = vxpose.xlu0.b32.cont [10/16] 0.0, 128
        %899 = vxpose.xlu0.b32.cont [11/16] 0.0, 128
        %900 = vxpose.xlu0.b32.cont [12/16] 0.0, 128
        %901 = vxpose.xlu0.b32.cont [13/16] 0.0, 128
        %902 = vxpose.xlu0.b32.cont [14/16] 0.0, 128
        %903 = vxpose.xlu0.b32.cont [15/16] 0.0, 128
        %904 = vxpose.xlu0.b32.end [16/16] 0.0, 128
        %v905 = vpop.trf.xlu0
        %v906 = vpop.trf.xlu0
        %v907 = vpop.trf.xlu0
        %v908 = vpop.trf.xlu0
        %v909 = vpop.trf.xlu0
        %v910 = vpop.trf.xlu0
        %v911 = vpop.trf.xlu0
        %v912 = vpop.trf.xlu0
        %v913 = vpop.trf.xlu0
        %v914 = vpop.trf.xlu0
        %v915 = vpop.trf.xlu0
        %v916 = vpop.trf.xlu0
        %v917 = vpop.trf.xlu0
        %v918 = vpop.trf.xlu0
        %v919 = vpop.trf.xlu0
        %v920 = vpop.trf.xlu0
        %v921 = vpack.c.bf16 %v906, %v905
        %v922 = vpack.c.bf16 %v908, %v907
        %v923 = vpack.c.bf16 %v910, %v909
        %v924 = vpack.c.bf16 %v912, %v911
        %v925 = vpack.c.bf16 %v914, %v913
        %v926 = vpack.c.bf16 %v916, %v915
        %v927 = vpack.c.bf16 %v918, %v917
        %v928 = vpack.c.bf16 %v920, %v919
        %v930 = vsel %vm414, %v921, 0
        %v933 = vsel %vm414, %v922, 0
        %v936 = vsel %vm414, %v923, 0
        %v939 = vsel %vm414, %v924, 0
        %v942 = vsel %vm414, %v925, 0
        %v945 = vsel %vm414, %v926, 0
        %v948 = vsel %vm414, %v927, 0
        %v951 = vsel %vm414, %v928, 0
        %953 = vmatprep.subr.bf16.mxu0 %v858
        %954 = vmatpush1.bf16.msra.mxu0 %v857
        %955 = vmatprep.subr.bf16.mxu0 %v860
        %956 = vmatpush1.bf16.msra.mxu0 %v859
        %957 = vmatprep.subr.bf16.mxu0 0
        %958 = vmatpush1.bf16.msra.mxu0 0
        %959 = vmatprep.subr.bf16.mxu0 0
        %960 = vmatpush1.bf16.msra.mxu0 0
        %961 = vmatprep.subr.bf16.mxu0 0
        %962 = vmatpush1.bf16.msra.mxu0 0
        %963 = vmatprep.subr.bf16.mxu0 0
        %964 = vmatpush1.bf16.msra.mxu0 0
        %965 = vmatprep.subr.bf16.mxu0 0
        %966 = vmatpush1.bf16.msra.mxu0 0
        %967 = vmatprep.subr.bf16.mxu0 0
        %968 = vmatpush1.bf16.msra.mxu0 0
        %969 = vmatprep.subr.bf16.mxu0 0
        %970 = vmatpush1.bf16.msra.mxu0 0
        %971 = vmatprep.subr.bf16.mxu0 0
        %972 = vmatpush1.bf16.msra.mxu0 0
        %973 = vmatprep.subr.bf16.mxu0 0
        %974 = vmatpush1.bf16.msra.mxu0 0
        %975 = vmatprep.subr.bf16.mxu0 0
        %976 = vmatpush1.bf16.msra.mxu0 0
        %977 = vmatprep.subr.bf16.mxu0 0
        %978 = vmatpush1.bf16.msra.mxu0 0
        %979 = vmatprep.subr.bf16.mxu0 0
        %980 = vmatpush1.bf16.msra.mxu0 0
        %981 = vmatprep.subr.bf16.mxu0 0
        %982 = vmatpush1.bf16.msra.mxu0 0
        %983 = vmatprep.subr.bf16.mxu0 0
        %984 = vmatpush1.bf16.msra.mxu0 0
        %985 = vmatprep.mubr.bf16.mxu0 0
        %986 = vmatmul.mubr.bf16.gmra.mrb[0].mxu0 %v930
        %v987 = vpop.f32.mrb[0].mxu0
        %v988 = vadd.f32 0.0, %v987
        %v989 = vpop.f32.mrb[0].mxu0
        %v990 = vadd.f32 0.0, %v989
        %v991 = vpop.f32.mrb[0].mxu0
        %v992 = vadd.f32 0.0, %v991
        %v993 = vpop.f32.mrb[0].mxu0
        %v994 = vadd.f32 0.0, %v993
        %995 = vmatprep.mubr.bf16.mxu0 0
        %996 = vmatmul.mubr.bf16.gmra.mrb[0].mxu0 %v933
        %v997 = vpop.f32.mrb[0].mxu0
        %v998 = vadd.f32 0.0, %v997
        %v999 = vpop.f32.mrb[0].mxu0
        %v1000 = vadd.f32 0.0, %v999
        %v1001 = vpop.f32.mrb[0].mxu0
        %v1002 = vadd.f32 0.0, %v1001
        %v1003 = vpop.f32.mrb[0].mxu0
        %v1004 = vadd.f32 0.0, %v1003
        %1005 = vmatprep.mubr.bf16.mxu0 0
        %1006 = vmatmul.mubr.bf16.gmra.mrb[0].mxu0 %v936
        %v1007 = vpop.f32.mrb[0].mxu0
        %v1008 = vadd.f32 0.0, %v1007
        %v1009 = vpop.f32.mrb[0].mxu0
        %v1010 = vadd.f32 0.0, %v1009
        %v1011 = vpop.f32.mrb[0].mxu0
        %v1012 = vadd.f32 0.0, %v1011
        %v1013 = vpop.f32.mrb[0].mxu0
        %v1014 = vadd.f32 0.0, %v1013
        %1015 = vmatprep.mubr.bf16.mxu0 0
        %1016 = vmatmul.mubr.bf16.gmra.mrb[0].mxu0 %v939
        %v1017 = vpop.f32.mrb[0].mxu0
        %v1018 = vadd.f32 0.0, %v1017
        %v1019 = vpop.f32.mrb[0].mxu0
        %v1020 = vadd.f32 0.0, %v1019
        %v1021 = vpop.f32.mrb[0].mxu0
        %v1022 = vadd.f32 0.0, %v1021
        %v1023 = vpop.f32.mrb[0].mxu0
        %v1024 = vadd.f32 0.0, %v1023
        %1025 = vmatprep.mubr.bf16.mxu0 0
        %1026 = vmatmul.mubr.bf16.gmra.mrb[0].mxu0 %v942
        %v1027 = vpop.f32.mrb[0].mxu0
        %v1028 = vadd.f32 0.0, %v1027
        %v1029 = vpop.f32.mrb[0].mxu0
        %v1030 = vadd.f32 0.0, %v1029
        %v1031 = vpop.f32.mrb[0].mxu0
        %v1032 = vadd.f32 0.0, %v1031
        %v1033 = vpop.f32.mrb[0].mxu0
        %v1034 = vadd.f32 0.0, %v1033
        %1035 = vmatprep.mubr.bf16.mxu0 0
        %1036 = vmatmul.mubr.bf16.gmra.mrb[0].mxu0 %v945
        %v1037 = vpop.f32.mrb[0].mxu0
        %v1038 = vadd.f32 0.0, %v1037
        %v1039 = vpop.f32.mrb[0].mxu0
        %v1040 = vadd.f32 0.0, %v1039
        %v1041 = vpop.f32.mrb[0].mxu0
        %v1042 = vadd.f32 0.0, %v1041
        %v1043 = vpop.f32.mrb[0].mxu0
        %v1044 = vadd.f32 0.0, %v1043
        %1045 = vmatprep.mubr.bf16.mxu0 0
        %1046 = vmatmul.mubr.bf16.gmra.mrb[0].mxu0 %v948
        %v1047 = vpop.f32.mrb[0].mxu0
        %v1048 = vadd.f32 0.0, %v1047
        %v1049 = vpop.f32.mrb[0].mxu0
        %v1050 = vadd.f32 0.0, %v1049
        %v1051 = vpop.f32.mrb[0].mxu0
        %v1052 = vadd.f32 0.0, %v1051
        %v1053 = vpop.f32.mrb[0].mxu0
        %v1054 = vadd.f32 0.0, %v1053
        %1055 = vmatprep.mubr.bf16.mxu0 0
        %1056 = vmatmul.mubr.bf16.gmra.mrb[0].mxu0 %v951
        %v1057 = vpop.f32.mrb[0].mxu0
        %v1058 = vadd.f32 0.0, %v1057
        %v1059 = vpop.f32.mrb[0].mxu0
        %v1060 = vadd.f32 0.0, %v1059
        %v1061 = vpop.f32.mrb[0].mxu0
        %v1062 = vadd.f32 0.0, %v1061
        %v1063 = vpop.f32.mrb[0].mxu0
        %v1064 = vadd.f32 0.0, %v1063
        %1065 = vdwg.mxu0
        %v1066 = vmax.f32 %v988, %v990
        %1067 = vmax.xlane.f32.xlu0 %v1066
        %v1068 = vpop.xlane.xlu0 %1067
        %v1069 = vmax.f32 %v992, %v994
        %1070 = vmax.xlane.f32.xlu0 %v1069
        %v1071 = vpop.xlane.xlu0 %1070
        %v1072 = vmax.f32 %v998, %v1000
        %1073 = vmax.xlane.f32.xlu0 %v1072
        %v1074 = vpop.xlane.xlu0 %1073
        %v1075 = vmax.f32 %v1002, %v1004
        %1076 = vmax.xlane.f32.xlu0 %v1075
        %v1077 = vpop.xlane.xlu0 %1076
        %v1078 = vmax.f32 %v1008, %v1010
        %1079 = vmax.xlane.f32.xlu0 %v1078
        %v1080 = vpop.xlane.xlu0 %1079
        %v1081 = vmax.f32 %v1012, %v1014
        %1082 = vmax.xlane.f32.xlu0 %v1081
        %v1083 = vpop.xlane.xlu0 %1082
        %v1084 = vmax.f32 %v1018, %v1020
        %1085 = vmax.xlane.f32.xlu0 %v1084
        %v1086 = vpop.xlane.xlu0 %1085
        %v1087 = vmax.f32 %v1022, %v1024
        %1088 = vmax.xlane.f32.xlu0 %v1087
        %v1089 = vpop.xlane.xlu0 %1088
        %v1090 = vmax.f32 %v1028, %v1030
        %1091 = vmax.xlane.f32.xlu0 %v1090
        %v1092 = vpop.xlane.xlu0 %1091
        %v1093 = vmax.f32 %v1032, %v1034
        %1094 = vmax.xlane.f32.xlu0 %v1093
        %v1095 = vpop.xlane.xlu0 %1094
        %v1096 = vmax.f32 %v1038, %v1040
        %1097 = vmax.xlane.f32.xlu0 %v1096
        %v1098 = vpop.xlane.xlu0 %1097
        %v1099 = vmax.f32 %v1042, %v1044
        %1100 = vmax.xlane.f32.xlu0 %v1099
        %v1101 = vpop.xlane.xlu0 %1100
        %v1102 = vmax.f32 %v1048, %v1050
        %1103 = vmax.xlane.f32.xlu0 %v1102
        %v1104 = vpop.xlane.xlu0 %1103
        %v1105 = vmax.f32 %v1052, %v1054
        %1106 = vmax.xlane.f32.xlu0 %v1105
        %v1107 = vpop.xlane.xlu0 %1106
        %v1108 = vmax.f32 %v1058, %v1060
        %1109 = vmax.xlane.f32.xlu0 %v1108
        %v1110 = vpop.xlane.xlu0 %1109
        %v1111 = vmax.f32 %v1062, %v1064
        %1112 = vmax.xlane.f32.xlu0 %v1111
        %v1113 = vpop.xlane.xlu0 %1112
        %v1114 = vsub.f32 %v988, %v1068
        %v1115 = vsub.f32 %v990, %v1068
        %v1116 = vsub.f32 %v992, %v1071
        %v1117 = vsub.f32 %v994, %v1071
        %v1118 = vsub.f32 %v998, %v1074
        %v1119 = vsub.f32 %v1000, %v1074
        %v1120 = vsub.f32 %v1002, %v1077
        %v1121 = vsub.f32 %v1004, %v1077
        %v1122 = vsub.f32 %v1008, %v1080
        %v1123 = vsub.f32 %v1010, %v1080
        %v1124 = vsub.f32 %v1012, %v1083
        %v1125 = vsub.f32 %v1014, %v1083
        %v1126 = vsub.f32 %v1018, %v1086
        %v1127 = vsub.f32 %v1020, %v1086
        %v1128 = vsub.f32 %v1022, %v1089
        %v1129 = vsub.f32 %v1024, %v1089
        %v1130 = vsub.f32 %v1028, %v1092
        %v1131 = vsub.f32 %v1030, %v1092
        %v1132 = vsub.f32 %v1032, %v1095
        %v1133 = vsub.f32 %v1034, %v1095
        %v1134 = vsub.f32 %v1038, %v1098
        %v1135 = vsub.f32 %v1040, %v1098
        %v1136 = vsub.f32 %v1042, %v1101
        %v1137 = vsub.f32 %v1044, %v1101
        %v1138 = vsub.f32 %v1048, %v1104
        %v1139 = vsub.f32 %v1050, %v1104
        %v1140 = vsub.f32 %v1052, %v1107
        %v1141 = vsub.f32 %v1054, %v1107
        %v1142 = vsub.f32 %v1058, %v1110
        %v1143 = vsub.f32 %v1060, %v1110
        %v1144 = vsub.f32 %v1062, %v1113
        %v1145 = vsub.f32 %v1064, %v1113
        %v1146 = vmul.f32 %v1114, 1.442695
        %v1147 = vpow.pop %v1146
        %v1148 = vmul.f32 %v1115, 1.442695
        %v1149 = vpow.pop %v1148
        %v1150 = vmul.f32 %v1116, 1.442695
        %v1151 = vpow.pop %v1150
        %v1152 = vmul.f32 %v1117, 1.442695
        %v1153 = vpow.pop %v1152
        %v1154 = vmul.f32 %v1118, 1.442695
        %v1155 = vpow.pop %v1154
        %v1156 = vmul.f32 %v1119, 1.442695
        %v1157 = vpow.pop %v1156
        %v1158 = vmul.f32 %v1120, 1.442695
        %v1159 = vpow.pop %v1158
        %v1160 = vmul.f32 %v1121, 1.442695
        %v1161 = vpow.pop %v1160
        %v1162 = vmul.f32 %v1122, 1.442695
        %v1163 = vpow.pop %v1162
        %v1164 = vmul.f32 %v1123, 1.442695
        %v1165 = vpow.pop %v1164
        %v1166 = vmul.f32 %v1124, 1.442695
        %v1167 = vpow.pop %v1166
        %v1168 = vmul.f32 %v1125, 1.442695
        %v1169 = vpow.pop %v1168
        %v1170 = vmul.f32 %v1126, 1.442695
        %v1171 = vpow.pop %v1170
        %v1172 = vmul.f32 %v1127, 1.442695
        %v1173 = vpow.pop %v1172
        %v1174 = vmul.f32 %v1128, 1.442695
        %v1175 = vpow.pop %v1174
        %v1176 = vmul.f32 %v1129, 1.442695
        %v1177 = vpow.pop %v1176
        %v1178 = vmul.f32 %v1130, 1.442695
        %v1179 = vpow.pop %v1178
        %v1180 = vmul.f32 %v1131, 1.442695
        %v1181 = vpow.pop %v1180
        %v1182 = vmul.f32 %v1132, 1.442695
        %v1183 = vpow.pop %v1182
        %v1184 = vmul.f32 %v1133, 1.442695
        %v1185 = vpow.pop %v1184
        %v1186 = vmul.f32 %v1134, 1.442695
        %v1187 = vpow.pop %v1186
        %v1188 = vmul.f32 %v1135, 1.442695
        %v1189 = vpow.pop %v1188
        %v1190 = vmul.f32 %v1136, 1.442695
        %v1191 = vpow.pop %v1190
        %v1192 = vmul.f32 %v1137, 1.442695
        %v1193 = vpow.pop %v1192
        %v1194 = vmul.f32 %v1138, 1.442695
        %v1195 = vpow.pop %v1194
        %v1196 = vmul.f32 %v1139, 1.442695
        %v1197 = vpow.pop %v1196
        %v1198 = vmul.f32 %v1140, 1.442695
        %v1199 = vpow.pop %v1198
        %v1200 = vmul.f32 %v1141, 1.442695
        %v1201 = vpow.pop %v1200
        %v1202 = vmul.f32 %v1142, 1.442695
        %v1203 = vpow.pop %v1202
        %v1204 = vmul.f32 %v1143, 1.442695
        %v1205 = vpow.pop %v1204
        %v1206 = vmul.f32 %v1144, 1.442695
        %v1207 = vpow.pop %v1206
        %v1208 = vmul.f32 %v1145, 1.442695
        %v1209 = vpow.pop %v1208
        %v1210 = vadd.f32 %v1147, %v1149
        %1211 = vadd.xlane.f32.xlu0 %v1210
        %v1212 = vpop.xlane.xlu0 %1211
        %v1213 = vadd.f32 %v1151, %v1153
        %1214 = vadd.xlane.f32.xlu0 %v1213
        %v1215 = vpop.xlane.xlu0 %1214
        %v1216 = vadd.f32 %v1155, %v1157
        %1217 = vadd.xlane.f32.xlu0 %v1216
        %v1218 = vpop.xlane.xlu0 %1217
        %v1219 = vadd.f32 %v1159, %v1161
        %1220 = vadd.xlane.f32.xlu0 %v1219
        %v1221 = vpop.xlane.xlu0 %1220
        %v1222 = vadd.f32 %v1163, %v1165
        %1223 = vadd.xlane.f32.xlu0 %v1222
        %v1224 = vpop.xlane.xlu0 %1223
        %v1225 = vadd.f32 %v1167, %v1169
        %1226 = vadd.xlane.f32.xlu0 %v1225
        %v1227 = vpop.xlane.xlu0 %1226
        %v1228 = vadd.f32 %v1171, %v1173
        %1229 = vadd.xlane.f32.xlu0 %v1228
        %v1230 = vpop.xlane.xlu0 %1229
        %v1231 = vadd.f32 %v1175, %v1177
        %1232 = vadd.xlane.f32.xlu0 %v1231
        %v1233 = vpop.xlane.xlu0 %1232
        %v1234 = vadd.f32 %v1179, %v1181
        %1235 = vadd.xlane.f32.xlu0 %v1234
        %v1236 = vpop.xlane.xlu0 %1235
        %v1237 = vadd.f32 %v1183, %v1185
        %1238 = vadd.xlane.f32.xlu0 %v1237
        %v1239 = vpop.xlane.xlu0 %1238
        %v1240 = vadd.f32 %v1187, %v1189
        %1241 = vadd.xlane.f32.xlu0 %v1240
        %v1242 = vpop.xlane.xlu0 %1241
        %v1243 = vadd.f32 %v1191, %v1193
        %1244 = vadd.xlane.f32.xlu0 %v1243
        %v1245 = vpop.xlane.xlu0 %1244
        %v1246 = vadd.f32 %v1195, %v1197
        %1247 = vadd.xlane.f32.xlu0 %v1246
        %v1248 = vpop.xlane.xlu0 %1247
        %v1249 = vadd.f32 %v1199, %v1201
        %1250 = vadd.xlane.f32.xlu0 %v1249
        %v1251 = vpop.xlane.xlu0 %1250
        %v1252 = vadd.f32 %v1203, %v1205
        %1253 = vadd.xlane.f32.xlu0 %v1252
        %v1254 = vpop.xlane.xlu0 %1253
        %v1255 = vadd.f32 %v1207, %v1209
        %1256 = vadd.xlane.f32.xlu0 %v1255
        %v1257 = vpop.xlane.xlu0 %1256
        %v1258 = vpack.c.bf16 %v1151, %v1147
        %v1259 = vpack.c.bf16 %v1153, %v1149
        %v1260 = vpack.c.bf16 %v1159, %v1155
        %v1261 = vpack.c.bf16 %v1161, %v1157
        %v1262 = vpack.c.bf16 %v1167, %v1163
        %v1263 = vpack.c.bf16 %v1169, %v1165
        %v1264 = vpack.c.bf16 %v1175, %v1171
        %v1265 = vpack.c.bf16 %v1177, %v1173
        %v1266 = vpack.c.bf16 %v1183, %v1179
        %v1267 = vpack.c.bf16 %v1185, %v1181
        %v1268 = vpack.c.bf16 %v1191, %v1187
        %v1269 = vpack.c.bf16 %v1193, %v1189
        %v1270 = vpack.c.bf16 %v1199, %v1195
        %v1271 = vpack.c.bf16 %v1201, %v1197
        %v1272 = vpack.c.bf16 %v1207, %v1203
        %v1273 = vpack.c.bf16 %v1209, %v1205
        %1274 = vmatprep.subr.bf16.mxu0 %v874
        %1275 = vmatpush1.bf16.xpose.msra.mxu0 %v873
        %1276 = vmatprep.subr.bf16.mxu0 %v876
        %1277 = vmatpush1.bf16.xpose.msra.mxu0 %v875
        %1278 = vmatprep.subr.bf16.mxu0 0
        %1279 = vmatpush1.bf16.xpose.msra.mxu0 0
        %1280 = vmatprep.subr.bf16.mxu0 0
        %1281 = vmatpush1.bf16.xpose.msra.mxu0 0
        %1282 = vmatprep.subr.bf16.mxu0 0
        %1283 = vmatpush1.bf16.xpose.msra.mxu0 0
        %1284 = vmatprep.subr.bf16.mxu0 0
        %1285 = vmatpush1.bf16.xpose.msra.mxu0 0
        %1286 = vmatprep.subr.bf16.mxu0 0
        %1287 = vmatpush1.bf16.xpose.msra.mxu0 0
        %1288 = vmatprep.subr.bf16.mxu0 0
        %1289 = vmatpush1.bf16.xpose.msra.mxu0 0
        %1290 = vmatprep.subr.bf16.mxu0 0
        %1291 = vmatpush1.bf16.xpose.msra.mxu0 0
        %1292 = vmatprep.subr.bf16.mxu0 0
        %1293 = vmatpush1.bf16.xpose.msra.mxu0 0
        %1294 = vmatprep.subr.bf16.mxu0 0
        %1295 = vmatpush1.bf16.xpose.msra.mxu0 0
        %1296 = vmatprep.subr.bf16.mxu0 0
        %1297 = vmatpush1.bf16.xpose.msra.mxu0 0
        %1298 = vmatprep.subr.bf16.mxu0 0
        %1299 = vmatpush1.bf16.xpose.msra.mxu0 0
        %1300 = vmatprep.subr.bf16.mxu0 0
        %1301 = vmatpush1.bf16.xpose.msra.mxu0 0
        %1302 = vmatprep.subr.bf16.mxu0 0
        %1303 = vmatpush1.bf16.xpose.msra.mxu0 0
        %1304 = vmatprep.subr.bf16.mxu0 0
        %1305 = vmatpush1.bf16.xpose.msra.mxu0 0
        %1306 = vmatprep.mubr.bf16.mxu0 %v1259
        %1307 = vmatmul.mubr.bf16.gmra.mrb[0].mxu0 %v1258
        %v1308 = vpop.f32.mrb[0].mxu0
        %v1309 = vadd.f32 0.0, %v1308
        %v1310 = vpop.f32.mrb[0].mxu0
        %v1311 = vpop.f32.mrb[0].mxu0
        %v1312 = vadd.f32 0.0, %v1311
        %v1313 = vpop.f32.mrb[0].mxu0
        %1314 = vmatprep.mubr.bf16.mxu0 %v1261
        %1315 = vmatmul.mubr.bf16.gmra.mrb[0].mxu0 %v1260
        %v1316 = vpop.f32.mrb[0].mxu0
        %v1317 = vadd.f32 0.0, %v1316
        %v1318 = vpop.f32.mrb[0].mxu0
        %v1319 = vpop.f32.mrb[0].mxu0
        %v1320 = vadd.f32 0.0, %v1319
        %v1321 = vpop.f32.mrb[0].mxu0
        %1322 = vmatprep.mubr.bf16.mxu0 %v1263
        %1323 = vmatmul.mubr.bf16.gmra.mrb[0].mxu0 %v1262
        %v1324 = vpop.f32.mrb[0].mxu0
        %v1325 = vadd.f32 0.0, %v1324
        %v1326 = vpop.f32.mrb[0].mxu0
        %v1327 = vpop.f32.mrb[0].mxu0
        %v1328 = vadd.f32 0.0, %v1327
        %v1329 = vpop.f32.mrb[0].mxu0
        %1330 = vmatprep.mubr.bf16.mxu0 %v1265
        %1331 = vmatmul.mubr.bf16.gmra.mrb[0].mxu0 %v1264
        %v1332 = vpop.f32.mrb[0].mxu0
        %v1333 = vadd.f32 0.0, %v1332
        %v1334 = vpop.f32.mrb[0].mxu0
        %v1335 = vpop.f32.mrb[0].mxu0
        %v1336 = vadd.f32 0.0, %v1335
        %v1337 = vpop.f32.mrb[0].mxu0
        %1338 = vmatprep.mubr.bf16.mxu0 %v1267
        %1339 = vmatmul.mubr.bf16.gmra.mrb[0].mxu0 %v1266
        %v1340 = vpop.f32.mrb[0].mxu0
        %v1341 = vadd.f32 0.0, %v1340
        %v1342 = vpop.f32.mrb[0].mxu0
        %v1343 = vpop.f32.mrb[0].mxu0
        %v1344 = vadd.f32 0.0, %v1343
        %v1345 = vpop.f32.mrb[0].mxu0
        %1346 = vmatprep.mubr.bf16.mxu0 %v1269
        %1347 = vmatmul.mubr.bf16.gmra.mrb[0].mxu0 %v1268
        %v1348 = vpop.f32.mrb[0].mxu0
        %v1349 = vadd.f32 0.0, %v1348
        %v1350 = vpop.f32.mrb[0].mxu0
        %v1351 = vpop.f32.mrb[0].mxu0
        %v1352 = vadd.f32 0.0, %v1351
        %v1353 = vpop.f32.mrb[0].mxu0
        %1354 = vmatprep.mubr.bf16.mxu0 %v1271
        %1355 = vmatmul.mubr.bf16.gmra.mrb[0].mxu0 %v1270
        %v1356 = vpop.f32.mrb[0].mxu0
        %v1357 = vadd.f32 0.0, %v1356
        %v1358 = vpop.f32.mrb[0].mxu0
        %v1359 = vpop.f32.mrb[0].mxu0
        %v1360 = vadd.f32 0.0, %v1359
        %v1361 = vpop.f32.mrb[0].mxu0
        %1362 = vmatprep.mubr.bf16.mxu0 %v1273
        %1363 = vmatmul.mubr.bf16.gmra.mrb[0].mxu0 %v1272
        %v1364 = vpop.f32.mrb[0].mxu0
        %v1365 = vadd.f32 0.0, %v1364
        %v1366 = vpop.f32.mrb[0].mxu0
        %v1367 = vpop.f32.mrb[0].mxu0
        %v1368 = vadd.f32 0.0, %v1367
        %v1369 = vpop.f32.mrb[0].mxu0
        %1370 = vdwg.mxu0
        %v1371 = vrcp.pop %v1212
        %v1372 = vrcp.pop %v1215
        %v1373 = vrcp.pop %v1218
        %v1374 = vrcp.pop %v1221
        %v1375 = vrcp.pop %v1224
        %v1376 = vrcp.pop %v1227
        %v1377 = vrcp.pop %v1230
        %v1378 = vrcp.pop %v1233
        %v1379 = vrcp.pop %v1236
        %v1380 = vrcp.pop %v1239
        %v1381 = vrcp.pop %v1242
        %v1382 = vrcp.pop %v1245
        %v1383 = vrcp.pop %v1248
        %v1384 = vrcp.pop %v1251
        %v1385 = vrcp.pop %v1254
        %v1386 = vrcp.pop %v1257
        %v1387 = vmul.f32 %v1309, %v1371
        %v1388 = vmul.f32 %v1312, %v1372
        %v1389 = vmul.f32 %v1317, %v1373
        %v1390 = vmul.f32 %v1320, %v1374
        %v1391 = vmul.f32 %v1325, %v1375
        %v1392 = vmul.f32 %v1328, %v1376
        %v1393 = vmul.f32 %v1333, %v1377
        %v1394 = vmul.f32 %v1336, %v1378
        %v1395 = vmul.f32 %v1341, %v1379
        %v1396 = vmul.f32 %v1344, %v1380
        %v1397 = vmul.f32 %v1349, %v1381
        %v1398 = vmul.f32 %v1352, %v1382
        %v1399 = vmul.f32 %v1357, %v1383
        %v1400 = vmul.f32 %v1360, %v1384
        %v1401 = vmul.f32 %v1365, %v1385
        %v1402 = vmul.f32 %v1368, %v1386
        %v1403 = vpack.c.bf16 %v1388, %v1387
        %v1404 = vpack.c.bf16 %v1390, %v1389
        %v1405 = vpack.c.bf16 %v1392, %v1391
        %v1406 = vpack.c.bf16 %v1394, %v1393
        %v1407 = vpack.c.bf16 %v1396, %v1395
        %v1408 = vpack.c.bf16 %v1398, %v1397
        %v1409 = vpack.c.bf16 %v1400, %v1399
        %v1410 = vpack.c.bf16 %v1402, %v1401
        %v1411 = vld [vmem:[%s3] sm:$0xf]
        %v1412 = vld [vmem:[%s3 + $0x4] sm:$0xf]
        %v1413 = vld [vmem:[%s3 + $0x8] sm:$0xf]
        %v1414 = vld [vmem:[%s3 + $0xc] sm:$0xf]
        %1415 = vxpose.xlu0.b32.start [1/16] %v490, 128
        %1416 = vxpose.xlu0.b32.cont [2/16] %v493, 128
        %1417 = vxpose.xlu0.b32.cont [3/16] %v498, 128
        %1418 = vxpose.xlu0.b32.cont [4/16] %v501, 128
        %1419 = vxpose.xlu0.b32.cont [5/16] 0.0, 128
        %1420 = vxpose.xlu0.b32.cont [6/16] 0.0, 128
        %1421 = vxpose.xlu0.b32.cont [7/16] 0.0, 128
        %1422 = vxpose.xlu0.b32.cont [8/16] 0.0, 128
        %1423 = vxpose.xlu0.b32.cont [9/16] 0.0, 128
        %1424 = vxpose.xlu0.b32.cont [10/16] 0.0, 128
        %1425 = vxpose.xlu0.b32.cont [11/16] 0.0, 128
        %1426 = vxpose.xlu0.b32.cont [12/16] 0.0, 128
        %1427 = vxpose.xlu0.b32.cont [13/16] 0.0, 128
        %1428 = vxpose.xlu0.b32.cont [14/16] 0.0, 128
        %1429 = vxpose.xlu0.b32.cont [15/16] 0.0, 128
        %1430 = vxpose.xlu0.b32.end [16/16] 0.0, 128
        %v1431 = vpop.trf.xlu0
        %v1432 = vpop.trf.xlu0
        %v1433 = vpop.trf.xlu0
        %v1434 = vpop.trf.xlu0
        %v1435 = vpop.trf.xlu0
        %v1436 = vpop.trf.xlu0
        %v1437 = vpop.trf.xlu0
        %v1438 = vpop.trf.xlu0
        %v1439 = vpop.trf.xlu0
        %v1440 = vpop.trf.xlu0
        %v1441 = vpop.trf.xlu0
        %v1442 = vpop.trf.xlu0
        %v1443 = vpop.trf.xlu0
        %v1444 = vpop.trf.xlu0
        %v1445 = vpop.trf.xlu0
        %v1446 = vpop.trf.xlu0
        %v1447 = vpack.c.bf16 %v1432, %v1431
        %v1448 = vpack.c.bf16 %v1434, %v1433
        %v1449 = vpack.c.bf16 %v1436, %v1435
        %v1450 = vpack.c.bf16 %v1438, %v1437
        %v1451 = vpack.c.bf16 %v1440, %v1439
        %v1452 = vpack.c.bf16 %v1442, %v1441
        %v1453 = vpack.c.bf16 %v1444, %v1443
        %v1454 = vpack.c.bf16 %v1446, %v1445
        %v1456 = vsel %vm414, %v1447, 0
        %v1459 = vsel %vm414, %v1448, 0
        %v1462 = vsel %vm414, %v1449, 0
        %v1465 = vsel %vm414, %v1450, 0
        %v1468 = vsel %vm414, %v1451, 0
        %v1471 = vsel %vm414, %v1452, 0
        %v1474 = vsel %vm414, %v1453, 0
        %v1477 = vsel %vm414, %v1454, 0
        %1479 = vmatprep.subr.bf16.mxu0 %v862
        %1480 = vmatpush1.bf16.msra.mxu0 %v861
        %1481 = vmatprep.subr.bf16.mxu0 %v864
        %1482 = vmatpush1.bf16.msra.mxu0 %v863
        %1483 = vmatprep.subr.bf16.mxu0 0
        %1484 = vmatpush1.bf16.msra.mxu0 0
        %1485 = vmatprep.subr.bf16.mxu0 0
        %1486 = vmatpush1.bf16.msra.mxu0 0
        %1487 = vmatprep.subr.bf16.mxu0 0
        %1488 = vmatpush1.bf16.msra.mxu0 0
        %1489 = vmatprep.subr.bf16.mxu0 0
        %1490 = vmatpush1.bf16.msra.mxu0 0
        %1491 = vmatprep.subr.bf16.mxu0 0
        %1492 = vmatpush1.bf16.msra.mxu0 0
        %1493 = vmatprep.subr.bf16.mxu0 0
        %1494 = vmatpush1.bf16.msra.mxu0 0
        %1495 = vmatprep.subr.bf16.mxu0 0
        %1496 = vmatpush1.bf16.msra.mxu0 0
        %1497 = vmatprep.subr.bf16.mxu0 0
        %1498 = vmatpush1.bf16.msra.mxu0 0
        %1499 = vmatprep.subr.bf16.mxu0 0
        %1500 = vmatpush1.bf16.msra.mxu0 0
        %1501 = vmatprep.subr.bf16.mxu0 0
        %1502 = vmatpush1.bf16.msra.mxu0 0
        %1503 = vmatprep.subr.bf16.mxu0 0
        %1504 = vmatpush1.bf16.msra.mxu0 0
        %1505 = vmatprep.subr.bf16.mxu0 0
        %1506 = vmatpush1.bf16.msra.mxu0 0
        %1507 = vmatprep.subr.bf16.mxu0 0
        %1508 = vmatpush1.bf16.msra.mxu0 0
        %1509 = vmatprep.subr.bf16.mxu0 0
        %1510 = vmatpush1.bf16.msra.mxu0 0
        %1511 = vmatprep.mubr.bf16.mxu0 0
        %1512 = vmatmul.mubr.bf16.gmra.mrb[0].mxu0 %v1456
        %v1513 = vpop.f32.mrb[0].mxu0
        %v1514 = vadd.f32 0.0, %v1513
        %v1515 = vpop.f32.mrb[0].mxu0
        %v1516 = vadd.f32 0.0, %v1515
        %v1517 = vpop.f32.mrb[0].mxu0
        %v1518 = vadd.f32 0.0, %v1517
        %v1519 = vpop.f32.mrb[0].mxu0
        %v1520 = vadd.f32 0.0, %v1519
        %1521 = vmatprep.mubr.bf16.mxu0 0
        %1522 = vmatmul.mubr.bf16.gmra.mrb[0].mxu0 %v1459
        %v1523 = vpop.f32.mrb[0].mxu0
        %v1524 = vadd.f32 0.0, %v1523
        %v1525 = vpop.f32.mrb[0].mxu0
        %v1526 = vadd.f32 0.0, %v1525
        %v1527 = vpop.f32.mrb[0].mxu0
        %v1528 = vadd.f32 0.0, %v1527
        %v1529 = vpop.f32.mrb[0].mxu0
        %v1530 = vadd.f32 0.0, %v1529
        %1531 = vmatprep.mubr.bf16.mxu0 0
        %1532 = vmatmul.mubr.bf16.gmra.mrb[0].mxu0 %v1462
        %v1533 = vpop.f32.mrb[0].mxu0
        %v1534 = vadd.f32 0.0, %v1533
        %v1535 = vpop.f32.mrb[0].mxu0
        %v1536 = vadd.f32 0.0, %v1535
        %v1537 = vpop.f32.mrb[0].mxu0
        %v1538 = vadd.f32 0.0, %v1537
        %v1539 = vpop.f32.mrb[0].mxu0
        %v1540 = vadd.f32 0.0, %v1539
        %1541 = vmatprep.mubr.bf16.mxu0 0
        %1542 = vmatmul.mubr.bf16.gmra.mrb[0].mxu0 %v1465
        %v1543 = vpop.f32.mrb[0].mxu0
        %v1544 = vadd.f32 0.0, %v1543
        %v1545 = vpop.f32.mrb[0].mxu0
        %v1546 = vadd.f32 0.0, %v1545
        %v1547 = vpop.f32.mrb[0].mxu0
        %v1548 = vadd.f32 0.0, %v1547
        %v1549 = vpop.f32.mrb[0].mxu0
        %v1550 = vadd.f32 0.0, %v1549
        %1551 = vmatprep.mubr.bf16.mxu0 0
        %1552 = vmatmul.mubr.bf16.gmra.mrb[0].mxu0 %v1468
        %v1553 = vpop.f32.mrb[0].mxu0
        %v1554 = vadd.f32 0.0, %v1553
        %v1555 = vpop.f32.mrb[0].mxu0
        %v1556 = vadd.f32 0.0, %v1555
        %v1557 = vpop.f32.mrb[0].mxu0
        %v1558 = vadd.f32 0.0, %v1557
        %v1559 = vpop.f32.mrb[0].mxu0
        %v1560 = vadd.f32 0.0, %v1559
        %1561 = vmatprep.mubr.bf16.mxu0 0
        %1562 = vmatmul.mubr.bf16.gmra.mrb[0].mxu0 %v1471
        %v1563 = vpop.f32.mrb[0].mxu0
        %v1564 = vadd.f32 0.0, %v1563
        %v1565 = vpop.f32.mrb[0].mxu0
        %v1566 = vadd.f32 0.0, %v1565
        %v1567 = vpop.f32.mrb[0].mxu0
        %v1568 = vadd.f32 0.0, %v1567
        %v1569 = vpop.f32.mrb[0].mxu0
        %v1570 = vadd.f32 0.0, %v1569
        %1571 = vmatprep.mubr.bf16.mxu0 0
        %1572 = vmatmul.mubr.bf16.gmra.mrb[0].mxu0 %v1474
        %v1573 = vpop.f32.mrb[0].mxu0
        %v1574 = vadd.f32 0.0, %v1573
        %v1575 = vpop.f32.mrb[0].mxu0
        %v1576 = vadd.f32 0.0, %v1575
        %v1577 = vpop.f32.mrb[0].mxu0
        %v1578 = vadd.f32 0.0, %v1577
        %v1579 = vpop.f32.mrb[0].mxu0
        %v1580 = vadd.f32 0.0, %v1579
        %1581 = vmatprep.mubr.bf16.mxu0 0
        %1582 = vmatmul.mubr.bf16.gmra.mrb[0].mxu0 %v1477
        %v1583 = vpop.f32.mrb[0].mxu0
        %v1584 = vadd.f32 0.0, %v1583
        %v1585 = vpop.f32.mrb[0].mxu0
        %v1586 = vadd.f32 0.0, %v1585
        %v1587 = vpop.f32.mrb[0].mxu0
        %v1588 = vadd.f32 0.0, %v1587
        %v1589 = vpop.f32.mrb[0].mxu0
        %v1590 = vadd.f32 0.0, %v1589
        %1591 = vdwg.mxu0
        %v1592 = vmax.f32 %v1514, %v1516
        %1593 = vmax.xlane.f32.xlu0 %v1592
        %v1594 = vpop.xlane.xlu0 %1593
        %v1595 = vmax.f32 %v1518, %v1520
        %1596 = vmax.xlane.f32.xlu0 %v1595
        %v1597 = vpop.xlane.xlu0 %1596
        %v1598 = vmax.f32 %v1524, %v1526
        %1599 = vmax.xlane.f32.xlu0 %v1598
        %v1600 = vpop.xlane.xlu0 %1599
        %v1601 = vmax.f32 %v1528, %v1530
        %1602 = vmax.xlane.f32.xlu0 %v1601
        %v1603 = vpop.xlane.xlu0 %1602
        %v1604 = vmax.f32 %v1534, %v1536
        %1605 = vmax.xlane.f32.xlu0 %v1604
        %v1606 = vpop.xlane.xlu0 %1605
        %v1607 = vmax.f32 %v1538, %v1540
        %1608 = vmax.xlane.f32.xlu0 %v1607
        %v1609 = vpop.xlane.xlu0 %1608
        %v1610 = vmax.f32 %v1544, %v1546
        %1611 = vmax.xlane.f32.xlu0 %v1610
        %v1612 = vpop.xlane.xlu0 %1611
        %v1613 = vmax.f32 %v1548, %v1550
        %1614 = vmax.xlane.f32.xlu0 %v1613
        %v1615 = vpop.xlane.xlu0 %1614
        %v1616 = vmax.f32 %v1554, %v1556
        %1617 = vmax.xlane.f32.xlu0 %v1616
        %v1618 = vpop.xlane.xlu0 %1617
        %v1619 = vmax.f32 %v1558, %v1560
        %1620 = vmax.xlane.f32.xlu0 %v1619
        %v1621 = vpop.xlane.xlu0 %1620
        %v1622 = vmax.f32 %v1564, %v1566
        %1623 = vmax.xlane.f32.xlu0 %v1622
        %v1624 = vpop.xlane.xlu0 %1623
        %v1625 = vmax.f32 %v1568, %v1570
        %1626 = vmax.xlane.f32.xlu0 %v1625
        %v1627 = vpop.xlane.xlu0 %1626
        %v1628 = vmax.f32 %v1574, %v1576
        %1629 = vmax.xlane.f32.xlu0 %v1628
        %v1630 = vpop.xlane.xlu0 %1629
        %v1631 = vmax.f32 %v1578, %v1580
        %1632 = vmax.xlane.f32.xlu0 %v1631
        %v1633 = vpop.xlane.xlu0 %1632
        %v1634 = vmax.f32 %v1584, %v1586
        %1635 = vmax.xlane.f32.xlu0 %v1634
        %v1636 = vpop.xlane.xlu0 %1635
        %v1637 = vmax.f32 %v1588, %v1590
        %1638 = vmax.xlane.f32.xlu0 %v1637
        %v1639 = vpop.xlane.xlu0 %1638
        %v1640 = vsub.f32 %v1514, %v1594
        %v1641 = vsub.f32 %v1516, %v1594
        %v1642 = vsub.f32 %v1518, %v1597
        %v1643 = vsub.f32 %v1520, %v1597
        %v1644 = vsub.f32 %v1524, %v1600
        %v1645 = vsub.f32 %v1526, %v1600
        %v1646 = vsub.f32 %v1528, %v1603
        %v1647 = vsub.f32 %v1530, %v1603
        %v1648 = vsub.f32 %v1534, %v1606
        %v1649 = vsub.f32 %v1536, %v1606
        %v1650 = vsub.f32 %v1538, %v1609
        %v1651 = vsub.f32 %v1540, %v1609
        %v1652 = vsub.f32 %v1544, %v1612
        %v1653 = vsub.f32 %v1546, %v1612
        %v1654 = vsub.f32 %v1548, %v1615
        %v1655 = vsub.f32 %v1550, %v1615
        %v1656 = vsub.f32 %v1554, %v1618
        %v1657 = vsub.f32 %v1556, %v1618
        %v1658 = vsub.f32 %v1558, %v1621
        %v1659 = vsub.f32 %v1560, %v1621
        %v1660 = vsub.f32 %v1564, %v1624
        %v1661 = vsub.f32 %v1566, %v1624
        %v1662 = vsub.f32 %v1568, %v1627
        %v1663 = vsub.f32 %v1570, %v1627
        %v1664 = vsub.f32 %v1574, %v1630
        %v1665 = vsub.f32 %v1576, %v1630
        %v1666 = vsub.f32 %v1578, %v1633
        %v1667 = vsub.f32 %v1580, %v1633
        %v1668 = vsub.f32 %v1584, %v1636
        %v1669 = vsub.f32 %v1586, %v1636
        %v1670 = vsub.f32 %v1588, %v1639
        %v1671 = vsub.f32 %v1590, %v1639
        %v1672 = vmul.f32 %v1640, 1.442695
        %v1673 = vpow.pop %v1672
        %v1674 = vmul.f32 %v1641, 1.442695
        %v1675 = vpow.pop %v1674
        %v1676 = vmul.f32 %v1642, 1.442695
        %v1677 = vpow.pop %v1676
        %v1678 = vmul.f32 %v1643, 1.442695
        %v1679 = vpow.pop %v1678
        %v1680 = vmul.f32 %v1644, 1.442695
        %v1681 = vpow.pop %v1680
        %v1682 = vmul.f32 %v1645, 1.442695
        %v1683 = vpow.pop %v1682
        %v1684 = vmul.f32 %v1646, 1.442695
        %v1685 = vpow.pop %v1684
        %v1686 = vmul.f32 %v1647, 1.442695
        %v1687 = vpow.pop %v1686
        %v1688 = vmul.f32 %v1648, 1.442695
        %v1689 = vpow.pop %v1688
        %v1690 = vmul.f32 %v1649, 1.442695
        %v1691 = vpow.pop %v1690
        %v1692 = vmul.f32 %v1650, 1.442695
        %v1693 = vpow.pop %v1692
        %v1694 = vmul.f32 %v1651, 1.442695
        %v1695 = vpow.pop %v1694
        %v1696 = vmul.f32 %v1652, 1.442695
        %v1697 = vpow.pop %v1696
        %v1698 = vmul.f32 %v1653, 1.442695
        %v1699 = vpow.pop %v1698
        %v1700 = vmul.f32 %v1654, 1.442695
        %v1701 = vpow.pop %v1700
        %v1702 = vmul.f32 %v1655, 1.442695
        %v1703 = vpow.pop %v1702
        %v1704 = vmul.f32 %v1656, 1.442695
        %v1705 = vpow.pop %v1704
        %v1706 = vmul.f32 %v1657, 1.442695
        %v1707 = vpow.pop %v1706
        %v1708 = vmul.f32 %v1658, 1.442695
        %v1709 = vpow.pop %v1708
        %v1710 = vmul.f32 %v1659, 1.442695
        %v1711 = vpow.pop %v1710
        %v1712 = vmul.f32 %v1660, 1.442695
        %v1713 = vpow.pop %v1712
        %v1714 = vmul.f32 %v1661, 1.442695
        %v1715 = vpow.pop %v1714
        %v1716 = vmul.f32 %v1662, 1.442695
        %v1717 = vpow.pop %v1716
        %v1718 = vmul.f32 %v1663, 1.442695
        %v1719 = vpow.pop %v1718
        %v1720 = vmul.f32 %v1664, 1.442695
        %v1721 = vpow.pop %v1720
        %v1722 = vmul.f32 %v1665, 1.442695
        %v1723 = vpow.pop %v1722
        %v1724 = vmul.f32 %v1666, 1.442695
        %v1725 = vpow.pop %v1724
        %v1726 = vmul.f32 %v1667, 1.442695
        %v1727 = vpow.pop %v1726
        %v1728 = vmul.f32 %v1668, 1.442695
        %v1729 = vpow.pop %v1728
        %v1730 = vmul.f32 %v1669, 1.442695
        %v1731 = vpow.pop %v1730
        %v1732 = vmul.f32 %v1670, 1.442695
        %v1733 = vpow.pop %v1732
        %v1734 = vmul.f32 %v1671, 1.442695
        %v1735 = vpow.pop %v1734
        %v1736 = vadd.f32 %v1673, %v1675
        %1737 = vadd.xlane.f32.xlu0 %v1736
        %v1738 = vpop.xlane.xlu0 %1737
        %v1739 = vadd.f32 %v1677, %v1679
        %1740 = vadd.xlane.f32.xlu0 %v1739
        %v1741 = vpop.xlane.xlu0 %1740
        %v1742 = vadd.f32 %v1681, %v1683
        %1743 = vadd.xlane.f32.xlu0 %v1742
        %v1744 = vpop.xlane.xlu0 %1743
        %v1745 = vadd.f32 %v1685, %v1687
        %1746 = vadd.xlane.f32.xlu0 %v1745
        %v1747 = vpop.xlane.xlu0 %1746
        %v1748 = vadd.f32 %v1689, %v1691
        %1749 = vadd.xlane.f32.xlu0 %v1748
        %v1750 = vpop.xlane.xlu0 %1749
        %v1751 = vadd.f32 %v1693, %v1695
        %1752 = vadd.xlane.f32.xlu0 %v1751
        %v1753 = vpop.xlane.xlu0 %1752
        %v1754 = vadd.f32 %v1697, %v1699
        %1755 = vadd.xlane.f32.xlu0 %v1754
        %v1756 = vpop.xlane.xlu0 %1755
        %v1757 = vadd.f32 %v1701, %v1703
        %1758 = vadd.xlane.f32.xlu0 %v1757
        %v1759 = vpop.xlane.xlu0 %1758
        %v1760 = vadd.f32 %v1705, %v1707
        %1761 = vadd.xlane.f32.xlu0 %v1760
        %v1762 = vpop.xlane.xlu0 %1761
        %v1763 = vadd.f32 %v1709, %v1711
        %1764 = vadd.xlane.f32.xlu0 %v1763
        %v1765 = vpop.xlane.xlu0 %1764
        %v1766 = vadd.f32 %v1713, %v1715
        %1767 = vadd.xlane.f32.xlu0 %v1766
        %v1768 = vpop.xlane.xlu0 %1767
        %v1769 = vadd.f32 %v1717, %v1719
        %1770 = vadd.xlane.f32.xlu0 %v1769
        %v1771 = vpop.xlane.xlu0 %1770
        %v1772 = vadd.f32 %v1721, %v1723
        %1773 = vadd.xlane.f32.xlu0 %v1772
        %v1774 = vpop.xlane.xlu0 %1773
        %v1775 = vadd.f32 %v1725, %v1727
        %1776 = vadd.xlane.f32.xlu0 %v1775
        %v1777 = vpop.xlane.xlu0 %1776
        %v1778 = vadd.f32 %v1729, %v1731
        %1779 = vadd.xlane.f32.xlu0 %v1778
        %v1780 = vpop.xlane.xlu0 %1779
        %v1781 = vadd.f32 %v1733, %v1735
        %1782 = vadd.xlane.f32.xlu0 %v1781
        %v1783 = vpop.xlane.xlu0 %1782
        %v1784 = vpack.c.bf16 %v1677, %v1673
        %v1785 = vpack.c.bf16 %v1679, %v1675
        %v1786 = vpack.c.bf16 %v1685, %v1681
        %v1787 = vpack.c.bf16 %v1687, %v1683
        %v1788 = vpack.c.bf16 %v1693, %v1689
        %v1789 = vpack.c.bf16 %v1695, %v1691
        %v1790 = vpack.c.bf16 %v1701, %v1697
        %v1791 = vpack.c.bf16 %v1703, %v1699
        %v1792 = vpack.c.bf16 %v1709, %v1705
        %v1793 = vpack.c.bf16 %v1711, %v1707
        %v1794 = vpack.c.bf16 %v1717, %v1713
        %v1795 = vpack.c.bf16 %v1719, %v1715
        %v1796 = vpack.c.bf16 %v1725, %v1721
        %v1797 = vpack.c.bf16 %v1727, %v1723
        %v1798 = vpack.c.bf16 %v1733, %v1729
        %v1799 = vpack.c.bf16 %v1735, %v1731
        %1800 = vmatprep.subr.bf16.mxu0 %v878
        %1801 = vmatpush1.bf16.xpose.msra.mxu0 %v877
        %1802 = vmatprep.subr.bf16.mxu0 %v880
        %1803 = vmatpush1.bf16.xpose.msra.mxu0 %v879
        %1804 = vmatprep.subr.bf16.mxu0 0
        %1805 = vmatpush1.bf16.xpose.msra.mxu0 0
        %1806 = vmatprep.subr.bf16.mxu0 0
        %1807 = vmatpush1.bf16.xpose.msra.mxu0 0
        %1808 = vmatprep.subr.bf16.mxu0 0
        %1809 = vmatpush1.bf16.xpose.msra.mxu0 0
        %1810 = vmatprep.subr.bf16.mxu0 0
        %1811 = vmatpush1.bf16.xpose.msra.mxu0 0
        %1812 = vmatprep.subr.bf16.mxu0 0
        %1813 = vmatpush1.bf16.xpose.msra.mxu0 0
        %1814 = vmatprep.subr.bf16.mxu0 0
        %1815 = vmatpush1.bf16.xpose.msra.mxu0 0
        %1816 = vmatprep.subr.bf16.mxu0 0
        %1817 = vmatpush1.bf16.xpose.msra.mxu0 0
        %1818 = vmatprep.subr.bf16.mxu0 0
        %1819 = vmatpush1.bf16.xpose.msra.mxu0 0
        %1820 = vmatprep.subr.bf16.mxu0 0
        %1821 = vmatpush1.bf16.xpose.msra.mxu0 0
        %1822 = vmatprep.subr.bf16.mxu0 0
        %1823 = vmatpush1.bf16.xpose.msra.mxu0 0
        %1824 = vmatprep.subr.bf16.mxu0 0
        %1825 = vmatpush1.bf16.xpose.msra.mxu0 0
        %1826 = vmatprep.subr.bf16.mxu0 0
        %1827 = vmatpush1.bf16.xpose.msra.mxu0 0
        %1828 = vmatprep.subr.bf16.mxu0 0
        %1829 = vmatpush1.bf16.xpose.msra.mxu0 0
        %1830 = vmatprep.subr.bf16.mxu0 0
        %1831 = vmatpush1.bf16.xpose.msra.mxu0 0
        %1832 = vmatprep.mubr.bf16.mxu0 %v1785
        %1833 = vmatmul.mubr.bf16.gmra.mrb[0].mxu0 %v1784
        %v1834 = vpop.f32.mrb[0].mxu0
        %v1835 = vadd.f32 0.0, %v1834
        %v1836 = vpop.f32.mrb[0].mxu0
        %v1837 = vpop.f32.mrb[0].mxu0
        %v1838 = vadd.f32 0.0, %v1837
        %v1839 = vpop.f32.mrb[0].mxu0
        %1840 = vmatprep.mubr.bf16.mxu0 %v1787
        %1841 = vmatmul.mubr.bf16.gmra.mrb[0].mxu0 %v1786
        %v1842 = vpop.f32.mrb[0].mxu0
        %v1843 = vadd.f32 0.0, %v1842
        %v1844 = vpop.f32.mrb[0].mxu0
        %v1845 = vpop.f32.mrb[0].mxu0
        %v1846 = vadd.f32 0.0, %v1845
        %v1847 = vpop.f32.mrb[0].mxu0
        %1848 = vmatprep.mubr.bf16.mxu0 %v1789
        %1849 = vmatmul.mubr.bf16.gmra.mrb[0].mxu0 %v1788
        %v1850 = vpop.f32.mrb[0].mxu0
        %v1851 = vadd.f32 0.0, %v1850
        %v1852 = vpop.f32.mrb[0].mxu0
        %v1853 = vpop.f32.mrb[0].mxu0
        %v1854 = vadd.f32 0.0, %v1853
        %v1855 = vpop.f32.mrb[0].mxu0
        %1856 = vmatprep.mubr.bf16.mxu0 %v1791
        %1857 = vmatmul.mubr.bf16.gmra.mrb[0].mxu0 %v1790
        %v1858 = vpop.f32.mrb[0].mxu0
        %v1859 = vadd.f32 0.0, %v1858
        %v1860 = vpop.f32.mrb[0].mxu0
        %v1861 = vpop.f32.mrb[0].mxu0
        %v1862 = vadd.f32 0.0, %v1861
        %v1863 = vpop.f32.mrb[0].mxu0
        %1864 = vmatprep.mubr.bf16.mxu0 %v1793
        %1865 = vmatmul.mubr.bf16.gmra.mrb[0].mxu0 %v1792
        %v1866 = vpop.f32.mrb[0].mxu0
        %v1867 = vadd.f32 0.0, %v1866
        %v1868 = vpop.f32.mrb[0].mxu0
        %v1869 = vpop.f32.mrb[0].mxu0
        %v1870 = vadd.f32 0.0, %v1869
        %v1871 = vpop.f32.mrb[0].mxu0
        %1872 = vmatprep.mubr.bf16.mxu0 %v1795
        %1873 = vmatmul.mubr.bf16.gmra.mrb[0].mxu0 %v1794
        %v1874 = vpop.f32.mrb[0].mxu0
        %v1875 = vadd.f32 0.0, %v1874
        %v1876 = vpop.f32.mrb[0].mxu0
        %v1877 = vpop.f32.mrb[0].mxu0
        %v1878 = vadd.f32 0.0, %v1877
        %v1879 = vpop.f32.mrb[0].mxu0
        %1880 = vmatprep.mubr.bf16.mxu0 %v1797
        %1881 = vmatmul.mubr.bf16.gmra.mrb[0].mxu0 %v1796
        %v1882 = vpop.f32.mrb[0].mxu0
        %v1883 = vadd.f32 0.0, %v1882
        %v1884 = vpop.f32.mrb[0].mxu0
        %v1885 = vpop.f32.mrb[0].mxu0
        %v1886 = vadd.f32 0.0, %v1885
        %v1887 = vpop.f32.mrb[0].mxu0
        %1888 = vmatprep.mubr.bf16.mxu0 %v1799
        %1889 = vmatmul.mubr.bf16.gmra.mrb[0].mxu0 %v1798
        %v1890 = vpop.f32.mrb[0].mxu0
        %v1891 = vadd.f32 0.0, %v1890
        %v1892 = vpop.f32.mrb[0].mxu0
        %v1893 = vpop.f32.mrb[0].mxu0
        %v1894 = vadd.f32 0.0, %v1893
        %v1895 = vpop.f32.mrb[0].mxu0
        %1896 = vdwg.mxu0
        %v1897 = vrcp.pop %v1738
        %v1898 = vrcp.pop %v1741
        %v1899 = vrcp.pop %v1744
        %v1900 = vrcp.pop %v1747
        %v1901 = vrcp.pop %v1750
        %v1902 = vrcp.pop %v1753
        %v1903 = vrcp.pop %v1756
        %v1904 = vrcp.pop %v1759
        %v1905 = vrcp.pop %v1762
        %v1906 = vrcp.pop %v1765
        %v1907 = vrcp.pop %v1768
        %v1908 = vrcp.pop %v1771
        %v1909 = vrcp.pop %v1774
        %v1910 = vrcp.pop %v1777
        %v1911 = vrcp.pop %v1780
        %v1912 = vrcp.pop %v1783
        %v1913 = vmul.f32 %v1835, %v1897
        %v1914 = vmul.f32 %v1838, %v1898
        %v1915 = vmul.f32 %v1843, %v1899
        %v1916 = vmul.f32 %v1846, %v1900
        %v1917 = vmul.f32 %v1851, %v1901
        %v1918 = vmul.f32 %v1854, %v1902
        %v1919 = vmul.f32 %v1859, %v1903
        %v1920 = vmul.f32 %v1862, %v1904
        %v1921 = vmul.f32 %v1867, %v1905
        %v1922 = vmul.f32 %v1870, %v1906
        %v1923 = vmul.f32 %v1875, %v1907
        %v1924 = vmul.f32 %v1878, %v1908
        %v1925 = vmul.f32 %v1883, %v1909
        %v1926 = vmul.f32 %v1886, %v1910
        %v1927 = vmul.f32 %v1891, %v1911
        %v1928 = vmul.f32 %v1894, %v1912
        %v1929 = vpack.c.bf16 %v1914, %v1913
        %v1930 = vpack.c.bf16 %v1916, %v1915
        %v1931 = vpack.c.bf16 %v1918, %v1917
        %v1932 = vpack.c.bf16 %v1920, %v1919
        %v1933 = vpack.c.bf16 %v1922, %v1921
        %v1934 = vpack.c.bf16 %v1924, %v1923
        %v1935 = vpack.c.bf16 %v1926, %v1925
        %v1936 = vpack.c.bf16 %v1928, %v1927
        %v1937 = vld [vmem:[%s3 + $0x10] sm:$0xf]
        %v1938 = vld [vmem:[%s3 + $0x14] sm:$0xf]
        %v1939 = vld [vmem:[%s3 + $0x18] sm:$0xf]
        %v1940 = vld [vmem:[%s3 + $0x1c] sm:$0xf]
        %v1945 = vunpack.c.l.b16 %v1937
        %v1946 = vunpack.c.l.b16 %v1938
        %v1947 = vunpack.c.l.b16 %v1939
        %v1948 = vunpack.c.l.b16 %v1940
        %v1949 = vpack.c.b16 %v1946, %v1945
        %v1950 = vpack.c.b16 %v1948, %v1947
        %v1954 = vsel %vm414, %v1929, 0
        %v1957 = vsel %vm414, %v1930, 0
        %v1960 = vsel %vm414, %v1931, 0
        %v1963 = vsel %vm414, %v1932, 0
        %v1966 = vsel %vm414, %v1933, 0
        %v1969 = vsel %vm414, %v1934, 0
        %v1972 = vsel %vm414, %v1935, 0
        %v1975 = vsel %vm414, %v1936, 0
        %1977 = vmatprep.subr.bf16.mxu0 0
        %1978 = vmatpush1.bf16.msra.mxu0 %v1949
        %1979 = vmatprep.subr.bf16.mxu0 0
        %1980 = vmatpush1.bf16.msra.mxu0 %v1950
        %1981 = vmatprep.subr.bf16.mxu0 0
        %1982 = vmatpush1.bf16.msra.mxu0 0
        %1983 = vmatprep.subr.bf16.mxu0 0
        %1984 = vmatpush1.bf16.msra.mxu0 0
        %1985 = vmatprep.subr.bf16.mxu0 0
        %1986 = vmatpush1.bf16.msra.mxu0 0
        %1987 = vmatprep.subr.bf16.mxu0 0
        %1988 = vmatpush1.bf16.msra.mxu0 0
        %1989 = vmatprep.subr.bf16.mxu0 0
        %1990 = vmatpush1.bf16.msra.mxu0 0
        %1991 = vmatprep.subr.bf16.mxu0 0
        %1992 = vmatpush1.bf16.msra.mxu0 0
        %1993 = vmatprep.subr.bf16.mxu0 0
        %1994 = vmatpush1.bf16.msra.mxu0 0
        %1995 = vmatprep.subr.bf16.mxu0 0
        %1996 = vmatpush1.bf16.msra.mxu0 0
        %1997 = vmatprep.subr.bf16.mxu0 0
        %1998 = vmatpush1.bf16.msra.mxu0 0
        %1999 = vmatprep.subr.bf16.mxu0 0
        %2000 = vmatpush1.bf16.msra.mxu0 0
        %2001 = vmatprep.subr.bf16.mxu0 0
        %2002 = vmatpush1.bf16.msra.mxu0 0
        %2003 = vmatprep.subr.bf16.mxu0 0
        %2004 = vmatpush1.bf16.msra.mxu0 0
        %2005 = vmatprep.subr.bf16.mxu0 0
        %2006 = vmatpush1.bf16.msra.mxu0 0
        %2007 = vmatprep.subr.bf16.mxu0 0
        %2008 = vmatpush1.bf16.msra.mxu0 0
        %2009 = vmatprep.mubr.bf16.mxu0 0
        %2010 = vmatmul.mubr.bf16.gmra.mrb[0].mxu0 %v1954
        %v2011 = vpop.f32.mrb[0].mxu0
        %v2012 = vadd.f32 0.0, %v2011
        %v2013 = vpop.f32.mrb[0].mxu0
        %v2014 = vpop.f32.mrb[0].mxu0
        %v2015 = vadd.f32 0.0, %v2014
        %v2016 = vpop.f32.mrb[0].mxu0
        %2017 = vmatprep.mubr.bf16.mxu0 0
        %2018 = vmatmul.mubr.bf16.gmra.mrb[0].mxu0 %v1957
        %v2019 = vpop.f32.mrb[0].mxu0
        %v2020 = vadd.f32 0.0, %v2019
        %v2021 = vpop.f32.mrb[0].mxu0
        %v2022 = vpop.f32.mrb[0].mxu0
        %v2023 = vadd.f32 0.0, %v2022
        %v2024 = vpop.f32.mrb[0].mxu0
        %2025 = vmatprep.mubr.bf16.mxu0 0
        %2026 = vmatmul.mubr.bf16.gmra.mrb[0].mxu0 %v1960
        %v2027 = vpop.f32.mrb[0].mxu0
        %v2028 = vadd.f32 0.0, %v2027
        %v2029 = vpop.f32.mrb[0].mxu0
        %v2030 = vpop.f32.mrb[0].mxu0
        %v2031 = vadd.f32 0.0, %v2030
        %v2032 = vpop.f32.mrb[0].mxu0
        %2033 = vmatprep.mubr.bf16.mxu0 0
        %2034 = vmatmul.mubr.bf16.gmra.mrb[0].mxu0 %v1963
        %v2035 = vpop.f32.mrb[0].mxu0
        %v2036 = vadd.f32 0.0, %v2035
        %v2037 = vpop.f32.mrb[0].mxu0
        %v2038 = vpop.f32.mrb[0].mxu0
        %v2039 = vadd.f32 0.0, %v2038
        %v2040 = vpop.f32.mrb[0].mxu0
        %2041 = vmatprep.mubr.bf16.mxu0 0
        %2042 = vmatmul.mubr.bf16.gmra.mrb[0].mxu0 %v1966
        %v2043 = vpop.f32.mrb[0].mxu0
        %v2044 = vadd.f32 0.0, %v2043
        %v2045 = vpop.f32.mrb[0].mxu0
        %v2046 = vpop.f32.mrb[0].mxu0
        %v2047 = vadd.f32 0.0, %v2046
        %v2048 = vpop.f32.mrb[0].mxu0
        %2049 = vmatprep.mubr.bf16.mxu0 0
        %2050 = vmatmul.mubr.bf16.gmra.mrb[0].mxu0 %v1969
        %v2051 = vpop.f32.mrb[0].mxu0
        %v2052 = vadd.f32 0.0, %v2051
        %v2053 = vpop.f32.mrb[0].mxu0
        %v2054 = vpop.f32.mrb[0].mxu0
        %v2055 = vadd.f32 0.0, %v2054
        %v2056 = vpop.f32.mrb[0].mxu0
        %2057 = vmatprep.mubr.bf16.mxu0 0
        %2058 = vmatmul.mubr.bf16.gmra.mrb[0].mxu0 %v1972
        %v2059 = vpop.f32.mrb[0].mxu0
        %v2060 = vadd.f32 0.0, %v2059
        %v2061 = vpop.f32.mrb[0].mxu0
        %v2062 = vpop.f32.mrb[0].mxu0
        %v2063 = vadd.f32 0.0, %v2062
        %v2064 = vpop.f32.mrb[0].mxu0
        %2065 = vmatprep.mubr.bf16.mxu0 0
        %2066 = vmatmul.mubr.bf16.gmra.mrb[0].mxu0 %v1975
        %v2067 = vpop.f32.mrb[0].mxu0
        %v2068 = vadd.f32 0.0, %v2067
        %v2069 = vpop.f32.mrb[0].mxu0
        %v2070 = vpop.f32.mrb[0].mxu0
        %v2071 = vadd.f32 0.0, %v2070
        %v2072 = vpop.f32.mrb[0].mxu0
        %2073 = vdwg.mxu0
        %v2078 = vunpack.c.l.b16 %v1411
        %v2079 = vunpack.c.l.b16 %v1412
        %v2080 = vunpack.c.l.b16 %v1413
        %v2081 = vunpack.c.l.b16 %v1414
        %v2082 = vpack.c.b16 %v2079, %v2078
        %v2083 = vpack.c.b16 %v2081, %v2080
        %v2087 = vsel %vm414, %v1403, 0
        %v2090 = vsel %vm414, %v1404, 0
        %v2093 = vsel %vm414, %v1405, 0
        %v2096 = vsel %vm414, %v1406, 0
        %v2099 = vsel %vm414, %v1407, 0
        %v2102 = vsel %vm414, %v1408, 0
        %v2105 = vsel %vm414, %v1409, 0
        %v2108 = vsel %vm414, %v1410, 0
        %2110 = vmatprep.subr.bf16.mxu0 0
        %2111 = vmatpush1.bf16.msra.mxu0 %v2082
        %2112 = vmatprep.subr.bf16.mxu0 0
        %2113 = vmatpush1.bf16.msra.mxu0 %v2083
        %2114 = vmatprep.subr.bf16.mxu0 0
        %2115 = vmatpush1.bf16.msra.mxu0 0
        %2116 = vmatprep.subr.bf16.mxu0 0
        %2117 = vmatpush1.bf16.msra.mxu0 0
        %2118 = vmatprep.subr.bf16.mxu0 0
        %2119 = vmatpush1.bf16.msra.mxu0 0
        %2120 = vmatprep.subr.bf16.mxu0 0
        %2121 = vmatpush1.bf16.msra.mxu0 0
        %2122 = vmatprep.subr.bf16.mxu0 0
        %2123 = vmatpush1.bf16.msra.mxu0 0
        %2124 = vmatprep.subr.bf16.mxu0 0
        %2125 = vmatpush1.bf16.msra.mxu0 0
        %2126 = vmatprep.subr.bf16.mxu0 0
        %2127 = vmatpush1.bf16.msra.mxu0 0
        %2128 = vmatprep.subr.bf16.mxu0 0
        %2129 = vmatpush1.bf16.msra.mxu0 0
        %2130 = vmatprep.subr.bf16.mxu0 0
        %2131 = vmatpush1.bf16.msra.mxu0 0
        %2132 = vmatprep.subr.bf16.mxu0 0
        %2133 = vmatpush1.bf16.msra.mxu0 0
        %2134 = vmatprep.subr.bf16.mxu0 0
        %2135 = vmatpush1.bf16.msra.mxu0 0
        %2136 = vmatprep.subr.bf16.mxu0 0
        %2137 = vmatpush1.bf16.msra.mxu0 0
        %2138 = vmatprep.subr.bf16.mxu0 0
        %2139 = vmatpush1.bf16.msra.mxu0 0
        %2140 = vmatprep.subr.bf16.mxu0 0
        %2141 = vmatpush1.bf16.msra.mxu0 0
        %2142 = vmatprep.mubr.bf16.mxu0 0
        %2143 = vmatmul.mubr.bf16.gmra.mrb[0].mxu0 %v2087
        %v2144 = vpop.f32.mrb[0].mxu0
        %v2145 = vadd.f32 %v2012, %v2144
        %v2146 = vpop.f32.mrb[0].mxu0
        %v2147 = vpop.f32.mrb[0].mxu0
        %v2148 = vadd.f32 %v2015, %v2147
        %v2149 = vpop.f32.mrb[0].mxu0
        %2150 = vmatprep.mubr.bf16.mxu0 0
        %2151 = vmatmul.mubr.bf16.gmra.mrb[0].mxu0 %v2090
        %v2152 = vpop.f32.mrb[0].mxu0
        %v2153 = vadd.f32 %v2020, %v2152
        %v2154 = vpop.f32.mrb[0].mxu0
        %v2155 = vpop.f32.mrb[0].mxu0
        %v2156 = vadd.f32 %v2023, %v2155
        %v2157 = vpop.f32.mrb[0].mxu0
        %2158 = vmatprep.mubr.bf16.mxu0 0
        %2159 = vmatmul.mubr.bf16.gmra.mrb[0].mxu0 %v2093
        %v2160 = vpop.f32.mrb[0].mxu0
        %v2161 = vadd.f32 %v2028, %v2160
        %v2162 = vpop.f32.mrb[0].mxu0
        %v2163 = vpop.f32.mrb[0].mxu0
        %v2164 = vadd.f32 %v2031, %v2163
        %v2165 = vpop.f32.mrb[0].mxu0
        %2166 = vmatprep.mubr.bf16.mxu0 0
        %2167 = vmatmul.mubr.bf16.gmra.mrb[0].mxu0 %v2096
        %v2168 = vpop.f32.mrb[0].mxu0
        %v2169 = vadd.f32 %v2036, %v2168
        %v2170 = vpop.f32.mrb[0].mxu0
        %v2171 = vpop.f32.mrb[0].mxu0
        %v2172 = vadd.f32 %v2039, %v2171
        %v2173 = vpop.f32.mrb[0].mxu0
        %2174 = vmatprep.mubr.bf16.mxu0 0
        %2175 = vmatmul.mubr.bf16.gmra.mrb[0].mxu0 %v2099
        %v2176 = vpop.f32.mrb[0].mxu0
        %v2177 = vadd.f32 %v2044, %v2176
        %v2178 = vpop.f32.mrb[0].mxu0
        %v2179 = vpop.f32.mrb[0].mxu0
        %v2180 = vadd.f32 %v2047, %v2179
        %v2181 = vpop.f32.mrb[0].mxu0
        %2182 = vmatprep.mubr.bf16.mxu0 0
        %2183 = vmatmul.mubr.bf16.gmra.mrb[0].mxu0 %v2102
        %v2184 = vpop.f32.mrb[0].mxu0
        %v2185 = vadd.f32 %v2052, %v2184
        %v2186 = vpop.f32.mrb[0].mxu0
        %v2187 = vpop.f32.mrb[0].mxu0
        %v2188 = vadd.f32 %v2055, %v2187
        %v2189 = vpop.f32.mrb[0].mxu0
        %2190 = vmatprep.mubr.bf16.mxu0 0
        %2191 = vmatmul.mubr.bf16.gmra.mrb[0].mxu0 %v2105
        %v2192 = vpop.f32.mrb[0].mxu0
        %v2193 = vadd.f32 %v2060, %v2192
        %v2194 = vpop.f32.mrb[0].mxu0
        %v2195 = vpop.f32.mrb[0].mxu0
        %v2196 = vadd.f32 %v2063, %v2195
        %v2197 = vpop.f32.mrb[0].mxu0
        %2198 = vmatprep.mubr.bf16.mxu0 0
        %2199 = vmatmul.mubr.bf16.gmra.mrb[0].mxu0 %v2108
        %v2200 = vpop.f32.mrb[0].mxu0
        %v2201 = vadd.f32 %v2068, %v2200
        %v2202 = vpop.f32.mrb[0].mxu0
        %v2203 = vpop.f32.mrb[0].mxu0
        %v2204 = vadd.f32 %v2071, %v2203
        %v2205 = vpop.f32.mrb[0].mxu0
        %2206 = vdwg.mxu0
        %2207 = vxpose.xlu0.b32.start [1/16] %v506, 128
        %2208 = vxpose.xlu0.b32.cont [2/16] %v509, 128
        %2209 = vxpose.xlu0.b32.cont [3/16] %v514, 128
        %2210 = vxpose.xlu0.b32.cont [4/16] %v517, 128
        %2211 = vxpose.xlu0.b32.cont [5/16] 0.0, 128
        %2212 = vxpose.xlu0.b32.cont [6/16] 0.0, 128
        %2213 = vxpose.xlu0.b32.cont [7/16] 0.0, 128
        %2214 = vxpose.xlu0.b32.cont [8/16] 0.0, 128
        %2215 = vxpose.xlu0.b32.cont [9/16] 0.0, 128
        %2216 = vxpose.xlu0.b32.cont [10/16] 0.0, 128
        %2217 = vxpose.xlu0.b32.cont [11/16] 0.0, 128
        %2218 = vxpose.xlu0.b32.cont [12/16] 0.0, 128
        %2219 = vxpose.xlu0.b32.cont [13/16] 0.0, 128
        %2220 = vxpose.xlu0.b32.cont [14/16] 0.0, 128
        %2221 = vxpose.xlu0.b32.cont [15/16] 0.0, 128
        %2222 = vxpose.xlu0.b32.end [16/16] 0.0, 128
        %v2223 = vpop.trf.xlu0
        %v2224 = vpop.trf.xlu0
        %v2225 = vpop.trf.xlu0
        %v2226 = vpop.trf.xlu0
        %v2227 = vpop.trf.xlu0
        %v2228 = vpop.trf.xlu0
        %v2229 = vpop.trf.xlu0
        %v2230 = vpop.trf.xlu0
        %v2231 = vpop.trf.xlu0
        %v2232 = vpop.trf.xlu0
        %v2233 = vpop.trf.xlu0
        %v2234 = vpop.trf.xlu0
        %v2235 = vpop.trf.xlu0
        %v2236 = vpop.trf.xlu0
        %v2237 = vpop.trf.xlu0
        %v2238 = vpop.trf.xlu0
        %v2239 = vpack.c.bf16 %v2224, %v2223
        %v2240 = vpack.c.bf16 %v2226, %v2225
        %v2241 = vpack.c.bf16 %v2228, %v2227
        %v2242 = vpack.c.bf16 %v2230, %v2229
        %v2243 = vpack.c.bf16 %v2232, %v2231
        %v2244 = vpack.c.bf16 %v2234, %v2233
        %v2245 = vpack.c.bf16 %v2236, %v2235
        %v2246 = vpack.c.bf16 %v2238, %v2237
        %v2248 = vsel %vm414, %v2239, 0
        %v2251 = vsel %vm414, %v2240, 0
        %v2254 = vsel %vm414, %v2241, 0
        %v2257 = vsel %vm414, %v2242, 0
        %v2260 = vsel %vm414, %v2243, 0
        %v2263 = vsel %vm414, %v2244, 0
        %v2266 = vsel %vm414, %v2245, 0
        %v2269 = vsel %vm414, %v2246, 0
        %2271 = vmatprep.subr.bf16.mxu0 %v866
        %2272 = vmatpush1.bf16.msra.mxu0 %v865
        %2273 = vmatprep.subr.bf16.mxu0 %v868
        %2274 = vmatpush1.bf16.msra.mxu0 %v867
        %2275 = vmatprep.subr.bf16.mxu0 0
        %2276 = vmatpush1.bf16.msra.mxu0 0
        %2277 = vmatprep.subr.bf16.mxu0 0
        %2278 = vmatpush1.bf16.msra.mxu0 0
        %2279 = vmatprep.subr.bf16.mxu0 0
        %2280 = vmatpush1.bf16.msra.mxu0 0
        %2281 = vmatprep.subr.bf16.mxu0 0
        %2282 = vmatpush1.bf16.msra.mxu0 0
        %2283 = vmatprep.subr.bf16.mxu0 0
        %2284 = vmatpush1.bf16.msra.mxu0 0
        %2285 = vmatprep.subr.bf16.mxu0 0
        %2286 = vmatpush1.bf16.msra.mxu0 0
        %2287 = vmatprep.subr.bf16.mxu0 0
        %2288 = vmatpush1.bf16.msra.mxu0 0
        %2289 = vmatprep.subr.bf16.mxu0 0
        %2290 = vmatpush1.bf16.msra.mxu0 0
        %2291 = vmatprep.subr.bf16.mxu0 0
        %2292 = vmatpush1.bf16.msra.mxu0 0
        %2293 = vmatprep.subr.bf16.mxu0 0
        %2294 = vmatpush1.bf16.msra.mxu0 0
        %2295 = vmatprep.subr.bf16.mxu0 0
        %2296 = vmatpush1.bf16.msra.mxu0 0
        %2297 = vmatprep.subr.bf16.mxu0 0
        %2298 = vmatpush1.bf16.msra.mxu0 0
        %2299 = vmatprep.subr.bf16.mxu0 0
        %2300 = vmatpush1.bf16.msra.mxu0 0
        %2301 = vmatprep.subr.bf16.mxu0 0
        %2302 = vmatpush1.bf16.msra.mxu0 0
        %2303 = vmatprep.mubr.bf16.mxu0 0
        %2304 = vmatmul.mubr.bf16.gmra.mrb[0].mxu0 %v2248
        %v2305 = vpop.f32.mrb[0].mxu0
        %v2306 = vadd.f32 0.0, %v2305
        %v2307 = vpop.f32.mrb[0].mxu0
        %v2308 = vadd.f32 0.0, %v2307
        %v2309 = vpop.f32.mrb[0].mxu0
        %v2310 = vadd.f32 0.0, %v2309
        %v2311 = vpop.f32.mrb[0].mxu0
        %v2312 = vadd.f32 0.0, %v2311
        %2313 = vmatprep.mubr.bf16.mxu0 0
        %2314 = vmatmul.mubr.bf16.gmra.mrb[0].mxu0 %v2251
        %v2315 = vpop.f32.mrb[0].mxu0
        %v2316 = vadd.f32 0.0, %v2315
        %v2317 = vpop.f32.mrb[0].mxu0
        %v2318 = vadd.f32 0.0, %v2317
        %v2319 = vpop.f32.mrb[0].mxu0
        %v2320 = vadd.f32 0.0, %v2319
        %v2321 = vpop.f32.mrb[0].mxu0
        %v2322 = vadd.f32 0.0, %v2321
        %2323 = vmatprep.mubr.bf16.mxu0 0
        %2324 = vmatmul.mubr.bf16.gmra.mrb[0].mxu0 %v2254
        %v2325 = vpop.f32.mrb[0].mxu0
        %v2326 = vadd.f32 0.0, %v2325
        %v2327 = vpop.f32.mrb[0].mxu0
        %v2328 = vadd.f32 0.0, %v2327
        %v2329 = vpop.f32.mrb[0].mxu0
        %v2330 = vadd.f32 0.0, %v2329
        %v2331 = vpop.f32.mrb[0].mxu0
        %v2332 = vadd.f32 0.0, %v2331
        %2333 = vmatprep.mubr.bf16.mxu0 0
        %2334 = vmatmul.mubr.bf16.gmra.mrb[0].mxu0 %v2257
        %v2335 = vpop.f32.mrb[0].mxu0
        %v2336 = vadd.f32 0.0, %v2335
        %v2337 = vpop.f32.mrb[0].mxu0
        %v2338 = vadd.f32 0.0, %v2337
        %v2339 = vpop.f32.mrb[0].mxu0
        %v2340 = vadd.f32 0.0, %v2339
        %v2341 = vpop.f32.mrb[0].mxu0
        %v2342 = vadd.f32 0.0, %v2341
        %2343 = vmatprep.mubr.bf16.mxu0 0
        %2344 = vmatmul.mubr.bf16.gmra.mrb[0].mxu0 %v2260
        %v2345 = vpop.f32.mrb[0].mxu0
        %v2346 = vadd.f32 0.0, %v2345
        %v2347 = vpop.f32.mrb[0].mxu0
        %v2348 = vadd.f32 0.0, %v2347
        %v2349 = vpop.f32.mrb[0].mxu0
        %v2350 = vadd.f32 0.0, %v2349
        %v2351 = vpop.f32.mrb[0].mxu0
        %v2352 = vadd.f32 0.0, %v2351
        %2353 = vmatprep.mubr.bf16.mxu0 0
        %2354 = vmatmul.mubr.bf16.gmra.mrb[0].mxu0 %v2263
        %v2355 = vpop.f32.mrb[0].mxu0
        %v2356 = vadd.f32 0.0, %v2355
        %v2357 = vpop.f32.mrb[0].mxu0
        %v2358 = vadd.f32 0.0, %v2357
        %v2359 = vpop.f32.mrb[0].mxu0
        %v2360 = vadd.f32 0.0, %v2359
        %v2361 = vpop.f32.mrb[0].mxu0
        %v2362 = vadd.f32 0.0, %v2361
        %2363 = vmatprep.mubr.bf16.mxu0 0
        %2364 = vmatmul.mubr.bf16.gmra.mrb[0].mxu0 %v2266
        %v2365 = vpop.f32.mrb[0].mxu0
        %v2366 = vadd.f32 0.0, %v2365
        %v2367 = vpop.f32.mrb[0].mxu0
        %v2368 = vadd.f32 0.0, %v2367
        %v2369 = vpop.f32.mrb[0].mxu0
        %v2370 = vadd.f32 0.0, %v2369
        %v2371 = vpop.f32.mrb[0].mxu0
        %v2372 = vadd.f32 0.0, %v2371
        %2373 = vmatprep.mubr.bf16.mxu0 0
        %2374 = vmatmul.mubr.bf16.gmra.mrb[0].mxu0 %v2269
        %v2375 = vpop.f32.mrb[0].mxu0
        %v2376 = vadd.f32 0.0, %v2375
        %v2377 = vpop.f32.mrb[0].mxu0
        %v2378 = vadd.f32 0.0, %v2377
        %v2379 = vpop.f32.mrb[0].mxu0
        %v2380 = vadd.f32 0.0, %v2379
        %v2381 = vpop.f32.mrb[0].mxu0
        %v2382 = vadd.f32 0.0, %v2381
        %2383 = vdwg.mxu0
        %v2384 = vmax.f32 %v2306, %v2308
        %2385 = vmax.xlane.f32.xlu0 %v2384
        %v2386 = vpop.xlane.xlu0 %2385
        %v2387 = vmax.f32 %v2310, %v2312
        %2388 = vmax.xlane.f32.xlu0 %v2387
        %v2389 = vpop.xlane.xlu0 %2388
        %v2390 = vmax.f32 %v2316, %v2318
        %2391 = vmax.xlane.f32.xlu0 %v2390
        %v2392 = vpop.xlane.xlu0 %2391
        %v2393 = vmax.f32 %v2320, %v2322
        %2394 = vmax.xlane.f32.xlu0 %v2393
        %v2395 = vpop.xlane.xlu0 %2394
        %v2396 = vmax.f32 %v2326, %v2328
        %2397 = vmax.xlane.f32.xlu0 %v2396
        %v2398 = vpop.xlane.xlu0 %2397
        %v2399 = vmax.f32 %v2330, %v2332
        %2400 = vmax.xlane.f32.xlu0 %v2399
        %v2401 = vpop.xlane.xlu0 %2400
        %v2402 = vmax.f32 %v2336, %v2338
        %2403 = vmax.xlane.f32.xlu0 %v2402
        %v2404 = vpop.xlane.xlu0 %2403
        %v2405 = vmax.f32 %v2340, %v2342
        %2406 = vmax.xlane.f32.xlu0 %v2405
        %v2407 = vpop.xlane.xlu0 %2406
        %v2408 = vmax.f32 %v2346, %v2348
        %2409 = vmax.xlane.f32.xlu0 %v2408
        %v2410 = vpop.xlane.xlu0 %2409
        %v2411 = vmax.f32 %v2350, %v2352
        %2412 = vmax.xlane.f32.xlu0 %v2411
        %v2413 = vpop.xlane.xlu0 %2412
        %v2414 = vmax.f32 %v2356, %v2358
        %2415 = vmax.xlane.f32.xlu0 %v2414
        %v2416 = vpop.xlane.xlu0 %2415
        %v2417 = vmax.f32 %v2360, %v2362
        %2418 = vmax.xlane.f32.xlu0 %v2417
        %v2419 = vpop.xlane.xlu0 %2418
        %v2420 = vmax.f32 %v2366, %v2368
        %2421 = vmax.xlane.f32.xlu0 %v2420
        %v2422 = vpop.xlane.xlu0 %2421
        %v2423 = vmax.f32 %v2370, %v2372
        %2424 = vmax.xlane.f32.xlu0 %v2423
        %v2425 = vpop.xlane.xlu0 %2424
        %v2426 = vmax.f32 %v2376, %v2378
        %2427 = vmax.xlane.f32.xlu0 %v2426
        %v2428 = vpop.xlane.xlu0 %2427
        %v2429 = vmax.f32 %v2380, %v2382
        %2430 = vmax.xlane.f32.xlu0 %v2429
        %v2431 = vpop.xlane.xlu0 %2430
        %v2432 = vsub.f32 %v2306, %v2386
        %v2433 = vsub.f32 %v2308, %v2386
        %v2434 = vsub.f32 %v2310, %v2389
        %v2435 = vsub.f32 %v2312, %v2389
        %v2436 = vsub.f32 %v2316, %v2392
        %v2437 = vsub.f32 %v2318, %v2392
        %v2438 = vsub.f32 %v2320, %v2395
        %v2439 = vsub.f32 %v2322, %v2395
        %v2440 = vsub.f32 %v2326, %v2398
        %v2441 = vsub.f32 %v2328, %v2398
        %v2442 = vsub.f32 %v2330, %v2401
        %v2443 = vsub.f32 %v2332, %v2401
        %v2444 = vsub.f32 %v2336, %v2404
        %v2445 = vsub.f32 %v2338, %v2404
        %v2446 = vsub.f32 %v2340, %v2407
        %v2447 = vsub.f32 %v2342, %v2407
        %v2448 = vsub.f32 %v2346, %v2410
        %v2449 = vsub.f32 %v2348, %v2410
        %v2450 = vsub.f32 %v2350, %v2413
        %v2451 = vsub.f32 %v2352, %v2413
        %v2452 = vsub.f32 %v2356, %v2416
        %v2453 = vsub.f32 %v2358, %v2416
        %v2454 = vsub.f32 %v2360, %v2419
        %v2455 = vsub.f32 %v2362, %v2419
        %v2456 = vsub.f32 %v2366, %v2422
        %v2457 = vsub.f32 %v2368, %v2422
        %v2458 = vsub.f32 %v2370, %v2425
        %v2459 = vsub.f32 %v2372, %v2425
        %v2460 = vsub.f32 %v2376, %v2428
        %v2461 = vsub.f32 %v2378, %v2428
        %v2462 = vsub.f32 %v2380, %v2431
        %v2463 = vsub.f32 %v2382, %v2431
        %v2464 = vmul.f32 %v2432, 1.442695
        %v2465 = vpow.pop %v2464
        %v2466 = vmul.f32 %v2433, 1.442695
        %v2467 = vpow.pop %v2466
        %v2468 = vmul.f32 %v2434, 1.442695
        %v2469 = vpow.pop %v2468
        %v2470 = vmul.f32 %v2435, 1.442695
        %v2471 = vpow.pop %v2470
        %v2472 = vmul.f32 %v2436, 1.442695
        %v2473 = vpow.pop %v2472
        %v2474 = vmul.f32 %v2437, 1.442695
        %v2475 = vpow.pop %v2474
        %v2476 = vmul.f32 %v2438, 1.442695
        %v2477 = vpow.pop %v2476
        %v2478 = vmul.f32 %v2439, 1.442695
        %v2479 = vpow.pop %v2478
        %v2480 = vmul.f32 %v2440, 1.442695
        %v2481 = vpow.pop %v2480
        %v2482 = vmul.f32 %v2441, 1.442695
        %v2483 = vpow.pop %v2482
        %v2484 = vmul.f32 %v2442, 1.442695
        %v2485 = vpow.pop %v2484
        %v2486 = vmul.f32 %v2443, 1.442695
        %v2487 = vpow.pop %v2486
        %v2488 = vmul.f32 %v2444, 1.442695
        %v2489 = vpow.pop %v2488
        %v2490 = vmul.f32 %v2445, 1.442695
        %v2491 = vpow.pop %v2490
        %v2492 = vmul.f32 %v2446, 1.442695
        %v2493 = vpow.pop %v2492
        %v2494 = vmul.f32 %v2447, 1.442695
        %v2495 = vpow.pop %v2494
        %v2496 = vmul.f32 %v2448, 1.442695
        %v2497 = vpow.pop %v2496
        %v2498 = vmul.f32 %v2449, 1.442695
        %v2499 = vpow.pop %v2498
        %v2500 = vmul.f32 %v2450, 1.442695
        %v2501 = vpow.pop %v2500
        %v2502 = vmul.f32 %v2451, 1.442695
        %v2503 = vpow.pop %v2502
        %v2504 = vmul.f32 %v2452, 1.442695
        %v2505 = vpow.pop %v2504
        %v2506 = vmul.f32 %v2453, 1.442695
        %v2507 = vpow.pop %v2506
        %v2508 = vmul.f32 %v2454, 1.442695
        %v2509 = vpow.pop %v2508
        %v2510 = vmul.f32 %v2455, 1.442695
        %v2511 = vpow.pop %v2510
        %v2512 = vmul.f32 %v2456, 1.442695
        %v2513 = vpow.pop %v2512
        %v2514 = vmul.f32 %v2457, 1.442695
        %v2515 = vpow.pop %v2514
        %v2516 = vmul.f32 %v2458, 1.442695
        %v2517 = vpow.pop %v2516
        %v2518 = vmul.f32 %v2459, 1.442695
        %v2519 = vpow.pop %v2518
        %v2520 = vmul.f32 %v2460, 1.442695
        %v2521 = vpow.pop %v2520
        %v2522 = vmul.f32 %v2461, 1.442695
        %v2523 = vpow.pop %v2522
        %v2524 = vmul.f32 %v2462, 1.442695
        %v2525 = vpow.pop %v2524
        %v2526 = vmul.f32 %v2463, 1.442695
        %v2527 = vpow.pop %v2526
        %v2528 = vadd.f32 %v2465, %v2467
        %2529 = vadd.xlane.f32.xlu0 %v2528
        %v2530 = vpop.xlane.xlu0 %2529
        %v2531 = vadd.f32 %v2469, %v2471
        %2532 = vadd.xlane.f32.xlu0 %v2531
        %v2533 = vpop.xlane.xlu0 %2532
        %v2534 = vadd.f32 %v2473, %v2475
        %2535 = vadd.xlane.f32.xlu0 %v2534
        %v2536 = vpop.xlane.xlu0 %2535
        %v2537 = vadd.f32 %v2477, %v2479
        %2538 = vadd.xlane.f32.xlu0 %v2537
        %v2539 = vpop.xlane.xlu0 %2538
        %v2540 = vadd.f32 %v2481, %v2483
        %2541 = vadd.xlane.f32.xlu0 %v2540
        %v2542 = vpop.xlane.xlu0 %2541
        %v2543 = vadd.f32 %v2485, %v2487
        %2544 = vadd.xlane.f32.xlu0 %v2543
        %v2545 = vpop.xlane.xlu0 %2544
        %v2546 = vadd.f32 %v2489, %v2491
        %2547 = vadd.xlane.f32.xlu0 %v2546
        %v2548 = vpop.xlane.xlu0 %2547
        %v2549 = vadd.f32 %v2493, %v2495
        %2550 = vadd.xlane.f32.xlu0 %v2549
        %v2551 = vpop.xlane.xlu0 %2550
        %v2552 = vadd.f32 %v2497, %v2499
        %2553 = vadd.xlane.f32.xlu0 %v2552
        %v2554 = vpop.xlane.xlu0 %2553
        %v2555 = vadd.f32 %v2501, %v2503
        %2556 = vadd.xlane.f32.xlu0 %v2555
        %v2557 = vpop.xlane.xlu0 %2556
        %v2558 = vadd.f32 %v2505, %v2507
        %2559 = vadd.xlane.f32.xlu0 %v2558
        %v2560 = vpop.xlane.xlu0 %2559
        %v2561 = vadd.f32 %v2509, %v2511
        %2562 = vadd.xlane.f32.xlu0 %v2561
        %v2563 = vpop.xlane.xlu0 %2562
        %v2564 = vadd.f32 %v2513, %v2515
        %2565 = vadd.xlane.f32.xlu0 %v2564
        %v2566 = vpop.xlane.xlu0 %2565
        %v2567 = vadd.f32 %v2517, %v2519
        %2568 = vadd.xlane.f32.xlu0 %v2567
        %v2569 = vpop.xlane.xlu0 %2568
        %v2570 = vadd.f32 %v2521, %v2523
        %2571 = vadd.xlane.f32.xlu0 %v2570
        %v2572 = vpop.xlane.xlu0 %2571
        %v2573 = vadd.f32 %v2525, %v2527
        %2574 = vadd.xlane.f32.xlu0 %v2573
        %v2575 = vpop.xlane.xlu0 %2574
        %v2576 = vpack.c.bf16 %v2469, %v2465
        %v2577 = vpack.c.bf16 %v2471, %v2467
        %v2578 = vpack.c.bf16 %v2477, %v2473
        %v2579 = vpack.c.bf16 %v2479, %v2475
        %v2580 = vpack.c.bf16 %v2485, %v2481
        %v2581 = vpack.c.bf16 %v2487, %v2483
        %v2582 = vpack.c.bf16 %v2493, %v2489
        %v2583 = vpack.c.bf16 %v2495, %v2491
        %v2584 = vpack.c.bf16 %v2501, %v2497
        %v2585 = vpack.c.bf16 %v2503, %v2499
        %v2586 = vpack.c.bf16 %v2509, %v2505
        %v2587 = vpack.c.bf16 %v2511, %v2507
        %v2588 = vpack.c.bf16 %v2517, %v2513
        %v2589 = vpack.c.bf16 %v2519, %v2515
        %v2590 = vpack.c.bf16 %v2525, %v2521
        %v2591 = vpack.c.bf16 %v2527, %v2523
        %2592 = vmatprep.subr.bf16.mxu0 %v882
        %2593 = vmatpush1.bf16.xpose.msra.mxu0 %v881
        %2594 = vmatprep.subr.bf16.mxu0 %v884
        %2595 = vmatpush1.bf16.xpose.msra.mxu0 %v883
        %2596 = vmatprep.subr.bf16.mxu0 0
        %2597 = vmatpush1.bf16.xpose.msra.mxu0 0
        %2598 = vmatprep.subr.bf16.mxu0 0
        %2599 = vmatpush1.bf16.xpose.msra.mxu0 0
        %2600 = vmatprep.subr.bf16.mxu0 0
        %2601 = vmatpush1.bf16.xpose.msra.mxu0 0
        %2602 = vmatprep.subr.bf16.mxu0 0
        %2603 = vmatpush1.bf16.xpose.msra.mxu0 0
        %2604 = vmatprep.subr.bf16.mxu0 0
        %2605 = vmatpush1.bf16.xpose.msra.mxu0 0
        %2606 = vmatprep.subr.bf16.mxu0 0
        %2607 = vmatpush1.bf16.xpose.msra.mxu0 0
        %2608 = vmatprep.subr.bf16.mxu0 0
        %2609 = vmatpush1.bf16.xpose.msra.mxu0 0
        %2610 = vmatprep.subr.bf16.mxu0 0
        %2611 = vmatpush1.bf16.xpose.msra.mxu0 0
        %2612 = vmatprep.subr.bf16.mxu0 0
        %2613 = vmatpush1.bf16.xpose.msra.mxu0 0
        %2614 = vmatprep.subr.bf16.mxu0 0
        %2615 = vmatpush1.bf16.xpose.msra.mxu0 0
        %2616 = vmatprep.subr.bf16.mxu0 0
        %2617 = vmatpush1.bf16.xpose.msra.mxu0 0
        %2618 = vmatprep.subr.bf16.mxu0 0
        %2619 = vmatpush1.bf16.xpose.msra.mxu0 0
        %2620 = vmatprep.subr.bf16.mxu0 0
        %2621 = vmatpush1.bf16.xpose.msra.mxu0 0
        %2622 = vmatprep.subr.bf16.mxu0 0
        %2623 = vmatpush1.bf16.xpose.msra.mxu0 0
        %2624 = vmatprep.mubr.bf16.mxu0 %v2577
        %2625 = vmatmul.mubr.bf16.gmra.mrb[0].mxu0 %v2576
        %v2626 = vpop.f32.mrb[0].mxu0
        %v2627 = vadd.f32 0.0, %v2626
        %v2628 = vpop.f32.mrb[0].mxu0
        %v2629 = vpop.f32.mrb[0].mxu0
        %v2630 = vadd.f32 0.0, %v2629
        %v2631 = vpop.f32.mrb[0].mxu0
        %2632 = vmatprep.mubr.bf16.mxu0 %v2579
        %2633 = vmatmul.mubr.bf16.gmra.mrb[0].mxu0 %v2578
        %v2634 = vpop.f32.mrb[0].mxu0
        %v2635 = vadd.f32 0.0, %v2634
        %v2636 = vpop.f32.mrb[0].mxu0
        %v2637 = vpop.f32.mrb[0].mxu0
        %v2638 = vadd.f32 0.0, %v2637
        %v2639 = vpop.f32.mrb[0].mxu0
        %2640 = vmatprep.mubr.bf16.mxu0 %v2581
        %2641 = vmatmul.mubr.bf16.gmra.mrb[0].mxu0 %v2580
        %v2642 = vpop.f32.mrb[0].mxu0
        %v2643 = vadd.f32 0.0, %v2642
        %v2644 = vpop.f32.mrb[0].mxu0
        %v2645 = vpop.f32.mrb[0].mxu0
        %v2646 = vadd.f32 0.0, %v2645
        %v2647 = vpop.f32.mrb[0].mxu0
        %2648 = vmatprep.mubr.bf16.mxu0 %v2583
        %2649 = vmatmul.mubr.bf16.gmra.mrb[0].mxu0 %v2582
        %v2650 = vpop.f32.mrb[0].mxu0
        %v2651 = vadd.f32 0.0, %v2650
        %v2652 = vpop.f32.mrb[0].mxu0
        %v2653 = vpop.f32.mrb[0].mxu0
        %v2654 = vadd.f32 0.0, %v2653
        %v2655 = vpop.f32.mrb[0].mxu0
        %2656 = vmatprep.mubr.bf16.mxu0 %v2585
        %2657 = vmatmul.mubr.bf16.gmra.mrb[0].mxu0 %v2584
        %v2658 = vpop.f32.mrb[0].mxu0
        %v2659 = vadd.f32 0.0, %v2658
        %v2660 = vpop.f32.mrb[0].mxu0
        %v2661 = vpop.f32.mrb[0].mxu0
        %v2662 = vadd.f32 0.0, %v2661
        %v2663 = vpop.f32.mrb[0].mxu0
        %2664 = vmatprep.mubr.bf16.mxu0 %v2587
        %2665 = vmatmul.mubr.bf16.gmra.mrb[0].mxu0 %v2586
        %v2666 = vpop.f32.mrb[0].mxu0
        %v2667 = vadd.f32 0.0, %v2666
        %v2668 = vpop.f32.mrb[0].mxu0
        %v2669 = vpop.f32.mrb[0].mxu0
        %v2670 = vadd.f32 0.0, %v2669
        %v2671 = vpop.f32.mrb[0].mxu0
        %2672 = vmatprep.mubr.bf16.mxu0 %v2589
        %2673 = vmatmul.mubr.bf16.gmra.mrb[0].mxu0 %v2588
        %v2674 = vpop.f32.mrb[0].mxu0
        %v2675 = vadd.f32 0.0, %v2674
        %v2676 = vpop.f32.mrb[0].mxu0
        %v2677 = vpop.f32.mrb[0].mxu0
        %v2678 = vadd.f32 0.0, %v2677
        %v2679 = vpop.f32.mrb[0].mxu0
        %2680 = vmatprep.mubr.bf16.mxu0 %v2591
        %2681 = vmatmul.mubr.bf16.gmra.mrb[0].mxu0 %v2590
        %v2682 = vpop.f32.mrb[0].mxu0
        %v2683 = vadd.f32 0.0, %v2682
        %v2684 = vpop.f32.mrb[0].mxu0
        %v2685 = vpop.f32.mrb[0].mxu0
        %v2686 = vadd.f32 0.0, %v2685
        %v2687 = vpop.f32.mrb[0].mxu0
        %2688 = vdwg.mxu0
        %v2689 = vrcp.pop %v2530
        %v2690 = vrcp.pop %v2533
        %v2691 = vrcp.pop %v2536
        %v2692 = vrcp.pop %v2539
        %v2693 = vrcp.pop %v2542
        %v2694 = vrcp.pop %v2545
        %v2695 = vrcp.pop %v2548
        %v2696 = vrcp.pop %v2551
        %v2697 = vrcp.pop %v2554
        %v2698 = vrcp.pop %v2557
        %v2699 = vrcp.pop %v2560
        %v2700 = vrcp.pop %v2563
        %v2701 = vrcp.pop %v2566
        %v2702 = vrcp.pop %v2569
        %v2703 = vrcp.pop %v2572
        %v2704 = vrcp.pop %v2575
        %v2705 = vmul.f32 %v2627, %v2689
        %v2706 = vmul.f32 %v2630, %v2690
        %v2707 = vmul.f32 %v2635, %v2691
        %v2708 = vmul.f32 %v2638, %v2692
        %v2709 = vmul.f32 %v2643, %v2693
        %v2710 = vmul.f32 %v2646, %v2694
        %v2711 = vmul.f32 %v2651, %v2695
        %v2712 = vmul.f32 %v2654, %v2696
        %v2713 = vmul.f32 %v2659, %v2697
        %v2714 = vmul.f32 %v2662, %v2698
        %v2715 = vmul.f32 %v2667, %v2699
        %v2716 = vmul.f32 %v2670, %v2700
        %v2717 = vmul.f32 %v2675, %v2701
        %v2718 = vmul.f32 %v2678, %v2702
        %v2719 = vmul.f32 %v2683, %v2703
        %v2720 = vmul.f32 %v2686, %v2704
        %v2721 = vpack.c.bf16 %v2706, %v2705
        %v2722 = vpack.c.bf16 %v2708, %v2707
        %v2723 = vpack.c.bf16 %v2710, %v2709
        %v2724 = vpack.c.bf16 %v2712, %v2711
        %v2725 = vpack.c.bf16 %v2714, %v2713
        %v2726 = vpack.c.bf16 %v2716, %v2715
        %v2727 = vpack.c.bf16 %v2718, %v2717
        %v2728 = vpack.c.bf16 %v2720, %v2719
        %v2729 = vld [vmem:[%s3 + $0x20] sm:$0xf]
        %v2730 = vld [vmem:[%s3 + $0x24] sm:$0xf]
        %v2731 = vld [vmem:[%s3 + $0x28] sm:$0xf]
        %v2732 = vld [vmem:[%s3 + $0x2c] sm:$0xf]
        %v2737 = vunpack.c.l.b16 %v2729
        %v2738 = vunpack.c.l.b16 %v2730
        %v2739 = vunpack.c.l.b16 %v2731
        %v2740 = vunpack.c.l.b16 %v2732
        %v2741 = vpack.c.b16 %v2738, %v2737
        %v2742 = vpack.c.b16 %v2740, %v2739
        %v2746 = vsel %vm414, %v2721, 0
        %v2749 = vsel %vm414, %v2722, 0
        %v2752 = vsel %vm414, %v2723, 0
        %v2755 = vsel %vm414, %v2724, 0
        %v2758 = vsel %vm414, %v2725, 0
        %v2761 = vsel %vm414, %v2726, 0
        %v2764 = vsel %vm414, %v2727, 0
        %v2767 = vsel %vm414, %v2728, 0
        %2769 = vmatprep.subr.bf16.mxu0 0
        %2770 = vmatpush1.bf16.msra.mxu0 %v2741
        %2771 = vmatprep.subr.bf16.mxu0 0
        %2772 = vmatpush1.bf16.msra.mxu0 %v2742
        %2773 = vmatprep.subr.bf16.mxu0 0
        %2774 = vmatpush1.bf16.msra.mxu0 0
        %2775 = vmatprep.subr.bf16.mxu0 0
        %2776 = vmatpush1.bf16.msra.mxu0 0
        %2777 = vmatprep.subr.bf16.mxu0 0
        %2778 = vmatpush1.bf16.msra.mxu0 0
        %2779 = vmatprep.subr.bf16.mxu0 0
        %2780 = vmatpush1.bf16.msra.mxu0 0
        %2781 = vmatprep.subr.bf16.mxu0 0
        %2782 = vmatpush1.bf16.msra.mxu0 0
        %2783 = vmatprep.subr.bf16.mxu0 0
        %2784 = vmatpush1.bf16.msra.mxu0 0
        %2785 = vmatprep.subr.bf16.mxu0 0
        %2786 = vmatpush1.bf16.msra.mxu0 0
        %2787 = vmatprep.subr.bf16.mxu0 0
        %2788 = vmatpush1.bf16.msra.mxu0 0
        %2789 = vmatprep.subr.bf16.mxu0 0
        %2790 = vmatpush1.bf16.msra.mxu0 0
        %2791 = vmatprep.subr.bf16.mxu0 0
        %2792 = vmatpush1.bf16.msra.mxu0 0
        %2793 = vmatprep.subr.bf16.mxu0 0
        %2794 = vmatpush1.bf16.msra.mxu0 0
        %2795 = vmatprep.subr.bf16.mxu0 0
        %2796 = vmatpush1.bf16.msra.mxu0 0
        %2797 = vmatprep.subr.bf16.mxu0 0
        %2798 = vmatpush1.bf16.msra.mxu0 0
        %2799 = vmatprep.subr.bf16.mxu0 0
        %2800 = vmatpush1.bf16.msra.mxu0 0
        %2801 = vmatprep.mubr.bf16.mxu0 0
        %2802 = vmatmul.mubr.bf16.gmra.mrb[0].mxu0 %v2746
        %v2803 = vpop.f32.mrb[0].mxu0
        %v2804 = vadd.f32 0.0, %v2803
        %v2805 = vpop.f32.mrb[0].mxu0
        %v2806 = vpop.f32.mrb[0].mxu0
        %v2807 = vadd.f32 0.0, %v2806
        %v2808 = vpop.f32.mrb[0].mxu0
        %2809 = vmatprep.mubr.bf16.mxu0 0
        %2810 = vmatmul.mubr.bf16.gmra.mrb[0].mxu0 %v2749
        %v2811 = vpop.f32.mrb[0].mxu0
        %v2812 = vadd.f32 0.0, %v2811
        %v2813 = vpop.f32.mrb[0].mxu0
        %v2814 = vpop.f32.mrb[0].mxu0
        %v2815 = vadd.f32 0.0, %v2814
        %v2816 = vpop.f32.mrb[0].mxu0
        %2817 = vmatprep.mubr.bf16.mxu0 0
        %2818 = vmatmul.mubr.bf16.gmra.mrb[0].mxu0 %v2752
        %v2819 = vpop.f32.mrb[0].mxu0
        %v2820 = vadd.f32 0.0, %v2819
        %v2821 = vpop.f32.mrb[0].mxu0
        %v2822 = vpop.f32.mrb[0].mxu0
        %v2823 = vadd.f32 0.0, %v2822
        %v2824 = vpop.f32.mrb[0].mxu0
        %2825 = vmatprep.mubr.bf16.mxu0 0
        %2826 = vmatmul.mubr.bf16.gmra.mrb[0].mxu0 %v2755
        %v2827 = vpop.f32.mrb[0].mxu0
        %v2828 = vadd.f32 0.0, %v2827
        %v2829 = vpop.f32.mrb[0].mxu0
        %v2830 = vpop.f32.mrb[0].mxu0
        %v2831 = vadd.f32 0.0, %v2830
        %v2832 = vpop.f32.mrb[0].mxu0
        %2833 = vmatprep.mubr.bf16.mxu0 0
        %2834 = vmatmul.mubr.bf16.gmra.mrb[0].mxu0 %v2758
        %v2835 = vpop.f32.mrb[0].mxu0
        %v2836 = vadd.f32 0.0, %v2835
        %v2837 = vpop.f32.mrb[0].mxu0
        %v2838 = vpop.f32.mrb[0].mxu0
        %v2839 = vadd.f32 0.0, %v2838
        %v2840 = vpop.f32.mrb[0].mxu0
        %2841 = vmatprep.mubr.bf16.mxu0 0
        %2842 = vmatmul.mubr.bf16.gmra.mrb[0].mxu0 %v2761
        %v2843 = vpop.f32.mrb[0].mxu0
        %v2844 = vadd.f32 0.0, %v2843
        %v2845 = vpop.f32.mrb[0].mxu0
        %v2846 = vpop.f32.mrb[0].mxu0
        %v2847 = vadd.f32 0.0, %v2846
        %v2848 = vpop.f32.mrb[0].mxu0
        %2849 = vmatprep.mubr.bf16.mxu0 0
        %2850 = vmatmul.mubr.bf16.gmra.mrb[0].mxu0 %v2764
        %v2851 = vpop.f32.mrb[0].mxu0
        %v2852 = vadd.f32 0.0, %v2851
        %v2853 = vpop.f32.mrb[0].mxu0
        %v2854 = vpop.f32.mrb[0].mxu0
        %v2855 = vadd.f32 0.0, %v2854
        %v2856 = vpop.f32.mrb[0].mxu0
        %2857 = vmatprep.mubr.bf16.mxu0 0
        %2858 = vmatmul.mubr.bf16.gmra.mrb[0].mxu0 %v2767
        %v2859 = vpop.f32.mrb[0].mxu0
        %v2860 = vadd.f32 0.0, %v2859
        %v2861 = vpop.f32.mrb[0].mxu0
        %v2862 = vpop.f32.mrb[0].mxu0
        %v2863 = vadd.f32 0.0, %v2862
        %v2864 = vpop.f32.mrb[0].mxu0
        %2865 = vdwg.mxu0
        %v2866 = vadd.f32 %v2145, %v2804
        %v2867 = vadd.f32 %v2148, %v2807
        %v2868 = vadd.f32 %v2153, %v2812
        %v2869 = vadd.f32 %v2156, %v2815
        %v2870 = vadd.f32 %v2161, %v2820
        %v2871 = vadd.f32 %v2164, %v2823
        %v2872 = vadd.f32 %v2169, %v2828
        %v2873 = vadd.f32 %v2172, %v2831
        %v2874 = vadd.f32 %v2177, %v2836
        %v2875 = vadd.f32 %v2180, %v2839
        %v2876 = vadd.f32 %v2185, %v2844
        %v2877 = vadd.f32 %v2188, %v2847
        %v2878 = vadd.f32 %v2193, %v2852
        %v2879 = vadd.f32 %v2196, %v2855
        %v2880 = vadd.f32 %v2201, %v2860
        %v2881 = vadd.f32 %v2204, %v2863
        %2882 = vxpose.xlu0.b32.start [1/16] %v522, 128
        %2883 = vxpose.xlu0.b32.cont [2/16] %v525, 128
        %2884 = vxpose.xlu0.b32.cont [3/16] %v530, 128
        %2885 = vxpose.xlu0.b32.cont [4/16] %v533, 128
        %2886 = vxpose.xlu0.b32.cont [5/16] 0.0, 128
        %2887 = vxpose.xlu0.b32.cont [6/16] 0.0, 128
        %2888 = vxpose.xlu0.b32.cont [7/16] 0.0, 128
        %2889 = vxpose.xlu0.b32.cont [8/16] 0.0, 128
        %2890 = vxpose.xlu0.b32.cont [9/16] 0.0, 128
        %2891 = vxpose.xlu0.b32.cont [10/16] 0.0, 128
        %2892 = vxpose.xlu0.b32.cont [11/16] 0.0, 128
        %2893 = vxpose.xlu0.b32.cont [12/16] 0.0, 128
        %2894 = vxpose.xlu0.b32.cont [13/16] 0.0, 128
        %2895 = vxpose.xlu0.b32.cont [14/16] 0.0, 128
        %2896 = vxpose.xlu0.b32.cont [15/16] 0.0, 128
        %2897 = vxpose.xlu0.b32.end [16/16] 0.0, 128
        %v2898 = vpop.trf.xlu0
        %v2899 = vpop.trf.xlu0
        %v2900 = vpop.trf.xlu0
        %v2901 = vpop.trf.xlu0
        %v2902 = vpop.trf.xlu0
        %v2903 = vpop.trf.xlu0
        %v2904 = vpop.trf.xlu0
        %v2905 = vpop.trf.xlu0
        %v2906 = vpop.trf.xlu0
        %v2907 = vpop.trf.xlu0
        %v2908 = vpop.trf.xlu0
        %v2909 = vpop.trf.xlu0
        %v2910 = vpop.trf.xlu0
        %v2911 = vpop.trf.xlu0
        %v2912 = vpop.trf.xlu0
        %v2913 = vpop.trf.xlu0
        %v2914 = vpack.c.bf16 %v2899, %v2898
        %v2915 = vpack.c.bf16 %v2901, %v2900
        %v2916 = vpack.c.bf16 %v2903, %v2902
        %v2917 = vpack.c.bf16 %v2905, %v2904
        %v2918 = vpack.c.bf16 %v2907, %v2906
        %v2919 = vpack.c.bf16 %v2909, %v2908
        %v2920 = vpack.c.bf16 %v2911, %v2910
        %v2921 = vpack.c.bf16 %v2913, %v2912
        %v2923 = vsel %vm414, %v2914, 0
        %v2926 = vsel %vm414, %v2915, 0
        %v2929 = vsel %vm414, %v2916, 0
        %v2932 = vsel %vm414, %v2917, 0
        %v2935 = vsel %vm414, %v2918, 0
        %v2938 = vsel %vm414, %v2919, 0
        %v2941 = vsel %vm414, %v2920, 0
        %v2944 = vsel %vm414, %v2921, 0
        %2946 = vmatprep.subr.bf16.mxu0 %v870
        %2947 = vmatpush1.bf16.msra.mxu0 %v869
        %2948 = vmatprep.subr.bf16.mxu0 %v872
        %2949 = vmatpush1.bf16.msra.mxu0 %v871
        %2950 = vmatprep.subr.bf16.mxu0 0
        %2951 = vmatpush1.bf16.msra.mxu0 0
        %2952 = vmatprep.subr.bf16.mxu0 0
        %2953 = vmatpush1.bf16.msra.mxu0 0
        %2954 = vmatprep.subr.bf16.mxu0 0
        %2955 = vmatpush1.bf16.msra.mxu0 0
        %2956 = vmatprep.subr.bf16.mxu0 0
        %2957 = vmatpush1.bf16.msra.mxu0 0
        %2958 = vmatprep.subr.bf16.mxu0 0
        %2959 = vmatpush1.bf16.msra.mxu0 0
        %2960 = vmatprep.subr.bf16.mxu0 0
        %2961 = vmatpush1.bf16.msra.mxu0 0
        %2962 = vmatprep.subr.bf16.mxu0 0
        %2963 = vmatpush1.bf16.msra.mxu0 0
        %2964 = vmatprep.subr.bf16.mxu0 0
        %2965 = vmatpush1.bf16.msra.mxu0 0
        %2966 = vmatprep.subr.bf16.mxu0 0
        %2967 = vmatpush1.bf16.msra.mxu0 0
        %2968 = vmatprep.subr.bf16.mxu0 0
        %2969 = vmatpush1.bf16.msra.mxu0 0
        %2970 = vmatprep.subr.bf16.mxu0 0
        %2971 = vmatpush1.bf16.msra.mxu0 0
        %2972 = vmatprep.subr.bf16.mxu0 0
        %2973 = vmatpush1.bf16.msra.mxu0 0
        %2974 = vmatprep.subr.bf16.mxu0 0
        %2975 = vmatpush1.bf16.msra.mxu0 0
        %2976 = vmatprep.subr.bf16.mxu0 0
        %2977 = vmatpush1.bf16.msra.mxu0 0
        %2978 = vmatprep.mubr.bf16.mxu0 0
        %2979 = vmatmul.mubr.bf16.gmra.mrb[0].mxu0 %v2923
        %v2980 = vpop.f32.mrb[0].mxu0
        %v2981 = vadd.f32 0.0, %v2980
        %v2982 = vpop.f32.mrb[0].mxu0
        %v2983 = vadd.f32 0.0, %v2982
        %v2984 = vpop.f32.mrb[0].mxu0
        %v2985 = vadd.f32 0.0, %v2984
        %v2986 = vpop.f32.mrb[0].mxu0
        %v2987 = vadd.f32 0.0, %v2986
        %2988 = vmatprep.mubr.bf16.mxu0 0
        %2989 = vmatmul.mubr.bf16.gmra.mrb[0].mxu0 %v2926
        %v2990 = vpop.f32.mrb[0].mxu0
        %v2991 = vadd.f32 0.0, %v2990
        %v2992 = vpop.f32.mrb[0].mxu0
        %v2993 = vadd.f32 0.0, %v2992
        %v2994 = vpop.f32.mrb[0].mxu0
        %v2995 = vadd.f32 0.0, %v2994
        %v2996 = vpop.f32.mrb[0].mxu0
        %v2997 = vadd.f32 0.0, %v2996
        %2998 = vmatprep.mubr.bf16.mxu0 0
        %2999 = vmatmul.mubr.bf16.gmra.mrb[0].mxu0 %v2929
        %v3000 = vpop.f32.mrb[0].mxu0
        %v3001 = vadd.f32 0.0, %v3000
        %v3002 = vpop.f32.mrb[0].mxu0
        %v3003 = vadd.f32 0.0, %v3002
        %v3004 = vpop.f32.mrb[0].mxu0
        %v3005 = vadd.f32 0.0, %v3004
        %v3006 = vpop.f32.mrb[0].mxu0
        %v3007 = vadd.f32 0.0, %v3006
        %3008 = vmatprep.mubr.bf16.mxu0 0
        %3009 = vmatmul.mubr.bf16.gmra.mrb[0].mxu0 %v2932
        %v3010 = vpop.f32.mrb[0].mxu0
        %v3011 = vadd.f32 0.0, %v3010
        %v3012 = vpop.f32.mrb[0].mxu0
        %v3013 = vadd.f32 0.0, %v3012
        %v3014 = vpop.f32.mrb[0].mxu0
        %v3015 = vadd.f32 0.0, %v3014
        %v3016 = vpop.f32.mrb[0].mxu0
        %v3017 = vadd.f32 0.0, %v3016
        %3018 = vmatprep.mubr.bf16.mxu0 0
        %3019 = vmatmul.mubr.bf16.gmra.mrb[0].mxu0 %v2935
        %v3020 = vpop.f32.mrb[0].mxu0
        %v3021 = vadd.f32 0.0, %v3020
        %v3022 = vpop.f32.mrb[0].mxu0
        %v3023 = vadd.f32 0.0, %v3022
        %v3024 = vpop.f32.mrb[0].mxu0
        %v3025 = vadd.f32 0.0, %v3024
        %v3026 = vpop.f32.mrb[0].mxu0
        %v3027 = vadd.f32 0.0, %v3026
        %3028 = vmatprep.mubr.bf16.mxu0 0
        %3029 = vmatmul.mubr.bf16.gmra.mrb[0].mxu0 %v2938
        %v3030 = vpop.f32.mrb[0].mxu0
        %v3031 = vadd.f32 0.0, %v3030
        %v3032 = vpop.f32.mrb[0].mxu0
        %v3033 = vadd.f32 0.0, %v3032
        %v3034 = vpop.f32.mrb[0].mxu0
        %v3035 = vadd.f32 0.0, %v3034
        %v3036 = vpop.f32.mrb[0].mxu0
        %v3037 = vadd.f32 0.0, %v3036
        %3038 = vmatprep.mubr.bf16.mxu0 0
        %3039 = vmatmul.mubr.bf16.gmra.mrb[0].mxu0 %v2941
        %v3040 = vpop.f32.mrb[0].mxu0
        %v3041 = vadd.f32 0.0, %v3040
        %v3042 = vpop.f32.mrb[0].mxu0
        %v3043 = vadd.f32 0.0, %v3042
        %v3044 = vpop.f32.mrb[0].mxu0
        %v3045 = vadd.f32 0.0, %v3044
        %v3046 = vpop.f32.mrb[0].mxu0
        %v3047 = vadd.f32 0.0, %v3046
        %3048 = vmatprep.mubr.bf16.mxu0 0
        %3049 = vmatmul.mubr.bf16.gmra.mrb[0].mxu0 %v2944
        %v3050 = vpop.f32.mrb[0].mxu0
        %v3051 = vadd.f32 0.0, %v3050
        %v3052 = vpop.f32.mrb[0].mxu0
        %v3053 = vadd.f32 0.0, %v3052
        %v3054 = vpop.f32.mrb[0].mxu0
        %v3055 = vadd.f32 0.0, %v3054
        %v3056 = vpop.f32.mrb[0].mxu0
        %v3057 = vadd.f32 0.0, %v3056
        %3058 = vdwg.mxu0
        %v3059 = vmax.f32 %v2981, %v2983
        %3060 = vmax.xlane.f32.xlu0 %v3059
        %v3061 = vpop.xlane.xlu0 %3060
        %v3062 = vmax.f32 %v2985, %v2987
        %3063 = vmax.xlane.f32.xlu0 %v3062
        %v3064 = vpop.xlane.xlu0 %3063
        %v3065 = vmax.f32 %v2991, %v2993
        %3066 = vmax.xlane.f32.xlu0 %v3065
        %v3067 = vpop.xlane.xlu0 %3066
        %v3068 = vmax.f32 %v2995, %v2997
        %3069 = vmax.xlane.f32.xlu0 %v3068
        %v3070 = vpop.xlane.xlu0 %3069
        %v3071 = vmax.f32 %v3001, %v3003
        %3072 = vmax.xlane.f32.xlu0 %v3071
        %v3073 = vpop.xlane.xlu0 %3072
        %v3074 = vmax.f32 %v3005, %v3007
        %3075 = vmax.xlane.f32.xlu0 %v3074
        %v3076 = vpop.xlane.xlu0 %3075
        %v3077 = vmax.f32 %v3011, %v3013
        %3078 = vmax.xlane.f32.xlu0 %v3077
        %v3079 = vpop.xlane.xlu0 %3078
        %v3080 = vmax.f32 %v3015, %v3017
        %3081 = vmax.xlane.f32.xlu0 %v3080
        %v3082 = vpop.xlane.xlu0 %3081
        %v3083 = vmax.f32 %v3021, %v3023
        %3084 = vmax.xlane.f32.xlu0 %v3083
        %v3085 = vpop.xlane.xlu0 %3084
        %v3086 = vmax.f32 %v3025, %v3027
        %3087 = vmax.xlane.f32.xlu0 %v3086
        %v3088 = vpop.xlane.xlu0 %3087
        %v3089 = vmax.f32 %v3031, %v3033
        %3090 = vmax.xlane.f32.xlu0 %v3089
        %v3091 = vpop.xlane.xlu0 %3090
        %v3092 = vmax.f32 %v3035, %v3037
        %3093 = vmax.xlane.f32.xlu0 %v3092
        %v3094 = vpop.xlane.xlu0 %3093
        %v3095 = vmax.f32 %v3041, %v3043
        %3096 = vmax.xlane.f32.xlu0 %v3095
        %v3097 = vpop.xlane.xlu0 %3096
        %v3098 = vmax.f32 %v3045, %v3047
        %3099 = vmax.xlane.f32.xlu0 %v3098
        %v3100 = vpop.xlane.xlu0 %3099
        %v3101 = vmax.f32 %v3051, %v3053
        %3102 = vmax.xlane.f32.xlu0 %v3101
        %v3103 = vpop.xlane.xlu0 %3102
        %v3104 = vmax.f32 %v3055, %v3057
        %3105 = vmax.xlane.f32.xlu0 %v3104
        %v3106 = vpop.xlane.xlu0 %3105
        %v3107 = vsub.f32 %v2981, %v3061
        %v3108 = vsub.f32 %v2983, %v3061
        %v3109 = vsub.f32 %v2985, %v3064
        %v3110 = vsub.f32 %v2987, %v3064
        %v3111 = vsub.f32 %v2991, %v3067
        %v3112 = vsub.f32 %v2993, %v3067
        %v3113 = vsub.f32 %v2995, %v3070
        %v3114 = vsub.f32 %v2997, %v3070
        %v3115 = vsub.f32 %v3001, %v3073
        %v3116 = vsub.f32 %v3003, %v3073
        %v3117 = vsub.f32 %v3005, %v3076
        %v3118 = vsub.f32 %v3007, %v3076
        %v3119 = vsub.f32 %v3011, %v3079
        %v3120 = vsub.f32 %v3013, %v3079
        %v3121 = vsub.f32 %v3015, %v3082
        %v3122 = vsub.f32 %v3017, %v3082
        %v3123 = vsub.f32 %v3021, %v3085
        %v3124 = vsub.f32 %v3023, %v3085
        %v3125 = vsub.f32 %v3025, %v3088
        %v3126 = vsub.f32 %v3027, %v3088
        %v3127 = vsub.f32 %v3031, %v3091
        %v3128 = vsub.f32 %v3033, %v3091
        %v3129 = vsub.f32 %v3035, %v3094
        %v3130 = vsub.f32 %v3037, %v3094
        %v3131 = vsub.f32 %v3041, %v3097
        %v3132 = vsub.f32 %v3043, %v3097
        %v3133 = vsub.f32 %v3045, %v3100
        %v3134 = vsub.f32 %v3047, %v3100
        %v3135 = vsub.f32 %v3051, %v3103
        %v3136 = vsub.f32 %v3053, %v3103
        %v3137 = vsub.f32 %v3055, %v3106
        %v3138 = vsub.f32 %v3057, %v3106
        %v3139 = vmul.f32 %v3107, 1.442695
        %v3140 = vpow.pop %v3139
        %v3141 = vmul.f32 %v3108, 1.442695
        %v3142 = vpow.pop %v3141
        %v3143 = vmul.f32 %v3109, 1.442695
        %v3144 = vpow.pop %v3143
        %v3145 = vmul.f32 %v3110, 1.442695
        %v3146 = vpow.pop %v3145
        %v3147 = vmul.f32 %v3111, 1.442695
        %v3148 = vpow.pop %v3147
        %v3149 = vmul.f32 %v3112, 1.442695
        %v3150 = vpow.pop %v3149
        %v3151 = vmul.f32 %v3113, 1.442695
        %v3152 = vpow.pop %v3151
        %v3153 = vmul.f32 %v3114, 1.442695
        %v3154 = vpow.pop %v3153
        %v3155 = vmul.f32 %v3115, 1.442695
        %v3156 = vpow.pop %v3155
        %v3157 = vmul.f32 %v3116, 1.442695
        %v3158 = vpow.pop %v3157
        %v3159 = vmul.f32 %v3117, 1.442695
        %v3160 = vpow.pop %v3159
        %v3161 = vmul.f32 %v3118, 1.442695
        %v3162 = vpow.pop %v3161
        %v3163 = vmul.f32 %v3119, 1.442695
        %v3164 = vpow.pop %v3163
        %v3165 = vmul.f32 %v3120, 1.442695
        %v3166 = vpow.pop %v3165
        %v3167 = vmul.f32 %v3121, 1.442695
        %v3168 = vpow.pop %v3167
        %v3169 = vmul.f32 %v3122, 1.442695
        %v3170 = vpow.pop %v3169
        %v3171 = vmul.f32 %v3123, 1.442695
        %v3172 = vpow.pop %v3171
        %v3173 = vmul.f32 %v3124, 1.442695
        %v3174 = vpow.pop %v3173
        %v3175 = vmul.f32 %v3125, 1.442695
        %v3176 = vpow.pop %v3175
        %v3177 = vmul.f32 %v3126, 1.442695
        %v3178 = vpow.pop %v3177
        %v3179 = vmul.f32 %v3127, 1.442695
        %v3180 = vpow.pop %v3179
        %v3181 = vmul.f32 %v3128, 1.442695
        %v3182 = vpow.pop %v3181
        %v3183 = vmul.f32 %v3129, 1.442695
        %v3184 = vpow.pop %v3183
        %v3185 = vmul.f32 %v3130, 1.442695
        %v3186 = vpow.pop %v3185
        %v3187 = vmul.f32 %v3131, 1.442695
        %v3188 = vpow.pop %v3187
        %v3189 = vmul.f32 %v3132, 1.442695
        %v3190 = vpow.pop %v3189
        %v3191 = vmul.f32 %v3133, 1.442695
        %v3192 = vpow.pop %v3191
        %v3193 = vmul.f32 %v3134, 1.442695
        %v3194 = vpow.pop %v3193
        %v3195 = vmul.f32 %v3135, 1.442695
        %v3196 = vpow.pop %v3195
        %v3197 = vmul.f32 %v3136, 1.442695
        %v3198 = vpow.pop %v3197
        %v3199 = vmul.f32 %v3137, 1.442695
        %v3200 = vpow.pop %v3199
        %v3201 = vmul.f32 %v3138, 1.442695
        %v3202 = vpow.pop %v3201
        %v3203 = vadd.f32 %v3140, %v3142
        %3204 = vadd.xlane.f32.xlu0 %v3203
        %v3205 = vpop.xlane.xlu0 %3204
        %v3206 = vadd.f32 %v3144, %v3146
        %3207 = vadd.xlane.f32.xlu0 %v3206
        %v3208 = vpop.xlane.xlu0 %3207
        %v3209 = vadd.f32 %v3148, %v3150
        %3210 = vadd.xlane.f32.xlu0 %v3209
        %v3211 = vpop.xlane.xlu0 %3210
        %v3212 = vadd.f32 %v3152, %v3154
        %3213 = vadd.xlane.f32.xlu0 %v3212
        %v3214 = vpop.xlane.xlu0 %3213
        %v3215 = vadd.f32 %v3156, %v3158
        %3216 = vadd.xlane.f32.xlu0 %v3215
        %v3217 = vpop.xlane.xlu0 %3216
        %v3218 = vadd.f32 %v3160, %v3162
        %3219 = vadd.xlane.f32.xlu0 %v3218
        %v3220 = vpop.xlane.xlu0 %3219
        %v3221 = vadd.f32 %v3164, %v3166
        %3222 = vadd.xlane.f32.xlu0 %v3221
        %v3223 = vpop.xlane.xlu0 %3222
        %v3224 = vadd.f32 %v3168, %v3170
        %3225 = vadd.xlane.f32.xlu0 %v3224
        %v3226 = vpop.xlane.xlu0 %3225
        %v3227 = vadd.f32 %v3172, %v3174
        %3228 = vadd.xlane.f32.xlu0 %v3227
        %v3229 = vpop.xlane.xlu0 %3228
        %v3230 = vadd.f32 %v3176, %v3178
        %3231 = vadd.xlane.f32.xlu0 %v3230
        %v3232 = vpop.xlane.xlu0 %3231
        %v3233 = vadd.f32 %v3180, %v3182
        %3234 = vadd.xlane.f32.xlu0 %v3233
        %v3235 = vpop.xlane.xlu0 %3234
        %v3236 = vadd.f32 %v3184, %v3186
        %3237 = vadd.xlane.f32.xlu0 %v3236
        %v3238 = vpop.xlane.xlu0 %3237
        %v3239 = vadd.f32 %v3188, %v3190
        %3240 = vadd.xlane.f32.xlu0 %v3239
        %v3241 = vpop.xlane.xlu0 %3240
        %v3242 = vadd.f32 %v3192, %v3194
        %3243 = vadd.xlane.f32.xlu0 %v3242
        %v3244 = vpop.xlane.xlu0 %3243
        %v3245 = vadd.f32 %v3196, %v3198
        %3246 = vadd.xlane.f32.xlu0 %v3245
        %v3247 = vpop.xlane.xlu0 %3246
        %v3248 = vadd.f32 %v3200, %v3202
        %3249 = vadd.xlane.f32.xlu0 %v3248
        %v3250 = vpop.xlane.xlu0 %3249
        %v3251 = vpack.c.bf16 %v3144, %v3140
        %v3252 = vpack.c.bf16 %v3146, %v3142
        %v3253 = vpack.c.bf16 %v3152, %v3148
        %v3254 = vpack.c.bf16 %v3154, %v3150
        %v3255 = vpack.c.bf16 %v3160, %v3156
        %v3256 = vpack.c.bf16 %v3162, %v3158
        %v3257 = vpack.c.bf16 %v3168, %v3164
        %v3258 = vpack.c.bf16 %v3170, %v3166
        %v3259 = vpack.c.bf16 %v3176, %v3172
        %v3260 = vpack.c.bf16 %v3178, %v3174
        %v3261 = vpack.c.bf16 %v3184, %v3180
        %v3262 = vpack.c.bf16 %v3186, %v3182
        %v3263 = vpack.c.bf16 %v3192, %v3188
        %v3264 = vpack.c.bf16 %v3194, %v3190
        %v3265 = vpack.c.bf16 %v3200, %v3196
        %v3266 = vpack.c.bf16 %v3202, %v3198
        %3267 = vmatprep.subr.bf16.mxu0 %v886
        %3268 = vmatpush1.bf16.xpose.msra.mxu0 %v885
        %3269 = vmatprep.subr.bf16.mxu0 %v888
        %3270 = vmatpush1.bf16.xpose.msra.mxu0 %v887
        %3271 = vmatprep.subr.bf16.mxu0 0
        %3272 = vmatpush1.bf16.xpose.msra.mxu0 0
        %3273 = vmatprep.subr.bf16.mxu0 0
        %3274 = vmatpush1.bf16.xpose.msra.mxu0 0
        %3275 = vmatprep.subr.bf16.mxu0 0
        %3276 = vmatpush1.bf16.xpose.msra.mxu0 0
        %3277 = vmatprep.subr.bf16.mxu0 0
        %3278 = vmatpush1.bf16.xpose.msra.mxu0 0
        %3279 = vmatprep.subr.bf16.mxu0 0
        %3280 = vmatpush1.bf16.xpose.msra.mxu0 0
        %3281 = vmatprep.subr.bf16.mxu0 0
        %3282 = vmatpush1.bf16.xpose.msra.mxu0 0
        %3283 = vmatprep.subr.bf16.mxu0 0
        %3284 = vmatpush1.bf16.xpose.msra.mxu0 0
        %3285 = vmatprep.subr.bf16.mxu0 0
        %3286 = vmatpush1.bf16.xpose.msra.mxu0 0
        %3287 = vmatprep.subr.bf16.mxu0 0
        %3288 = vmatpush1.bf16.xpose.msra.mxu0 0
        %3289 = vmatprep.subr.bf16.mxu0 0
        %3290 = vmatpush1.bf16.xpose.msra.mxu0 0
        %3291 = vmatprep.subr.bf16.mxu0 0
        %3292 = vmatpush1.bf16.xpose.msra.mxu0 0
        %3293 = vmatprep.subr.bf16.mxu0 0
        %3294 = vmatpush1.bf16.xpose.msra.mxu0 0
        %3295 = vmatprep.subr.bf16.mxu0 0
        %3296 = vmatpush1.bf16.xpose.msra.mxu0 0
        %3297 = vmatprep.subr.bf16.mxu0 0
        %3298 = vmatpush1.bf16.xpose.msra.mxu0 0
        %3299 = vmatprep.mubr.bf16.mxu0 %v3252
        %3300 = vmatmul.mubr.bf16.gmra.mrb[0].mxu0 %v3251
        %v3301 = vpop.f32.mrb[0].mxu0
        %v3302 = vadd.f32 0.0, %v3301
        %v3303 = vpop.f32.mrb[0].mxu0
        %v3304 = vpop.f32.mrb[0].mxu0
        %v3305 = vadd.f32 0.0, %v3304
        %v3306 = vpop.f32.mrb[0].mxu0
        %3307 = vmatprep.mubr.bf16.mxu0 %v3254
        %3308 = vmatmul.mubr.bf16.gmra.mrb[0].mxu0 %v3253
        %v3309 = vpop.f32.mrb[0].mxu0
        %v3310 = vadd.f32 0.0, %v3309
        %v3311 = vpop.f32.mrb[0].mxu0
        %v3312 = vpop.f32.mrb[0].mxu0
        %v3313 = vadd.f32 0.0, %v3312
        %v3314 = vpop.f32.mrb[0].mxu0
        %3315 = vmatprep.mubr.bf16.mxu0 %v3256
        %3316 = vmatmul.mubr.bf16.gmra.mrb[0].mxu0 %v3255
        %v3317 = vpop.f32.mrb[0].mxu0
        %v3318 = vadd.f32 0.0, %v3317
        %v3319 = vpop.f32.mrb[0].mxu0
        %v3320 = vpop.f32.mrb[0].mxu0
        %v3321 = vadd.f32 0.0, %v3320
        %v3322 = vpop.f32.mrb[0].mxu0
        %3323 = vmatprep.mubr.bf16.mxu0 %v3258
        %3324 = vmatmul.mubr.bf16.gmra.mrb[0].mxu0 %v3257
        %v3325 = vpop.f32.mrb[0].mxu0
        %v3326 = vadd.f32 0.0, %v3325
        %v3327 = vpop.f32.mrb[0].mxu0
        %v3328 = vpop.f32.mrb[0].mxu0
        %v3329 = vadd.f32 0.0, %v3328
        %v3330 = vpop.f32.mrb[0].mxu0
        %3331 = vmatprep.mubr.bf16.mxu0 %v3260
        %3332 = vmatmul.mubr.bf16.gmra.mrb[0].mxu0 %v3259
        %v3333 = vpop.f32.mrb[0].mxu0
        %v3334 = vadd.f32 0.0, %v3333
        %v3335 = vpop.f32.mrb[0].mxu0
        %v3336 = vpop.f32.mrb[0].mxu0
        %v3337 = vadd.f32 0.0, %v3336
        %v3338 = vpop.f32.mrb[0].mxu0
        %3339 = vmatprep.mubr.bf16.mxu0 %v3262
        %3340 = vmatmul.mubr.bf16.gmra.mrb[0].mxu0 %v3261
        %v3341 = vpop.f32.mrb[0].mxu0
        %v3342 = vadd.f32 0.0, %v3341
        %v3343 = vpop.f32.mrb[0].mxu0
        %v3344 = vpop.f32.mrb[0].mxu0
        %v3345 = vadd.f32 0.0, %v3344
        %v3346 = vpop.f32.mrb[0].mxu0
        %3347 = vmatprep.mubr.bf16.mxu0 %v3264
        %3348 = vmatmul.mubr.bf16.gmra.mrb[0].mxu0 %v3263
        %v3349 = vpop.f32.mrb[0].mxu0
        %v3350 = vadd.f32 0.0, %v3349
        %v3351 = vpop.f32.mrb[0].mxu0
        %v3352 = vpop.f32.mrb[0].mxu0
        %v3353 = vadd.f32 0.0, %v3352
        %v3354 = vpop.f32.mrb[0].mxu0
        %3355 = vmatprep.mubr.bf16.mxu0 %v3266
        %3356 = vmatmul.mubr.bf16.gmra.mrb[0].mxu0 %v3265
        %v3357 = vpop.f32.mrb[0].mxu0
        %v3358 = vadd.f32 0.0, %v3357
        %v3359 = vpop.f32.mrb[0].mxu0
        %v3360 = vpop.f32.mrb[0].mxu0
        %v3361 = vadd.f32 0.0, %v3360
        %v3362 = vpop.f32.mrb[0].mxu0
        %3363 = vdwg.mxu0
        %v3364 = vrcp.pop %v3205
        %v3365 = vrcp.pop %v3208
        %v3366 = vrcp.pop %v3211
        %v3367 = vrcp.pop %v3214
        %v3368 = vrcp.pop %v3217
        %v3369 = vrcp.pop %v3220
        %v3370 = vrcp.pop %v3223
        %v3371 = vrcp.pop %v3226
        %v3372 = vrcp.pop %v3229
        %v3373 = vrcp.pop %v3232
        %v3374 = vrcp.pop %v3235
        %v3375 = vrcp.pop %v3238
        %v3376 = vrcp.pop %v3241
        %v3377 = vrcp.pop %v3244
        %v3378 = vrcp.pop %v3247
        %v3379 = vrcp.pop %v3250
        %v3380 = vmul.f32 %v3302, %v3364
        %v3381 = vmul.f32 %v3305, %v3365
        %v3382 = vmul.f32 %v3310, %v3366
        %v3383 = vmul.f32 %v3313, %v3367
        %v3384 = vmul.f32 %v3318, %v3368
        %v3385 = vmul.f32 %v3321, %v3369
        %v3386 = vmul.f32 %v3326, %v3370
        %v3387 = vmul.f32 %v3329, %v3371
        %v3388 = vmul.f32 %v3334, %v3372
        %v3389 = vmul.f32 %v3337, %v3373
        %v3390 = vmul.f32 %v3342, %v3374
        %v3391 = vmul.f32 %v3345, %v3375
        %v3392 = vmul.f32 %v3350, %v3376
        %v3393 = vmul.f32 %v3353, %v3377
        %v3394 = vmul.f32 %v3358, %v3378
        %v3395 = vmul.f32 %v3361, %v3379
        %v3396 = vpack.c.bf16 %v3381, %v3380
        %v3397 = vpack.c.bf16 %v3383, %v3382
        %v3398 = vpack.c.bf16 %v3385, %v3384
        %v3399 = vpack.c.bf16 %v3387, %v3386
        %v3400 = vpack.c.bf16 %v3389, %v3388
        %v3401 = vpack.c.bf16 %v3391, %v3390
        %v3402 = vpack.c.bf16 %v3393, %v3392
        %v3403 = vpack.c.bf16 %v3395, %v3394
        %v3404 = vld [vmem:[%s3 + $0x30] sm:$0xf]
        %v3405 = vld [vmem:[%s3 + $0x34] sm:$0xf]
        %v3406 = vld [vmem:[%s3 + $0x38] sm:$0xf]
        %v3407 = vld [vmem:[%s3 + $0x3c] sm:$0xf]
        %v3412 = vunpack.c.l.b16 %v3404
        %v3413 = vunpack.c.l.b16 %v3405
        %v3414 = vunpack.c.l.b16 %v3406
        %v3415 = vunpack.c.l.b16 %v3407
        %v3416 = vpack.c.b16 %v3413, %v3412
        %v3417 = vpack.c.b16 %v3415, %v3414
        %v3421 = vsel %vm414, %v3396, 0
        %v3424 = vsel %vm414, %v3397, 0
        %v3427 = vsel %vm414, %v3398, 0
        %v3430 = vsel %vm414, %v3399, 0
        %v3433 = vsel %vm414, %v3400, 0
        %v3436 = vsel %vm414, %v3401, 0
        %v3439 = vsel %vm414, %v3402, 0
        %v3442 = vsel %vm414, %v3403, 0
        %3444 = vmatprep.subr.bf16.mxu0 0
        %3445 = vmatpush1.bf16.msra.mxu0 %v3416
        %3446 = vmatprep.subr.bf16.mxu0 0
        %3447 = vmatpush1.bf16.msra.mxu0 %v3417
        %3448 = vmatprep.subr.bf16.mxu0 0
        %3449 = vmatpush1.bf16.msra.mxu0 0
        %3450 = vmatprep.subr.bf16.mxu0 0
        %3451 = vmatpush1.bf16.msra.mxu0 0
        %3452 = vmatprep.subr.bf16.mxu0 0
        %3453 = vmatpush1.bf16.msra.mxu0 0
        %3454 = vmatprep.subr.bf16.mxu0 0
        %3455 = vmatpush1.bf16.msra.mxu0 0
        %3456 = vmatprep.subr.bf16.mxu0 0
        %3457 = vmatpush1.bf16.msra.mxu0 0
        %3458 = vmatprep.subr.bf16.mxu0 0
        %3459 = vmatpush1.bf16.msra.mxu0 0
        %3460 = vmatprep.subr.bf16.mxu0 0
        %3461 = vmatpush1.bf16.msra.mxu0 0
        %3462 = vmatprep.subr.bf16.mxu0 0
        %3463 = vmatpush1.bf16.msra.mxu0 0
        %3464 = vmatprep.subr.bf16.mxu0 0
        %3465 = vmatpush1.bf16.msra.mxu0 0
        %3466 = vmatprep.subr.bf16.mxu0 0
        %3467 = vmatpush1.bf16.msra.mxu0 0
        %3468 = vmatprep.subr.bf16.mxu0 0
        %3469 = vmatpush1.bf16.msra.mxu0 0
        %3470 = vmatprep.subr.bf16.mxu0 0
        %3471 = vmatpush1.bf16.msra.mxu0 0
        %3472 = vmatprep.subr.bf16.mxu0 0
        %3473 = vmatpush1.bf16.msra.mxu0 0
        %3474 = vmatprep.subr.bf16.mxu0 0
        %3475 = vmatpush1.bf16.msra.mxu0 0
        %3476 = vmatprep.mubr.bf16.mxu0 0
        %3477 = vmatmul.mubr.bf16.gmra.mrb[0].mxu0 %v3421
        %v3478 = vpop.f32.mrb[0].mxu0
        %v3479 = vadd.f32 0.0, %v3478
        %v3480 = vpop.f32.mrb[0].mxu0
        %v3481 = vpop.f32.mrb[0].mxu0
        %v3482 = vadd.f32 0.0, %v3481
        %v3483 = vpop.f32.mrb[0].mxu0
        %3484 = vmatprep.mubr.bf16.mxu0 0
        %3485 = vmatmul.mubr.bf16.gmra.mrb[0].mxu0 %v3424
        %v3486 = vpop.f32.mrb[0].mxu0
        %v3487 = vadd.f32 0.0, %v3486
        %v3488 = vpop.f32.mrb[0].mxu0
        %v3489 = vpop.f32.mrb[0].mxu0
        %v3490 = vadd.f32 0.0, %v3489
        %v3491 = vpop.f32.mrb[0].mxu0
        %3492 = vmatprep.mubr.bf16.mxu0 0
        %3493 = vmatmul.mubr.bf16.gmra.mrb[0].mxu0 %v3427
        %v3494 = vpop.f32.mrb[0].mxu0
        %v3495 = vadd.f32 0.0, %v3494
        %v3496 = vpop.f32.mrb[0].mxu0
        %v3497 = vpop.f32.mrb[0].mxu0
        %v3498 = vadd.f32 0.0, %v3497
        %v3499 = vpop.f32.mrb[0].mxu0
        %3500 = vmatprep.mubr.bf16.mxu0 0
        %3501 = vmatmul.mubr.bf16.gmra.mrb[0].mxu0 %v3430
        %v3502 = vpop.f32.mrb[0].mxu0
        %v3503 = vadd.f32 0.0, %v3502
        %v3504 = vpop.f32.mrb[0].mxu0
        %v3505 = vpop.f32.mrb[0].mxu0
        %v3506 = vadd.f32 0.0, %v3505
        %v3507 = vpop.f32.mrb[0].mxu0
        %3508 = vmatprep.mubr.bf16.mxu0 0
        %3509 = vmatmul.mubr.bf16.gmra.mrb[0].mxu0 %v3433
        %v3510 = vpop.f32.mrb[0].mxu0
        %v3511 = vadd.f32 0.0, %v3510
        %v3512 = vpop.f32.mrb[0].mxu0
        %v3513 = vpop.f32.mrb[0].mxu0
        %v3514 = vadd.f32 0.0, %v3513
        %v3515 = vpop.f32.mrb[0].mxu0
        %3516 = vmatprep.mubr.bf16.mxu0 0
        %3517 = vmatmul.mubr.bf16.gmra.mrb[0].mxu0 %v3436
        %v3518 = vpop.f32.mrb[0].mxu0
        %v3519 = vadd.f32 0.0, %v3518
        %v3520 = vpop.f32.mrb[0].mxu0
        %v3521 = vpop.f32.mrb[0].mxu0
        %v3522 = vadd.f32 0.0, %v3521
        %v3523 = vpop.f32.mrb[0].mxu0
        %3524 = vmatprep.mubr.bf16.mxu0 0
        %3525 = vmatmul.mubr.bf16.gmra.mrb[0].mxu0 %v3439
        %v3526 = vpop.f32.mrb[0].mxu0
        %v3527 = vadd.f32 0.0, %v3526
        %v3528 = vpop.f32.mrb[0].mxu0
        %v3529 = vpop.f32.mrb[0].mxu0
        %v3530 = vadd.f32 0.0, %v3529
        %v3531 = vpop.f32.mrb[0].mxu0
        %3532 = vmatprep.mubr.bf16.mxu0 0
        %3533 = vmatmul.mubr.bf16.gmra.mrb[0].mxu0 %v3442
        %v3534 = vpop.f32.mrb[0].mxu0
        %v3535 = vadd.f32 0.0, %v3534
        %v3536 = vpop.f32.mrb[0].mxu0
        %v3537 = vpop.f32.mrb[0].mxu0
        %v3538 = vadd.f32 0.0, %v3537
        %v3539 = vpop.f32.mrb[0].mxu0
        %3540 = vdwg.mxu0
        %v3541 = vadd.f32 %v2866, %v3479
        %v3542 = vadd.f32 %v2867, %v3482
        %v3543 = vadd.f32 %v2868, %v3487
        %v3544 = vadd.f32 %v2869, %v3490
        %v3545 = vadd.f32 %v2870, %v3495
        %v3546 = vadd.f32 %v2871, %v3498
        %v3547 = vadd.f32 %v2872, %v3503
        %v3548 = vadd.f32 %v2873, %v3506
        %v3549 = vadd.f32 %v2874, %v3511
        %v3550 = vadd.f32 %v2875, %v3514
        %v3551 = vadd.f32 %v2876, %v3519
        %v3552 = vadd.f32 %v2877, %v3522
        %v3553 = vadd.f32 %v2878, %v3527
        %v3554 = vadd.f32 %v2879, %v3530
        %v3555 = vadd.f32 %v2880, %v3535
        %v3556 = vadd.f32 %v2881, %v3538
        %3557 = vxpose.xlu0.b32.start [1/16] %v3541, 128
        %3558 = vxpose.xlu0.b32.cont [2/16] %v3542, 128
        %3559 = vxpose.xlu0.b32.cont [3/16] %v3543, 128
        %3560 = vxpose.xlu0.b32.cont [4/16] %v3544, 128
        %3561 = vxpose.xlu0.b32.cont [5/16] %v3545, 128
        %3562 = vxpose.xlu0.b32.cont [6/16] %v3546, 128
        %3563 = vxpose.xlu0.b32.cont [7/16] %v3547, 128
        %3564 = vxpose.xlu0.b32.cont [8/16] %v3548, 128
        %3565 = vxpose.xlu0.b32.cont [9/16] %v3549, 128
        %3566 = vxpose.xlu0.b32.cont [10/16] %v3550, 128
        %3567 = vxpose.xlu0.b32.cont [11/16] %v3551, 128
        %3568 = vxpose.xlu0.b32.cont [12/16] %v3552, 128
        %3569 = vxpose.xlu0.b32.cont [13/16] %v3553, 128
        %3570 = vxpose.xlu0.b32.cont [14/16] %v3554, 128
        %3571 = vxpose.xlu0.b32.cont [15/16] %v3555, 128
        %3572 = vxpose.xlu0.b32.end [16/16] %v3556, 128
        %v3573 = vpop.trf.xlu0
        %v3574 = vpop.trf.xlu0
        %v3575 = vpop.trf.xlu0
        %v3576 = vpop.trf.xlu0
        %v3577 = vpop.trf.xlu0
        %v3578 = vpop.trf.xlu0
        %v3579 = vpop.trf.xlu0
        %v3580 = vpop.trf.xlu0
        %v3581 = vpop.trf.xlu0
        %v3582 = vpop.trf.xlu0
        %v3583 = vpop.trf.xlu0
        %v3584 = vpop.trf.xlu0
        %v3585 = vpop.trf.xlu0
        %v3586 = vpop.trf.xlu0
        %v3587 = vpop.trf.xlu0
        %v3588 = vpop.trf.xlu0
        %v3589 = vld [vmem:[%s4] sm:$0xff]
        %v3590 = vld [vmem:[%s4 + $0x8] sm:$0xff]
        %v3591 = vld [vmem:[%s4 + $0x10] sm:$0xff]
        %v3592 = vld [vmem:[%s4 + $0x18] sm:$0xff]
        %3594 = vset.pattern.permute.xlu0 0
        %3595 = vperm.xlu0 %3594, %v3589
        %v3596 = vpop.permute.xlu0 %3595
        %3599 = vset.pattern.permute.xlu0 0
        %3600 = vperm.xlu0 %3599, %v3590
        %v3601 = vpop.permute.xlu0 %3600
        %3604 = vset.pattern.permute.xlu0 0
        %3605 = vperm.xlu0 %3604, %v3591
        %v3606 = vpop.permute.xlu0 %3605
        %3609 = vset.pattern.permute.xlu0 0
        %3610 = vperm.xlu0 %3609, %v3592
        %v3611 = vpop.permute.xlu0 %3610
        %v3613 = vadd.f32 %v3573, %v3596
        %v3614 = vadd.f32 %v3574, %v3601
        %v3615 = vadd.f32 %v3575, %v3606
        %v3616 = vadd.f32 %v3576, %v3611
        %3617 = vst [vmem:[%s301] sm:$0xff] %v3613
        %3618 = vst [vmem:[%s301 + $0x8] sm:$0xff] %v3614
        %3619 = vst [vmem:[%s301 + $0x10] sm:$0xff] %v3615
        %3620 = vst [vmem:[%s301 + $0x18] sm:$0xff] %v3616
        %s3621 = sand.u32 %s158, 1
        %s3622 = scalar_lea.sflag [#allocation4], %s3621
        %s3623 = sand.u32 %s158, 1
        %s3624 = smul.addr %s3623, 32
        %s3625 = scalar_lea.vmem [#allocation3], %s3624
        // Predicated region
        $region79: #{tpu_custom_call.1} parent=73 // pred_check
          %p3626 = pneg %p168
        $region80: #{tpu_custom_call.1} parent=73 // pred_check_branch
          %3628 = sbr.rel (%p3626) target = $region82
        $region81: #{tpu_custom_call.1} parent=73 // pred_region
          %s3630 = ssub.s32 512, 512
          %3631 = vsyncadd %s3622, %s3630
          %s3632 = smul.addr %s23, 8
          %s3633 = sadd.s32 %s24, %s3632
          %s3634 = smul.addr %s3633, 128
          %s3635 = scalar_lea.hbm %s5, %s3634
          %s3636 = sshll.u32 %s3625, 4
          %s3637 = int_to_ptr.vmem [resolvable:$true] %s3636
          %3642 = dma.vmem_to_hbm [thread:$0]  %s3637, 512, %s3635, %s3622, 128, 256, 8
        $region82: #{tpu_custom_call.1} parent=73 // pred_fallthru
          _
      $region74: #{tpu_custom_call.1} parent=5 // pred_fallthru
        _
      %p3643 = scmp.le.s32.totalorder 2, %s14
      // Predicated region
      $region83: #{tpu_custom_call.1} parent=5 // pred_check
        %p3644 = pneg %p3643
      $region84: #{tpu_custom_call.1} parent=5 // pred_check_branch
        %3646 = sbr.rel (%p3644) target = $region86
      $region85: #{tpu_custom_call.1} parent=5 // pred_region
        %s3647 = ssub.s32 %s14, 2
        // Predicated region
        $region87: #{tpu_custom_call.1} parent=85 // pred_check
          %p3648 = pneg %p174
        $region88: #{tpu_custom_call.1} parent=85 // pred_check_branch
          %3650 = sbr.rel (%p3648) target = $region90
        $region89: #{tpu_custom_call.1} parent=85 // pred_region
          %s3651 = sand.u32 %s159, 1
          %s3652 = scalar_lea.sflag [#allocation4], %s3651
          %s3653 = sand.u32 %s159, 1
          %s3654 = smul.addr %s3653, 32
          %s3655 = scalar_lea.vmem [#allocation3], %s3654
          %3656 = dma.done %s3652, 512
        $region90: #{tpu_custom_call.1} parent=85 // pred_fallthru
          _
      $region86: #{tpu_custom_call.1} parent=5 // pred_fallthru
        _
    $region6: #{tpu_custom_call.1} parent=1 // loop_footer
      %s18 = sadd.s32 1, %s14
    $region7: #{tpu_custom_call.1} parent=1 // loop_footer_branch
      %13 = sbr.rel target = $region3
    $region8: #{tpu_custom_call.1} parent=1 // loop_exit
      _
    %3657 = vsyncpa [#allocation4], 1
    %s3658 = scalar_lea.sflag [#allocation4], 1
    %3659 = vsyncpa %s3658, 1

</llo_original>
